<compile_context>
chip_gen: v6e
topology: v6e:2x2x1
jax: 0.10.0
libtpu: 0.0.40
codegen_flags: <defaults>
</compile_context>

<pallas_src>
import numpy as np
import jax
import jax.numpy as jnp
from jax.experimental import pallas as pl
from jax.experimental.pallas import tpu as pltpu

_BOX_CODE_SIZE = 7 + 2 + 9  # 18, matches the module-level _box_code_size


# ----------------------------- Pallas kernel ------------------------------ #
def _make_kernel(H, W):
    HW = H * W

    def kernel(x_ref, w1_ref, b1_ref, w2_ref, b2_ref, wh_ref, bh_ref,
               out_ref, pad_ref, pat_ref):
        # ---- conv1 (+folded BN, ReLU): one (HW, 9*Cin) @ (9*Cin, 64) dot ----
        h1 = jnp.dot(x_ref[0], w1_ref[...], preferred_element_type=jnp.float32)
        h1 = jnp.maximum(h1 + b1_ref[...], 0.0)                # (HW, 64)

        # ---- zero only the 1-px border of the padded scratch; the interior
        #      is fully overwritten every grid step ----
        zrow = jnp.zeros((1, W + 2, 64), jnp.float32)
        zcol = jnp.zeros((H + 2, 1, 64), jnp.float32)
        pad_ref[0:1, :, :] = zrow
        pad_ref[H + 1:H + 2, :, :] = zrow
        pad_ref[:, 0:1, :] = zcol
        pad_ref[:, W + 1:W + 2, :] = zcol
        pad_ref[1:H + 1, 1:W + 1, :] = h1.reshape(H, W, 64)

        # ---- conv2 im2col: build (HW, 576) patch matrix with lane-aligned
        #      128-wide stores, then one K=576 matmul (+folded BN, ReLU) ----
        xp2 = pad_ref[...]                                     # (H+2, W+2, 64)

        def win(t):
            ki, kj = divmod(t, 3)
            return xp2[ki:ki + H, kj:kj + W, :].reshape(HW, 64)

        for p in range(4):                                     # taps 0..7 in pairs
            pat_ref[:, 128 * p:128 * (p + 1)] = jnp.concatenate(
                [win(2 * p), win(2 * p + 1)], axis=-1)
        pat_ref[:, 512:576] = win(8)                           # last tap

        h2 = jnp.dot(pat_ref[...], w2_ref[...],
                     preferred_element_type=jnp.float32)
        h2 = jnp.maximum(h2 + b2_ref[...], 0.0)                # (HW, 64)

        # ---- fused 1x1 heads (cls|box|dir zero-padded to 128 lanes):
        #      one lane-dense (HW, 128) output, unmasked stores ----
        out_ref[0] = (jnp.dot(h2, wh_ref[...],
                              preferred_element_type=jnp.float32)
                      + bh_ref[...])

    return kernel


def _full_spec(shape):
    nd = len(shape)
    return pl.BlockSpec(shape, lambda b, _nd=nd: (0,) * _nd)


def _fold_conv_bn(w_oihw, bn_stats, eps=1e-3):
    gamma, beta, mean, var = bn_stats
    scale = gamma / jnp.sqrt(var + eps)                        # (Cout,)
    w = w_oihw * scale[:, None, None, None]                    # (Cout, Cin, 3, 3)
    cout, cin = w_oihw.shape[0], w_oihw.shape[1]
    # (kh, kw, Cin, Cout) -> (9*Cin, Cout); row order = (tap, cin), matching im2col
    w = jnp.transpose(w, (2, 3, 1, 0)).reshape(9 * cin, cout)
    b = (beta - mean * scale).reshape(1, cout)
    return w.astype(jnp.float32), b.astype(jnp.float32)


def _im2col_3x3(x_nhwc):
    """(B, H, W, C) -> (B, H*W, 9*C) with column order (tap, channel)."""
    B, H, W, C = x_nhwc.shape
    xp = jnp.pad(x_nhwc, ((0, 0), (1, 1), (1, 1), (0, 0)))
    cols = [xp[:, ki:ki + H, kj:kj + W, :] for ki in range(3) for kj in range(3)]
    return jnp.concatenate(cols, axis=-1).reshape(B, H * W, 9 * C)


# ------------------------------- wrapper ----------------------------------- #
def small_object_head_forward(x_nchw, params, *, num_class, num_anchor_per_loc,
                              num_direction_bins):
    """Equivalent of SmallObjectHead.forward(x, idx) (idx is unused upstream)."""
    B, Cin, H, W = x_nchw.shape
    A = num_anchor_per_loc
    Ccls = A * num_class
    Cbox = A * _BOX_CODE_SIZE
    Cdir = A * num_direction_bins
    Chead = Ccls + Cbox + Cdir
    Cpad = max(128, ((Chead + 127) // 128) * 128)              # lane-dense head width
    HW = H * W

    # NCHW -> NHWC, then XLA-side im2col for conv1 (only ~9x Cin extra HBM traffic)
    x = jnp.transpose(x_nchw, (0, 2, 3, 1)).astype(jnp.float32)
    xcols = _im2col_3x3(x)                                     # (B, HW, 9*Cin)

    w1, b1 = _fold_conv_bn(params['w1'], params['bn1'])        # (9*Cin, 64), (1, 64)
    w2, b2 = _fold_conv_bn(params['w2'], params['bn2'])        # (576, 64),   (1, 64)

    # fuse the three 1x1 heads into one (64, Cpad) matmul (zero-padded to 128 lanes)
    wh = jnp.concatenate([
        jnp.transpose(params['wcls'][:, :, 0, 0], (1, 0)),
        jnp.transpose(params['wbox'][:, :, 0, 0], (1, 0)),
        jnp.transpose(params['wdir'][:, :, 0, 0], (1, 0))], axis=1)   # (64, Chead)
    bh = jnp.concatenate([params['bcls'], params['bbox'], params['bdir']])
    wh = jnp.pad(wh, ((0, 0), (0, Cpad - Chead))).astype(jnp.float32)
    bh = jnp.pad(bh, (0, Cpad - Chead)).reshape(1, Cpad).astype(jnp.float32)

    out = pl.pallas_call(
        _make_kernel(H, W),
        out_shape=jax.ShapeDtypeStruct((B, HW, Cpad), jnp.float32),
        grid=(B,),
        in_specs=[
            pl.BlockSpec((1, HW, 9 * Cin), lambda b: (b, 0, 0)),
            _full_spec((9 * Cin, 64)), _full_spec((1, 64)),
            _full_spec((9 * 64, 64)), _full_spec((1, 64)),
            _full_spec((64, Cpad)), _full_spec((1, Cpad)),
        ],
        out_specs=pl.BlockSpec((1, HW, Cpad), lambda b: (b, 0, 0)),
        scratch_shapes=[
            pltpu.VMEM((H + 2, W + 2, 64), jnp.float32),       # zero-padded h1
            pltpu.VMEM((HW, 9 * 64), jnp.float32),             # conv2 im2col patches
        ],
        compiler_params=pltpu.CompilerParams(
            dimension_semantics=("parallel",)),                # batch steps independent
    )(xcols, w1, b1, w2, b2, wh, bh)

    cls_flat = out[:, :, :Ccls]
    box_flat = out[:, :, Ccls:Ccls + Cbox]
    dir_flat = out[:, :, Ccls + Cbox:Chead]

    # glue: replicate torch's view/permute/view (anchor-major flattening)
    def _to_preds(y, per):
        y = y.reshape(B, H, W, A, per)             # last dim order = a*per + k
        y = jnp.transpose(y, (0, 3, 1, 2, 4))      # (B, A, H, W, per)
        return y.reshape(B, A * H * W, per)

    return {
        'box_preds': _to_preds(box_flat, _BOX_CODE_SIZE),
        'cls_preds': _to_preds(cls_flat, num_class),
        'dir_cls_preds': _to_preds(dir_flat, num_direction_bins),
    }


# ---------------------- deterministic parameter init ----------------------- #
def init_params(key, num_filters, num_class, A, num_direction_bins):
    ks = jax.random.split(key, 9)
    Ccls = A * num_class
    Cbox = A * _BOX_CODE_SIZE
    Cdir = A * num_direction_bins

    def bn(k, c):
        k1, k2, k3, k4 = jax.random.split(k, 4)
        gamma = 1.0 + 0.1 * jax.random.normal(k1, (c,), jnp.float32)
        beta = 0.1 * jax.random.normal(k2, (c,), jnp.float32)
        mean = 0.1 * jax.random.normal(k3, (c,), jnp.float32)
        var = 0.5 + jax.random.uniform(k4, (c,), jnp.float32)
        return gamma, beta, mean, var

    return {
        'w1': 0.05 * jax.random.normal(ks[0], (64, num_filters, 3, 3), jnp.float32),
        'bn1': bn(ks[1], 64),
        'w2': 0.05 * jax.random.normal(ks[2], (64, 64, 3, 3), jnp.float32),
        'bn2': bn(ks[3], 64),
        'wcls': 0.05 * jax.random.normal(ks[4], (Ccls, 64, 1, 1), jnp.float32),
        'bcls': jnp.full((Ccls,), -np.log((1 - 0.01) / 0.01), jnp.float32),
        'wbox': 0.05 * jax.random.normal(ks[5], (Cbox, 64, 1, 1), jnp.float32),
        'bbox': 0.05 * jax.random.normal(ks[6], (Cbox,), jnp.float32),
        'wdir': 0.05 * jax.random.normal(ks[7], (Cdir, 64, 1, 1), jnp.float32),
        'bdir': 0.05 * jax.random.normal(ks[8], (Cdir,), jnp.float32),
    }


# ----------------------- plain-JAX reference (check) ----------------------- #
def reference_forward(x, p, *, num_class, num_anchor_per_loc, num_direction_bins):
    A = num_anchor_per_loc
    eps = 1e-3

    def conv(h, w):
        return jax.lax.conv_general_dilated(
            h, w, (1, 1), 'SAME', dimension_numbers=('NCHW', 'OIHW', 'NCHW'))

    def bn(h, stats):
        gamma, beta, mean, var = stats
        s = gamma / jnp.sqrt(var + eps)
        return h * s[None, :, None, None] + (beta - mean * s)[None, :, None, None]

    h = jax.nn.relu(bn(conv(x, p['w1']), p['bn1']))
    h = jax.nn.relu(bn(conv(h, p['w2']), p['bn2']))
    box = conv(h, p['wbox']) + p['bbox'][None, :, None, None]
    cls = conv(h, p['wcls']) + p['bcls'][None, :, None, None]
    dcl = conv(h, p['wdir']) + p['bdir'][None, :, None, None]
    B, _, H, W = x.shape

    def rs(y, per):
        y = y.reshape(B, A, per, H, W).transpose(0, 1, 3, 4, 2)
        return y.reshape(B, -1, per)

    return {'box_preds': rs(box, _BOX_CODE_SIZE),
            'cls_preds': rs(cls, num_class),
            'dir_cls_preds': rs(dcl, num_direction_bins)}


if __name__ == "__main__":
    B, Cin, H, W = 2, 4, 16, 16
    num_class, A, ndir = 3, 2, 2

    key = jax.random.PRNGKey(0)
    kx, kp = jax.random.split(key)
    x = jax.random.normal(kx, (B, Cin, H, W), jnp.float32)
    params = init_params(kp, Cin, num_class, A, ndir)
    idx = 0  # `idx` is unused by the reference forward; kept for signature parity

    out = small_object_head_forward(x, params, num_class=num_class,
                                    num_anchor_per_loc=A,
                                    num_direction_bins=ndir)
    out = jax.block_until_ready(out)

    ref = reference_forward(x, params, num_class=num_class,
                            num_anchor_per_loc=A, num_direction_bins=ndir)
    for name in ('box_preds', 'cls_preds', 'dir_cls_preds'):
        assert out[name].shape == ref[name].shape, (name, out[name].shape)
        err = float(jnp.max(jnp.abs(out[name] - ref[name])))
        assert err < 1e-2, (name, err)

    print("KERNEL_OK")
</pallas_src>

<mosaic_0001>
module attributes {stable_mosaic.version = 11 : i64} {
  func.func @kernel(%arg0: i32, %arg1: memref<1x256x36xf32, #tpu.memory_space<vmem>>, %arg2: memref<36x64xf32, #tpu.memory_space<vmem>>, %arg3: memref<1x64xf32, #tpu.memory_space<vmem>>, %arg4: memref<576x64xf32, #tpu.memory_space<vmem>>, %arg5: memref<1x64xf32, #tpu.memory_space<vmem>>, %arg6: memref<64x128xf32, #tpu.memory_space<vmem>>, %arg7: memref<1x128xf32, #tpu.memory_space<vmem>>, %arg8: memref<1x256x128xf32, #tpu.memory_space<vmem>>, %arg9: memref<18x18x64xf32, #tpu.memory_space<vmem>>, %arg10: memref<256x576xf32, #tpu.memory_space<vmem>>) attributes {dimension_semantics = [#tpu.dimension_semantics<parallel>], iteration_bounds = array<i64: 2>, scalar_prefetch = 0 : i64, scratch_operands = 2 : i64, tpu.core_type = #tpu.core_type<tc>, window_params = [{transform_indices = @transform_0, window_bounds = array<i64: 1, 256, 36>}, {pipeline_mode = #tpu.pipeline_mode<synchronous>, transform_indices = @transform_1, window_bounds = array<i64: 36, 64>}, {pipeline_mode = #tpu.pipeline_mode<synchronous>, transform_indices = @transform_2, window_bounds = array<i64: 1, 64>}, {pipeline_mode = #tpu.pipeline_mode<synchronous>, transform_indices = @transform_3, window_bounds = array<i64: 576, 64>}, {pipeline_mode = #tpu.pipeline_mode<synchronous>, transform_indices = @transform_4, window_bounds = array<i64: 1, 64>}, {pipeline_mode = #tpu.pipeline_mode<synchronous>, transform_indices = @transform_5, window_bounds = array<i64: 64, 128>}, {pipeline_mode = #tpu.pipeline_mode<synchronous>, transform_indices = @transform_6, window_bounds = array<i64: 1, 128>}, {transform_indices = @transform_7, window_bounds = array<i64: 1, 256, 128>}]} {
    %c0 = arith.constant 0 : index
    %c0_0 = arith.constant 0 : index
    %c0_1 = arith.constant 0 : index
    %0 = vector.load %arg1[%c0, %c0_0, %c0_1] : memref<1x256x36xf32, #tpu.memory_space<vmem>>, vector<1x256x36xf32>
    %1 = vector.shape_cast %0 : vector<1x256x36xf32> to vector<256x36xf32>
    %c0_2 = arith.constant 0 : index
    %c0_3 = arith.constant 0 : index
    %2 = vector.load %arg2[%c0_2, %c0_3] : memref<36x64xf32, #tpu.memory_space<vmem>>, vector<36x64xf32>
    %cst = arith.constant dense<0.000000e+00> : vector<256x64xf32>
    %3 = tpu.matmul %1, %2, %cst {dimension_numbers = #tpu.dot_dimension_numbers<[1], [0], [0], [1], [0, 0, 1, 1], [], []>} : vector<256x36xf32>, vector<36x64xf32>, vector<256x64xf32> -> vector<256x64xf32>
    %c0_4 = arith.constant 0 : index
    %c0_5 = arith.constant 0 : index
    %4 = vector.load %arg3[%c0_4, %c0_5] : memref<1x64xf32, #tpu.memory_space<vmem>>, vector<1x64xf32>
    %5 = vector.broadcast %4 : vector<1x64xf32> to vector<256x64xf32>
    %6 = arith.addf %3, %5 : vector<256x64xf32>
    %cst_6 = arith.constant 0.000000e+00 : f32
    %7 = vector.broadcast %cst_6 : f32 to vector<256x64xf32>
    %8 = arith.maximumf %6, %7 : vector<256x64xf32>
    %cst_7 = arith.constant 0.000000e+00 : f32
    %9 = vector.broadcast %cst_7 : f32 to vector<1x18x64xf32>
    %cst_8 = arith.constant 0.000000e+00 : f32
    %10 = vector.broadcast %cst_8 : f32 to vector<18x1x64xf32>
    %c0_9 = arith.constant 0 : index
    %c0_10 = arith.constant 0 : index
    %c0_11 = arith.constant 0 : index
    %11 = vector.load %arg9[%c0_9, %c0_10, %c0_11] : memref<18x18x64xf32, #tpu.memory_space<vmem>>, vector<1x18x64xf32>
    tpu.vector_store %arg9[%c0_9, %c0_10, %c0_11], %9 {strides = array<i32>} : memref<18x18x64xf32, #tpu.memory_space<vmem>>, vector<1x18x64xf32>,
    %c17 = arith.constant 17 : index
    %c0_12 = arith.constant 0 : index
    %c0_13 = arith.constant 0 : index
    %12 = vector.load %arg9[%c17, %c0_12, %c0_13] : memref<18x18x64xf32, #tpu.memory_space<vmem>>, vector<1x18x64xf32>
    tpu.vector_store %arg9[%c17, %c0_12, %c0_13], %9 {strides = array<i32>} : memref<18x18x64xf32, #tpu.memory_space<vmem>>, vector<1x18x64xf32>,
    %c0_14 = arith.constant 0 : index
    %c0_15 = arith.constant 0 : index
    %c0_16 = arith.constant 0 : index
    %13 = vector.load %arg9[%c0_14, %c0_15, %c0_16] : memref<18x18x64xf32, #tpu.memory_space<vmem>>, vector<18x1x64xf32>
    tpu.vector_store %arg9[%c0_14, %c0_15, %c0_16], %10 {strides = array<i32>} : memref<18x18x64xf32, #tpu.memory_space<vmem>>, vector<18x1x64xf32>,
    %c0_17 = arith.constant 0 : index
    %c17_18 = arith.constant 17 : index
    %c0_19 = arith.constant 0 : index
    %14 = vector.load %arg9[%c0_17, %c17_18, %c0_19] : memref<18x18x64xf32, #tpu.memory_space<vmem>>, vector<18x1x64xf32>
    tpu.vector_store %arg9[%c0_17, %c17_18, %c0_19], %10 {strides = array<i32>} : memref<18x18x64xf32, #tpu.memory_space<vmem>>, vector<18x1x64xf32>,
    %15 = vector.shape_cast %8 : vector<256x64xf32> to vector<16x16x64xf32>
    %c1 = arith.constant 1 : index
    %c1_20 = arith.constant 1 : index
    %c0_21 = arith.constant 0 : index
    %16 = vector.load %arg9[%c1, %c1_20, %c0_21] : memref<18x18x64xf32, #tpu.memory_space<vmem>>, vector<16x16x64xf32>
    tpu.vector_store %arg9[%c1, %c1_20, %c0_21], %15 {strides = array<i32>} : memref<18x18x64xf32, #tpu.memory_space<vmem>>, vector<16x16x64xf32>,
    %c0_22 = arith.constant 0 : index
    %c0_23 = arith.constant 0 : index
    %c0_24 = arith.constant 0 : index
    %17 = vector.load %arg9[%c0_22, %c0_23, %c0_24] : memref<18x18x64xf32, #tpu.memory_space<vmem>>, vector<18x18x64xf32>
    %18 = vector.extract_strided_slice %17 {offsets = [0, 0, 0], sizes = [16, 16, 64], strides = [1, 1, 1]} : vector<18x18x64xf32> to vector<16x16x64xf32>
    %19 = vector.shape_cast %18 : vector<16x16x64xf32> to vector<256x64xf32>
    %20 = vector.extract_strided_slice %17 {offsets = [0, 1, 0], sizes = [16, 16, 64], strides = [1, 1, 1]} : vector<18x18x64xf32> to vector<16x16x64xf32>
    %21 = vector.shape_cast %20 : vector<16x16x64xf32> to vector<256x64xf32>
    %22 = tpu.concatenate %19, %21 in 1 : vector<256x64xf32>, vector<256x64xf32> -> vector<256x128xf32>
    %c0_25 = arith.constant 0 : index
    %c0_26 = arith.constant 0 : index
    %23 = vector.load %arg10[%c0_25, %c0_26] : memref<256x576xf32, #tpu.memory_space<vmem>>, vector<256x128xf32>
    tpu.vector_store %arg10[%c0_25, %c0_26], %22 {strides = array<i32>} : memref<256x576xf32, #tpu.memory_space<vmem>>, vector<256x128xf32>,
    %24 = vector.extract_strided_slice %17 {offsets = [0, 2, 0], sizes = [16, 16, 64], strides = [1, 1, 1]} : vector<18x18x64xf32> to vector<16x16x64xf32>
    %25 = vector.shape_cast %24 : vector<16x16x64xf32> to vector<256x64xf32>
    %26 = vector.extract_strided_slice %17 {offsets = [1, 0, 0], sizes = [16, 16, 64], strides = [1, 1, 1]} : vector<18x18x64xf32> to vector<16x16x64xf32>
    %27 = vector.shape_cast %26 : vector<16x16x64xf32> to vector<256x64xf32>
    %28 = tpu.concatenate %25, %27 in 1 : vector<256x64xf32>, vector<256x64xf32> -> vector<256x128xf32>
    %c0_27 = arith.constant 0 : index
    %c128 = arith.constant 128 : index
    %29 = vector.load %arg10[%c0_27, %c128] : memref<256x576xf32, #tpu.memory_space<vmem>>, vector<256x128xf32>
    tpu.vector_store %arg10[%c0_27, %c128], %28 {strides = array<i32>} : memref<256x576xf32, #tpu.memory_space<vmem>>, vector<256x128xf32>,
    %30 = vector.extract_strided_slice %17 {offsets = [1, 1, 0], sizes = [16, 16, 64], strides = [1, 1, 1]} : vector<18x18x64xf32> to vector<16x16x64xf32>
    %31 = vector.shape_cast %30 : vector<16x16x64xf32> to vector<256x64xf32>
    %32 = vector.extract_strided_slice %17 {offsets = [1, 2, 0], sizes = [16, 16, 64], strides = [1, 1, 1]} : vector<18x18x64xf32> to vector<16x16x64xf32>
    %33 = vector.shape_cast %32 : vector<16x16x64xf32> to vector<256x64xf32>
    %34 = tpu.concatenate %31, %33 in 1 : vector<256x64xf32>, vector<256x64xf32> -> vector<256x128xf32>
    %c0_28 = arith.constant 0 : index
    %c256 = arith.constant 256 : index
    %35 = vector.load %arg10[%c0_28, %c256] : memref<256x576xf32, #tpu.memory_space<vmem>>, vector<256x128xf32>
    tpu.vector_store %arg10[%c0_28, %c256], %34 {strides = array<i32>} : memref<256x576xf32, #tpu.memory_space<vmem>>, vector<256x128xf32>,
    %36 = vector.extract_strided_slice %17 {offsets = [2, 0, 0], sizes = [16, 16, 64], strides = [1, 1, 1]} : vector<18x18x64xf32> to vector<16x16x64xf32>
    %37 = vector.shape_cast %36 : vector<16x16x64xf32> to vector<256x64xf32>
    %38 = vector.extract_strided_slice %17 {offsets = [2, 1, 0], sizes = [16, 16, 64], strides = [1, 1, 1]} : vector<18x18x64xf32> to vector<16x16x64xf32>
    %39 = vector.shape_cast %38 : vector<16x16x64xf32> to vector<256x64xf32>
    %40 = tpu.concatenate %37, %39 in 1 : vector<256x64xf32>, vector<256x64xf32> -> vector<256x128xf32>
    %c0_29 = arith.constant 0 : index
    %c384 = arith.constant 384 : index
    %41 = vector.load %arg10[%c0_29, %c384] : memref<256x576xf32, #tpu.memory_space<vmem>>, vector<256x128xf32>
    tpu.vector_store %arg10[%c0_29, %c384], %40 {strides = array<i32>} : memref<256x576xf32, #tpu.memory_space<vmem>>, vector<256x128xf32>,
    %42 = vector.extract_strided_slice %17 {offsets = [2, 2, 0], sizes = [16, 16, 64], strides = [1, 1, 1]} : vector<18x18x64xf32> to vector<16x16x64xf32>
    %43 = vector.shape_cast %42 : vector<16x16x64xf32> to vector<256x64xf32>
    %c0_30 = arith.constant 0 : index
    %c512 = arith.constant 512 : index
    %44 = vector.load %arg10[%c0_30, %c512] : memref<256x576xf32, #tpu.memory_space<vmem>>, vector<256x64xf32>
    tpu.vector_store %arg10[%c0_30, %c512], %43 {strides = array<i32>} : memref<256x576xf32, #tpu.memory_space<vmem>>, vector<256x64xf32>,
    %c0_31 = arith.constant 0 : index
    %c0_32 = arith.constant 0 : index
    %45 = vector.load %arg10[%c0_31, %c0_32] : memref<256x576xf32, #tpu.memory_space<vmem>>, vector<256x576xf32>
    %c0_33 = arith.constant 0 : index
    %c0_34 = arith.constant 0 : index
    %46 = vector.load %arg4[%c0_33, %c0_34] : memref<576x64xf32, #tpu.memory_space<vmem>>, vector<576x64xf32>
    %cst_35 = arith.constant dense<0.000000e+00> : vector<256x64xf32>
    %47 = tpu.matmul %45, %46, %cst_35 {dimension_numbers = #tpu.dot_dimension_numbers<[1], [0], [0], [1], [0, 0, 1, 1], [], []>} : vector<256x576xf32>, vector<576x64xf32>, vector<256x64xf32> -> vector<256x64xf32>
    %c0_36 = arith.constant 0 : index
    %c0_37 = arith.constant 0 : index
    %48 = vector.load %arg5[%c0_36, %c0_37] : memref<1x64xf32, #tpu.memory_space<vmem>>, vector<1x64xf32>
    %49 = vector.broadcast %48 : vector<1x64xf32> to vector<256x64xf32>
    %50 = arith.addf %47, %49 : vector<256x64xf32>
    %cst_38 = arith.constant 0.000000e+00 : f32
    %51 = vector.broadcast %cst_38 : f32 to vector<256x64xf32>
    %52 = arith.maximumf %50, %51 : vector<256x64xf32>
    %c0_39 = arith.constant 0 : index
    %c0_40 = arith.constant 0 : index
    %53 = vector.load %arg6[%c0_39, %c0_40] : memref<64x128xf32, #tpu.memory_space<vmem>>, vector<64x128xf32>
    %cst_41 = arith.constant dense<0.000000e+00> : vector<256x128xf32>
    %54 = tpu.matmul %52, %53, %cst_41 {dimension_numbers = #tpu.dot_dimension_numbers<[1], [0], [0], [1], [0, 0, 1, 1], [], []>} : vector<256x64xf32>, vector<64x128xf32>, vector<256x128xf32> -> vector<256x128xf32>
    %c0_42 = arith.constant 0 : index
    %c0_43 = arith.constant 0 : index
    %55 = vector.load %arg7[%c0_42, %c0_43] : memref<1x128xf32, #tpu.memory_space<vmem>>, vector<1x128xf32>
    %56 = vector.broadcast %55 : vector<1x128xf32> to vector<256x128xf32>
    %57 = arith.addf %54, %56 : vector<256x128xf32>
    %c0_44 = arith.constant 0 : index
    %c0_45 = arith.constant 0 : index
    %c0_46 = arith.constant 0 : index
    %58 = vector.load %arg8[%c0_44, %c0_45, %c0_46] : memref<1x256x128xf32, #tpu.memory_space<vmem>>, vector<1x256x128xf32>
    %59 = vector.shape_cast %58 : vector<1x256x128xf32> to vector<256x128xf32>
    %60 = vector.shape_cast %57 : vector<256x128xf32> to vector<1x256x128xf32>
    tpu.vector_store %arg8[%c0_44, %c0_45, %c0_46], %60 {strides = array<i32>} : memref<1x256x128xf32, #tpu.memory_space<vmem>>, vector<1x256x128xf32>,
    return
  }
  func.func @transform_0(%arg0: i32) -> (i32, i32, i32) {
    %c0_i32 = arith.constant 0 : i32
    %c0_i32_0 = arith.constant 0 : i32
    %c0_i32_1 = arith.constant 0 : i32
    return %arg0, %c0_i32, %c0_i32_0 : i32, i32, i32
  }
  func.func @transform_1(%arg0: i32) -> (i32, i32) {
    %c0_i32 = arith.constant 0 : i32
    %c0_i32_0 = arith.constant 0 : i32
    %c0_i32_1 = arith.constant 0 : i32
    return %c0_i32, %c0_i32_0 : i32, i32
  }
  func.func @transform_2(%arg0: i32) -> (i32, i32) {
    %c0_i32 = arith.constant 0 : i32
    %c0_i32_0 = arith.constant 0 : i32
    %c0_i32_1 = arith.constant 0 : i32
    return %c0_i32, %c0_i32_0 : i32, i32
  }
  func.func @transform_3(%arg0: i32) -> (i32, i32) {
    %c0_i32 = arith.constant 0 : i32
    %c0_i32_0 = arith.constant 0 : i32
    %c0_i32_1 = arith.constant 0 : i32
    return %c0_i32, %c0_i32_0 : i32, i32
  }
  func.func @transform_4(%arg0: i32) -> (i32, i32) {
    %c0_i32 = arith.constant 0 : i32
    %c0_i32_0 = arith.constant 0 : i32
    %c0_i32_1 = arith.constant 0 : i32
    return %c0_i32, %c0_i32_0 : i32, i32
  }
  func.func @transform_5(%arg0: i32) -> (i32, i32) {
    %c0_i32 = arith.constant 0 : i32
    %c0_i32_0 = arith.constant 0 : i32
    %c0_i32_1 = arith.constant 0 : i32
    return %c0_i32, %c0_i32_0 : i32, i32
  }
  func.func @transform_6(%arg0: i32) -> (i32, i32) {
    %c0_i32 = arith.constant 0 : i32
    %c0_i32_0 = arith.constant 0 : i32
    %c0_i32_1 = arith.constant 0 : i32
    return %c0_i32, %c0_i32_0 : i32, i32
  }
  func.func @transform_7(%arg0: i32) -> (i32, i32, i32) {
    %c0_i32 = arith.constant 0 : i32
    %c0_i32_0 = arith.constant 0 : i32
    %c0_i32_1 = arith.constant 0 : i32
    return %arg0, %c0_i32, %c0_i32_0 : i32, i32, i32
  }
}

</mosaic_0001>

<llo_original>
// kernel: tpu_custom_call.1
$region0: #{tpu_custom_call.1}
  #allocation0 [shape = 'u32[]', space=smem, size = 0x4, offset = 0x4, fixed_abs, tag = 'smem constant byte address 0x4 - core index']
  #allocation1 [shape = 'u32[144,128]{1,0:T(1,128)}', space=vmem, size = 0x12000, scoped, tag = 'internal scratch']
  #allocation2 [shape = 'f32[18,18,64]{2,1,0:T(8,128)}', space=vmem, size = 0x36000, scoped, tag = 'scratch operand']
  #allocation3 [shape = 'f32[256,576]{1,0:T(8,128)}', space=vmem, size = 0xa0000, scoped, tag = 'scratch operand']
  %s0 = inlined_call_operand.vmem [shape: f32[2,256,36], index: 0, kind: input, shape index: {}]
  %s1 = inlined_call_operand.vmem [shape: f32[36,64], index: 1, kind: input, shape index: {}]
  %s2 = inlined_call_operand.vmem [shape: f32[1,64], index: 2, kind: input, shape index: {}]
  %s3 = inlined_call_operand.vmem [shape: f32[576,64], index: 3, kind: input, shape index: {}]
  %s4 = inlined_call_operand.vmem [shape: f32[1,64], index: 4, kind: input, shape index: {}]
  %s5 = inlined_call_operand.vmem [shape: f32[64,128], index: 5, kind: input, shape index: {}]
  %s6 = inlined_call_operand.vmem [shape: f32[1,128], index: 6, kind: input, shape index: {}]
  %s7 = inlined_call_operand.hbm [shape: f32[2,256,128], index: 7, kind: output, shape index: {}]
  %s8 = sld [smem:[#allocation0]]
  $region61: #{tpu_custom_call.1} parent=0
    _
  %s10 = ssub.s32 1, %s8
  %s11 = scalar_select 0, %s10, %s8
  $region1: #{tpu_custom_call.1} parent=0
    #allocation4 [shape = 'u8[262144]{0}', space=vmem, size = 0x40000, scoped, tag = 'output window, operand 0']
    #allocation5 [shape = 's32[2]{0}', space=sflag, size = 0x8, scoped, tag = 'scoped memory for tpu_custom_call.1']
    %12 = vsyncpa [#allocation5], 0
    %s13 = scalar_lea.sflag [#allocation5], 1
    %14 = vsyncpa %s13, 0
    loop: start=0, step=1, limit=4
    $region2: #{tpu_custom_call.1} parent=1 // loop_pre_header
      _
    $region3: #{tpu_custom_call.1} parent=1 // loop_header
      %s16 = sphi 0, %s20
      %p17 = scmp.ge.s32.totalorder %s16, 4
      %s26 = sphi 0, %s28
      %s29 = sphi 0, %s26
      %s30 = sphi 0, %s29
      %s46 = sphi 0, %s30
      %s50 = sphi 0, %s50
      %s52 = sphi 0, %s50
      %s53 = sphi 0, %s52
      %s67 = sphi 0, %s53
      %s71 = sphi 0, %s71
      %s73 = sphi 0, %s71
      %s74 = sphi 0, %s73
      %s88 = sphi 0, %s74
      %s92 = sphi 0, %s92
      %s94 = sphi 0, %s92
      %s95 = sphi 0, %s94
      %s109 = sphi 0, %s95
      %s113 = sphi 0, %s113
      %s115 = sphi 0, %s113
      %s116 = sphi 0, %s115
      %s130 = sphi 0, %s116
      %s134 = sphi 0, %s134
      %s136 = sphi 0, %s134
      %s137 = sphi 0, %s136
      %s151 = sphi 0, %s137
      %s155 = sphi 0, %s155
      %s157 = sphi 0, %s155
      %s158 = sphi 0, %s157
      %s172 = sphi 0, %s158
      %s178 = sphi 0, %s180
      %s181 = sphi 0, %s178
      %s182 = sphi 0, %s181
      %s198 = sphi 0, %s182
    $region4: #{tpu_custom_call.1} parent=1 // loop_header_branch
      %19 = sbr.rel (%p17) target = $region8
    $region5: #{tpu_custom_call.1} parent=1 // loop_body
      %s21 = ssub.s32 %s16, 1
      %s22 = ssub.s32 %s16, 2
      %s23 = sadd.s32 %s16, 1
      %s24 = ssub.s32 %s16, %s23
      %p25 = scmp.eq.s32.totalorder %s24, 0
      %s27 = sadd.s32 %s26, 1
      %s28 = scalar_select %p25, %s26, %s27
      %p31 = pneg %p25
      %p32 = scmp.eq.s32.totalorder %s16, 1
      %p33 = por %p31, %p32
      %p34 = scmp.ne.s32.totalorder %s26, %s29
      %p35 = scmp.eq.s32.totalorder %s16, 0
      %p36 = por %p34, %p35
      %p37 = scmp.ne.s32.totalorder %s26, %s29
      %p38 = scmp.eq.s32.totalorder %s21, 1
      %p39 = por %p37, %p38
      %p40 = scmp.ne.s32.totalorder %s29, %s30
      %p41 = scmp.eq.s32.totalorder %s21, 0
      %p42 = por %p40, %p41
      %p43 = scmp.ne.s32.totalorder %s29, %s30
      %p44 = scmp.eq.s32.totalorder %s22, 1
      %p45 = por %p43, %p44
      %p47 = scmp.ne.s32.totalorder %s30, %s46
      %p48 = scmp.eq.s32.totalorder %s22, 0
      %p49 = por %p47, %p48
      %s51 = sadd.s32 %s50, 1
      %p54 = scmp.eq.s32.totalorder %s16, 1
      %p55 = scmp.ne.s32.totalorder %s50, %s52
      %p56 = scmp.eq.s32.totalorder %s16, 0
      %p57 = por %p55, %p56
      %p58 = scmp.ne.s32.totalorder %s50, %s52
      %p59 = scmp.eq.s32.totalorder %s21, 1
      %p60 = por %p58, %p59
      %p61 = scmp.ne.s32.totalorder %s52, %s53
      %p62 = scmp.eq.s32.totalorder %s21, 0
      %p63 = por %p61, %p62
      %p64 = scmp.ne.s32.totalorder %s52, %s53
      %p65 = scmp.eq.s32.totalorder %s22, 1
      %p66 = por %p64, %p65
      %p68 = scmp.ne.s32.totalorder %s53, %s67
      %p69 = scmp.eq.s32.totalorder %s22, 0
      %p70 = por %p68, %p69
      %s72 = sadd.s32 %s71, 1
      %p75 = scmp.eq.s32.totalorder %s16, 1
      %p76 = scmp.ne.s32.totalorder %s71, %s73
      %p77 = scmp.eq.s32.totalorder %s16, 0
      %p78 = por %p76, %p77
      %p79 = scmp.ne.s32.totalorder %s71, %s73
      %p80 = scmp.eq.s32.totalorder %s21, 1
      %p81 = por %p79, %p80
      %p82 = scmp.ne.s32.totalorder %s73, %s74
      %p83 = scmp.eq.s32.totalorder %s21, 0
      %p84 = por %p82, %p83
      %p85 = scmp.ne.s32.totalorder %s73, %s74
      %p86 = scmp.eq.s32.totalorder %s22, 1
      %p87 = por %p85, %p86
      %p89 = scmp.ne.s32.totalorder %s74, %s88
      %p90 = scmp.eq.s32.totalorder %s22, 0
      %p91 = por %p89, %p90
      %s93 = sadd.s32 %s92, 1
      %p96 = scmp.eq.s32.totalorder %s16, 1
      %p97 = scmp.ne.s32.totalorder %s92, %s94
      %p98 = scmp.eq.s32.totalorder %s16, 0
      %p99 = por %p97, %p98
      %p100 = scmp.ne.s32.totalorder %s92, %s94
      %p101 = scmp.eq.s32.totalorder %s21, 1
      %p102 = por %p100, %p101
      %p103 = scmp.ne.s32.totalorder %s94, %s95
      %p104 = scmp.eq.s32.totalorder %s21, 0
      %p105 = por %p103, %p104
      %p106 = scmp.ne.s32.totalorder %s94, %s95
      %p107 = scmp.eq.s32.totalorder %s22, 1
      %p108 = por %p106, %p107
      %p110 = scmp.ne.s32.totalorder %s95, %s109
      %p111 = scmp.eq.s32.totalorder %s22, 0
      %p112 = por %p110, %p111
      %s114 = sadd.s32 %s113, 1
      %p117 = scmp.eq.s32.totalorder %s16, 1
      %p118 = scmp.ne.s32.totalorder %s113, %s115
      %p119 = scmp.eq.s32.totalorder %s16, 0
      %p120 = por %p118, %p119
      %p121 = scmp.ne.s32.totalorder %s113, %s115
      %p122 = scmp.eq.s32.totalorder %s21, 1
      %p123 = por %p121, %p122
      %p124 = scmp.ne.s32.totalorder %s115, %s116
      %p125 = scmp.eq.s32.totalorder %s21, 0
      %p126 = por %p124, %p125
      %p127 = scmp.ne.s32.totalorder %s115, %s116
      %p128 = scmp.eq.s32.totalorder %s22, 1
      %p129 = por %p127, %p128
      %p131 = scmp.ne.s32.totalorder %s116, %s130
      %p132 = scmp.eq.s32.totalorder %s22, 0
      %p133 = por %p131, %p132
      %s135 = sadd.s32 %s134, 1
      %p138 = scmp.eq.s32.totalorder %s16, 1
      %p139 = scmp.ne.s32.totalorder %s134, %s136
      %p140 = scmp.eq.s32.totalorder %s16, 0
      %p141 = por %p139, %p140
      %p142 = scmp.ne.s32.totalorder %s134, %s136
      %p143 = scmp.eq.s32.totalorder %s21, 1
      %p144 = por %p142, %p143
      %p145 = scmp.ne.s32.totalorder %s136, %s137
      %p146 = scmp.eq.s32.totalorder %s21, 0
      %p147 = por %p145, %p146
      %p148 = scmp.ne.s32.totalorder %s136, %s137
      %p149 = scmp.eq.s32.totalorder %s22, 1
      %p150 = por %p148, %p149
      %p152 = scmp.ne.s32.totalorder %s137, %s151
      %p153 = scmp.eq.s32.totalorder %s22, 0
      %p154 = por %p152, %p153
      %s156 = sadd.s32 %s155, 1
      %p159 = scmp.eq.s32.totalorder %s16, 1
      %p160 = scmp.ne.s32.totalorder %s155, %s157
      %p161 = scmp.eq.s32.totalorder %s16, 0
      %p162 = por %p160, %p161
      %p163 = scmp.ne.s32.totalorder %s155, %s157
      %p164 = scmp.eq.s32.totalorder %s21, 1
      %p165 = por %p163, %p164
      %p166 = scmp.ne.s32.totalorder %s157, %s158
      %p167 = scmp.eq.s32.totalorder %s21, 0
      %p168 = por %p166, %p167
      %p169 = scmp.ne.s32.totalorder %s157, %s158
      %p170 = scmp.eq.s32.totalorder %s22, 1
      %p171 = por %p169, %p170
      %p173 = scmp.ne.s32.totalorder %s158, %s172
      %p174 = scmp.eq.s32.totalorder %s22, 0
      %p175 = por %p173, %p174
      %s176 = ssub.s32 %s16, %s23
      %p177 = scmp.eq.s32.totalorder %s176, 0
      %s179 = sadd.s32 %s178, 1
      %s180 = scalar_select %p177, %s178, %s179
      %p183 = pneg %p177
      %p184 = scmp.eq.s32.totalorder %s16, 1
      %p185 = por %p183, %p184
      %p186 = scmp.ne.s32.totalorder %s178, %s181
      %p187 = scmp.eq.s32.totalorder %s16, 0
      %p188 = por %p186, %p187
      %p189 = scmp.ne.s32.totalorder %s178, %s181
      %p190 = scmp.eq.s32.totalorder %s21, 1
      %p191 = por %p189, %p190
      %p192 = scmp.ne.s32.totalorder %s181, %s182
      %p193 = scmp.eq.s32.totalorder %s21, 0
      %p194 = por %p192, %p193
      %p195 = scmp.ne.s32.totalorder %s181, %s182
      %p196 = scmp.eq.s32.totalorder %s22, 1
      %p197 = por %p195, %p196
      %p199 = scmp.ne.s32.totalorder %s182, %s198
      %p200 = scmp.eq.s32.totalorder %s22, 0
      %p201 = por %p199, %p200
      %p202 = scmp.le.s32.totalorder 1, %s16
      %p203 = scmp.lt.s32.totalorder %s16, 3
      %p204 = pnand %p202, %p203
      %p205 = pneg %p204
      // Predicated region
      $region9: #{tpu_custom_call.1} parent=5 // pred_check
        _
      $region10: #{tpu_custom_call.1} parent=5 // pred_check_branch
        %207 = sbr.rel (%p204) target = $region12
      $region11: #{tpu_custom_call.1} parent=5 // pred_region
        %s208 = ssub.s32 %s16, 1
        // Predicated region
        $region13: #{tpu_custom_call.1} parent=11 // pred_check
          %p209 = pneg %p63
        $region14: #{tpu_custom_call.1} parent=11 // pred_check_branch
          %211 = sbr.rel (%p209) target = $region16
        $region15: #{tpu_custom_call.1} parent=11 // pred_region
          _
        $region16: #{tpu_custom_call.1} parent=11 // pred_fallthru
          _
        // Predicated region
        $region17: #{tpu_custom_call.1} parent=11 // pred_check
          %p212 = pneg %p84
        $region18: #{tpu_custom_call.1} parent=11 // pred_check_branch
          %214 = sbr.rel (%p212) target = $region20
        $region19: #{tpu_custom_call.1} parent=11 // pred_region
          _
        $region20: #{tpu_custom_call.1} parent=11 // pred_fallthru
          _
        // Predicated region
        $region21: #{tpu_custom_call.1} parent=11 // pred_check
          %p215 = pneg %p105
        $region22: #{tpu_custom_call.1} parent=11 // pred_check_branch
          %217 = sbr.rel (%p215) target = $region24
        $region23: #{tpu_custom_call.1} parent=11 // pred_region
          _
        $region24: #{tpu_custom_call.1} parent=11 // pred_fallthru
          _
        // Predicated region
        $region25: #{tpu_custom_call.1} parent=11 // pred_check
          %p218 = pneg %p126
        $region26: #{tpu_custom_call.1} parent=11 // pred_check_branch
          %220 = sbr.rel (%p218) target = $region28
        $region27: #{tpu_custom_call.1} parent=11 // pred_region
          _
        $region28: #{tpu_custom_call.1} parent=11 // pred_fallthru
          _
        // Predicated region
        $region29: #{tpu_custom_call.1} parent=11 // pred_check
          %p221 = pneg %p147
        $region30: #{tpu_custom_call.1} parent=11 // pred_check_branch
          %223 = sbr.rel (%p221) target = $region32
        $region31: #{tpu_custom_call.1} parent=11 // pred_region
          _
        $region32: #{tpu_custom_call.1} parent=11 // pred_fallthru
          _
        // Predicated region
        $region33: #{tpu_custom_call.1} parent=11 // pred_check
          %p224 = pneg %p168
        $region34: #{tpu_custom_call.1} parent=11 // pred_check_branch
          %226 = sbr.rel (%p224) target = $region36
        $region35: #{tpu_custom_call.1} parent=11 // pred_region
          _
        $region36: #{tpu_custom_call.1} parent=11 // pred_fallthru
          _
      $region12: #{tpu_custom_call.1} parent=5 // pred_fallthru
        _
      %p227 = scmp.lt.s32.totalorder %s16, 2
      // Predicated region
      $region37: #{tpu_custom_call.1} parent=5 // pred_check
        %p228 = pneg %p227
      $region38: #{tpu_custom_call.1} parent=5 // pred_check_branch
        %230 = sbr.rel (%p228) target = $region40
      $region39: #{tpu_custom_call.1} parent=5 // pred_region
        // Predicated region
        $region41: #{tpu_custom_call.1} parent=39 // pred_check
          %p231 = pneg %p36
        $region42: #{tpu_custom_call.1} parent=39 // pred_check_branch
          %233 = sbr.rel (%p231) target = $region44
        $region43: #{tpu_custom_call.1} parent=39 // pred_region
          %p234 = scmp.lt.s32.totalorder %s16, 1
          %s235 = scalar_select %p234, %s16, 1
          %s236 = smul.addr %s235, 32
          %s237 = smul.addr %s236, 8
          %s238 = scalar_lea.vmem %s0, %s237
        $region44: #{tpu_custom_call.1} parent=39 // pred_fallthru
          _
      $region40: #{tpu_custom_call.1} parent=5 // pred_fallthru
        _
      %p239 = scmp.le.s32.totalorder 1, %s16
      %p240 = scmp.lt.s32.totalorder %s16, 3
      %p241 = pnand %p239, %p240
      %p242 = pneg %p241
      // Predicated region
      $region45: #{tpu_custom_call.1} parent=5 // pred_check
        _
      $region46: #{tpu_custom_call.1} parent=5 // pred_check_branch
        %244 = sbr.rel (%p241) target = $region48
      $region47: #{tpu_custom_call.1} parent=5 // pred_region
        %s245 = ssub.s32 %s16, 1
        %p246 = scmp.lt.s32.totalorder %s21, 1
        %s247 = scalar_select %p246, %s21, 1
        %s248 = smul.addr %s247, 32
        %s249 = smul.addr %s248, 8
        %s250 = scalar_lea.vmem %s0, %s249
        %p251 = pneg %p42
        %p252 = pneg %p39
        %p253 = pneg %p63
        %p254 = pneg %p60
        %p255 = pneg %p84
        %p256 = pneg %p81
        %p257 = pneg %p105
        %p258 = pneg %p102
        %p259 = pneg %p126
        %p260 = pneg %p123
        %p261 = pneg %p147
        %p262 = pneg %p144
        %p263 = pneg %p168
        %p264 = pneg %p165
        %p265 = pneg %p194
        %p266 = pneg %p191
        %s267 = sand.u32 %s181, 1
        %s268 = scalar_lea.sflag [#allocation5], %s267
        %s269 = sand.u32 %s181, 1
        %s270 = smul.addr %s269, 256
        %s271 = scalar_lea.vmem [#allocation4], %s270
        %p272 = scmp.lt.s32.totalorder %s21, 1
        %s273 = scalar_select %p272, %s21, 1
        %s274 = smul.addr %s273, 32
        %s275 = smul.addr %s274, 8
        %s276 = scalar_lea.vmem %s0, %s275
        %v277 = vld [vmem:[%s276] sm:$0xff]
        %v278 = vld [vmem:[%s276 + $0x8] sm:$0xff]
        %v279 = vld [vmem:[%s276 + $0x10] sm:$0xff]
        %v280 = vld [vmem:[%s276 + $0x18] sm:$0xff]
        %v281 = vld [vmem:[%s276 + $0x20] sm:$0xff]
        %v282 = vld [vmem:[%s276 + $0x28] sm:$0xff]
        %v283 = vld [vmem:[%s276 + $0x30] sm:$0xff]
        %v284 = vld [vmem:[%s276 + $0x38] sm:$0xff]
        %v285 = vld [vmem:[%s276 + $0x40] sm:$0xff]
        %v286 = vld [vmem:[%s276 + $0x48] sm:$0xff]
        %v287 = vld [vmem:[%s276 + $0x50] sm:$0xff]
        %v288 = vld [vmem:[%s276 + $0x58] sm:$0xff]
        %v289 = vld [vmem:[%s276 + $0x60] sm:$0xff]
        %v290 = vld [vmem:[%s276 + $0x68] sm:$0xff]
        %v291 = vld [vmem:[%s276 + $0x70] sm:$0xff]
        %v292 = vld [vmem:[%s276 + $0x78] sm:$0xff]
        %v293 = vld [vmem:[%s276 + $0x80] sm:$0xff]
        %v294 = vld [vmem:[%s276 + $0x88] sm:$0xff]
        %v295 = vld [vmem:[%s276 + $0x90] sm:$0xff]
        %v296 = vld [vmem:[%s276 + $0x98] sm:$0xff]
        %v297 = vld [vmem:[%s276 + $0xa0] sm:$0xff]
        %v298 = vld [vmem:[%s276 + $0xa8] sm:$0xff]
        %v299 = vld [vmem:[%s276 + $0xb0] sm:$0xff]
        %v300 = vld [vmem:[%s276 + $0xb8] sm:$0xff]
        %v301 = vld [vmem:[%s276 + $0xc0] sm:$0xff]
        %v302 = vld [vmem:[%s276 + $0xc8] sm:$0xff]
        %v303 = vld [vmem:[%s276 + $0xd0] sm:$0xff]
        %v304 = vld [vmem:[%s276 + $0xd8] sm:$0xff]
        %v305 = vld [vmem:[%s276 + $0xe0] sm:$0xff]
        %v306 = vld [vmem:[%s276 + $0xe8] sm:$0xff]
        %v307 = vld [vmem:[%s276 + $0xf0] sm:$0xff]
        %v308 = vld [vmem:[%s276 + $0xf8] sm:$0xff]
        %v309 = vld [vmem:[%s1] sm:$0xff]
        %v310 = vld [vmem:[%s1 + $0x8] sm:$0xff]
        %v311 = vld [vmem:[%s1 + $0x10] sm:$0xff]
        %v312 = vld [vmem:[%s1 + $0x18] sm:$0xff]
        %v313 = vld [vmem:[%s1 + $0x20] sm:$0xf]
        %v314 = vld [vmem:[%s2] sm:$0x1]
        %v316 = vlaneseq
        %v317 = vshrl.u32 %v316, 7
        %v318 = vsub.s32 0, %v317
        %v319 = vrot.slane %v314, %v318
        %vm321 = vcmask 293888
        %v323 = vsel %vm321, %v277, 0
        %v326 = vsel %vm321, %v278, 0
        %v329 = vsel %vm321, %v279, 0
        %v332 = vsel %vm321, %v280, 0
        %v335 = vsel %vm321, %v281, 0
        %v338 = vsel %vm321, %v282, 0
        %v341 = vsel %vm321, %v283, 0
        %v344 = vsel %vm321, %v284, 0
        %v347 = vsel %vm321, %v285, 0
        %v350 = vsel %vm321, %v286, 0
        %v353 = vsel %vm321, %v287, 0
        %v356 = vsel %vm321, %v288, 0
        %v359 = vsel %vm321, %v289, 0
        %v362 = vsel %vm321, %v290, 0
        %v365 = vsel %vm321, %v291, 0
        %v368 = vsel %vm321, %v292, 0
        %v371 = vsel %vm321, %v293, 0
        %v374 = vsel %vm321, %v294, 0
        %v377 = vsel %vm321, %v295, 0
        %v380 = vsel %vm321, %v296, 0
        %v383 = vsel %vm321, %v297, 0
        %v386 = vsel %vm321, %v298, 0
        %v389 = vsel %vm321, %v299, 0
        %v392 = vsel %vm321, %v300, 0
        %v395 = vsel %vm321, %v301, 0
        %v398 = vsel %vm321, %v302, 0
        %v401 = vsel %vm321, %v303, 0
        %v404 = vsel %vm321, %v304, 0
        %v407 = vsel %vm321, %v305, 0
        %v410 = vsel %vm321, %v306, 0
        %v413 = vsel %vm321, %v307, 0
        %v416 = vsel %vm321, %v308, 0
        %vm418 = vcmask 1043456
        %v420 = vsel %vm418, %v313, 0
        %422 = vmatprep.subr.mxu0 0.0
        %423 = vmatpush1.msra.mxu0 0.0
        %424 = vmatprep.subr.mxu0 0.0
        %425 = vmatpush1.msra.mxu0 0.0
        %426 = vmatprep.subr.mxu0 0.0
        %427 = vmatpush1.msra.mxu0 0.0
        %428 = vmatprep.subr.mxu0 0.0
        %429 = vmatpush1.msra.mxu0 0.0
        %430 = vmatprep.subr.mxu0 0.0
        %431 = vmatpush1.msra.mxu0 0.0
        %432 = vmatprep.subr.mxu0 0.0
        %433 = vmatpush1.msra.mxu0 0.0
        %434 = vmatprep.subr.mxu0 0.0
        %435 = vmatpush1.msra.mxu0 0.0
        %436 = vmatprep.subr.mxu0 0.0
        %437 = vmatpush1.msra.mxu0 0.0
        %438 = vmatprep.subr.mxu0 0.0
        %439 = vmatpush1.msra.mxu0 0.0
        %440 = vmatprep.subr.mxu0 0.0
        %441 = vmatpush1.msra.mxu0 0.0
        %442 = vmatprep.subr.mxu0 0.0
        %443 = vmatpush1.msra.mxu0 0.0
        %444 = vmatprep.subr.mxu0 0.0
        %445 = vmatpush1.msra.mxu0 %v420
        %446 = vmatprep.subr.mxu0 0.0
        %447 = vmatpush1.msra.mxu0 %v312
        %448 = vmatprep.subr.mxu0 0.0
        %449 = vmatpush1.msra.mxu0 %v311
        %450 = vmatprep.subr.mxu0 0.0
        %451 = vmatpush1.msra.mxu0 %v310
        %452 = vmatprep.subr.mxu0 0.0
        %453 = vmatpush1.msra.mxu0 %v309
        %454 = vmatprep.subr.mxu0 0.0
        %455 = vmatpush2.msra.mxu0 0.0
        %456 = vmatprep.subr.mxu0 0.0
        %457 = vmatpush2.msra.mxu0 0.0
        %458 = vmatprep.subr.mxu0 0.0
        %459 = vmatpush2.msra.mxu0 0.0
        %460 = vmatprep.subr.mxu0 0.0
        %461 = vmatpush2.msra.mxu0 0.0
        %462 = vmatprep.subr.mxu0 0.0
        %463 = vmatpush2.msra.mxu0 0.0
        %464 = vmatprep.subr.mxu0 0.0
        %465 = vmatpush2.msra.mxu0 0.0
        %466 = vmatprep.subr.mxu0 0.0
        %467 = vmatpush2.msra.mxu0 0.0
        %468 = vmatprep.subr.mxu0 0.0
        %469 = vmatpush2.msra.mxu0 0.0
        %470 = vmatprep.subr.mxu0 0.0
        %471 = vmatpush2.msra.mxu0 0.0
        %472 = vmatprep.subr.mxu0 0.0
        %473 = vmatpush2.msra.mxu0 0.0
        %474 = vmatprep.subr.mxu0 0.0
        %475 = vmatpush2.msra.mxu0 0.0
        %476 = vmatprep.subr.mxu0 0.0
        %477 = vmatpush2.msra.mxu0 0.0
        %478 = vmatprep.subr.mxu0 0.0
        %479 = vmatpush2.msra.mxu0 0.0
        %480 = vmatprep.subr.mxu0 0.0
        %481 = vmatpush2.msra.mxu0 0.0
        %482 = vmatprep.subr.mxu0 0.0
        %483 = vmatpush2.msra.mxu0 0.0
        %484 = vmatprep.subr.mxu0 0.0
        %485 = vmatpush2.msra.mxu0 0.0
        %486 = vmatprep.mubr.f32.mxu0 0.0
        %487 = vmatmul.mubr.f32.gmra.mxu0 %v323
        %v488 = vpop.f32.mrf.mxu0
        %v489 = vadd.f32 %v319, %v488
        %v490 = vpop.f32.mrf.mxu0
        %491 = vmatprep.mubr.f32.mxu0 0.0
        %492 = vmatmul.mubr.f32.gmra.mxu0 %v326
        %v493 = vpop.f32.mrf.mxu0
        %v494 = vadd.f32 %v319, %v493
        %v495 = vpop.f32.mrf.mxu0
        %496 = vmatprep.mubr.f32.mxu0 0.0
        %497 = vmatmul.mubr.f32.gmra.mxu0 %v329
        %v498 = vpop.f32.mrf.mxu0
        %v499 = vadd.f32 %v319, %v498
        %v500 = vpop.f32.mrf.mxu0
        %501 = vmatprep.mubr.f32.mxu0 0.0
        %502 = vmatmul.mubr.f32.gmra.mxu0 %v332
        %v503 = vpop.f32.mrf.mxu0
        %v504 = vadd.f32 %v319, %v503
        %v505 = vpop.f32.mrf.mxu0
        %506 = vmatprep.mubr.f32.mxu0 0.0
        %507 = vmatmul.mubr.f32.gmra.mxu0 %v335
        %v508 = vpop.f32.mrf.mxu0
        %v509 = vadd.f32 %v319, %v508
        %v510 = vpop.f32.mrf.mxu0
        %511 = vmatprep.mubr.f32.mxu0 0.0
        %512 = vmatmul.mubr.f32.gmra.mxu0 %v338
        %v513 = vpop.f32.mrf.mxu0
        %v514 = vadd.f32 %v319, %v513
        %v515 = vpop.f32.mrf.mxu0
        %516 = vmatprep.mubr.f32.mxu0 0.0
        %517 = vmatmul.mubr.f32.gmra.mxu0 %v341
        %v518 = vpop.f32.mrf.mxu0
        %v519 = vadd.f32 %v319, %v518
        %v520 = vpop.f32.mrf.mxu0
        %521 = vmatprep.mubr.f32.mxu0 0.0
        %522 = vmatmul.mubr.f32.gmra.mxu0 %v344
        %v523 = vpop.f32.mrf.mxu0
        %v524 = vadd.f32 %v319, %v523
        %v525 = vpop.f32.mrf.mxu0
        %526 = vmatprep.mubr.f32.mxu0 0.0
        %527 = vmatmul.mubr.f32.gmra.mxu0 %v347
        %v528 = vpop.f32.mrf.mxu0
        %v529 = vadd.f32 %v319, %v528
        %v530 = vpop.f32.mrf.mxu0
        %531 = vmatprep.mubr.f32.mxu0 0.0
        %532 = vmatmul.mubr.f32.gmra.mxu0 %v350
        %v533 = vpop.f32.mrf.mxu0
        %v534 = vadd.f32 %v319, %v533
        %v535 = vpop.f32.mrf.mxu0
        %536 = vmatprep.mubr.f32.mxu0 0.0
        %537 = vmatmul.mubr.f32.gmra.mxu0 %v353
        %v538 = vpop.f32.mrf.mxu0
        %v539 = vadd.f32 %v319, %v538
        %v540 = vpop.f32.mrf.mxu0
        %541 = vmatprep.mubr.f32.mxu0 0.0
        %542 = vmatmul.mubr.f32.gmra.mxu0 %v356
        %v543 = vpop.f32.mrf.mxu0
        %v544 = vadd.f32 %v319, %v543
        %v545 = vpop.f32.mrf.mxu0
        %546 = vmatprep.mubr.f32.mxu0 0.0
        %547 = vmatmul.mubr.f32.gmra.mxu0 %v359
        %v548 = vpop.f32.mrf.mxu0
        %v549 = vadd.f32 %v319, %v548
        %v550 = vpop.f32.mrf.mxu0
        %551 = vmatprep.mubr.f32.mxu0 0.0
        %552 = vmatmul.mubr.f32.gmra.mxu0 %v362
        %v553 = vpop.f32.mrf.mxu0
        %v554 = vadd.f32 %v319, %v553
        %v555 = vpop.f32.mrf.mxu0
        %556 = vmatprep.mubr.f32.mxu0 0.0
        %557 = vmatmul.mubr.f32.gmra.mxu0 %v365
        %v558 = vpop.f32.mrf.mxu0
        %v559 = vadd.f32 %v319, %v558
        %v560 = vpop.f32.mrf.mxu0
        %561 = vmatprep.mubr.f32.mxu0 0.0
        %562 = vmatmul.mubr.f32.gmra.mxu0 %v368
        %v563 = vpop.f32.mrf.mxu0
        %v564 = vadd.f32 %v319, %v563
        %v565 = vpop.f32.mrf.mxu0
        %566 = vmatprep.mubr.f32.mxu0 0.0
        %567 = vmatmul.mubr.f32.gmra.mxu0 %v371
        %v568 = vpop.f32.mrf.mxu0
        %v569 = vadd.f32 %v319, %v568
        %v570 = vpop.f32.mrf.mxu0
        %571 = vmatprep.mubr.f32.mxu0 0.0
        %572 = vmatmul.mubr.f32.gmra.mxu0 %v374
        %v573 = vpop.f32.mrf.mxu0
        %v574 = vadd.f32 %v319, %v573
        %v575 = vpop.f32.mrf.mxu0
        %576 = vmatprep.mubr.f32.mxu0 0.0
        %577 = vmatmul.mubr.f32.gmra.mxu0 %v377
        %v578 = vpop.f32.mrf.mxu0
        %v579 = vadd.f32 %v319, %v578
        %v580 = vpop.f32.mrf.mxu0
        %581 = vmatprep.mubr.f32.mxu0 0.0
        %582 = vmatmul.mubr.f32.gmra.mxu0 %v380
        %v583 = vpop.f32.mrf.mxu0
        %v584 = vadd.f32 %v319, %v583
        %v585 = vpop.f32.mrf.mxu0
        %586 = vmatprep.mubr.f32.mxu0 0.0
        %587 = vmatmul.mubr.f32.gmra.mxu0 %v383
        %v588 = vpop.f32.mrf.mxu0
        %v589 = vadd.f32 %v319, %v588
        %v590 = vpop.f32.mrf.mxu0
        %591 = vmatprep.mubr.f32.mxu0 0.0
        %592 = vmatmul.mubr.f32.gmra.mxu0 %v386
        %v593 = vpop.f32.mrf.mxu0
        %v594 = vadd.f32 %v319, %v593
        %v595 = vpop.f32.mrf.mxu0
        %596 = vmatprep.mubr.f32.mxu0 0.0
        %597 = vmatmul.mubr.f32.gmra.mxu0 %v389
        %v598 = vpop.f32.mrf.mxu0
        %v599 = vadd.f32 %v319, %v598
        %v600 = vpop.f32.mrf.mxu0
        %601 = vmatprep.mubr.f32.mxu0 0.0
        %602 = vmatmul.mubr.f32.gmra.mxu0 %v392
        %v603 = vpop.f32.mrf.mxu0
        %v604 = vadd.f32 %v319, %v603
        %v605 = vpop.f32.mrf.mxu0
        %606 = vmatprep.mubr.f32.mxu0 0.0
        %607 = vmatmul.mubr.f32.gmra.mxu0 %v395
        %v608 = vpop.f32.mrf.mxu0
        %v609 = vadd.f32 %v319, %v608
        %v610 = vpop.f32.mrf.mxu0
        %611 = vmatprep.mubr.f32.mxu0 0.0
        %612 = vmatmul.mubr.f32.gmra.mxu0 %v398
        %v613 = vpop.f32.mrf.mxu0
        %v614 = vadd.f32 %v319, %v613
        %v615 = vpop.f32.mrf.mxu0
        %616 = vmatprep.mubr.f32.mxu0 0.0
        %617 = vmatmul.mubr.f32.gmra.mxu0 %v401
        %v618 = vpop.f32.mrf.mxu0
        %v619 = vadd.f32 %v319, %v618
        %v620 = vpop.f32.mrf.mxu0
        %621 = vmatprep.mubr.f32.mxu0 0.0
        %622 = vmatmul.mubr.f32.gmra.mxu0 %v404
        %v623 = vpop.f32.mrf.mxu0
        %v624 = vadd.f32 %v319, %v623
        %v625 = vpop.f32.mrf.mxu0
        %626 = vmatprep.mubr.f32.mxu0 0.0
        %627 = vmatmul.mubr.f32.gmra.mxu0 %v407
        %v628 = vpop.f32.mrf.mxu0
        %v629 = vadd.f32 %v319, %v628
        %v630 = vpop.f32.mrf.mxu0
        %631 = vmatprep.mubr.f32.mxu0 0.0
        %632 = vmatmul.mubr.f32.gmra.mxu0 %v410
        %v633 = vpop.f32.mrf.mxu0
        %v634 = vadd.f32 %v319, %v633
        %v635 = vpop.f32.mrf.mxu0
        %636 = vmatprep.mubr.f32.mxu0 0.0
        %637 = vmatmul.mubr.f32.gmra.mxu0 %v413
        %v638 = vpop.f32.mrf.mxu0
        %v639 = vadd.f32 %v319, %v638
        %v640 = vpop.f32.mrf.mxu0
        %641 = vmatprep.mubr.f32.mxu0 0.0
        %642 = vmatmul.mubr.f32.gmra.mxu0 %v416
        %v643 = vpop.f32.mrf.mxu0
        %v644 = vadd.f32 %v319, %v643
        %v645 = vpop.f32.mrf.mxu0
        %646 = vdwg.mxu0
        %v647 = vmax.f32 %v489, 0.0
        %v648 = vmax.f32 %v494, 0.0
        %v649 = vmax.f32 %v499, 0.0
        %v650 = vmax.f32 %v504, 0.0
        %v651 = vmax.f32 %v509, 0.0
        %v652 = vmax.f32 %v514, 0.0
        %v653 = vmax.f32 %v519, 0.0
        %v654 = vmax.f32 %v524, 0.0
        %v655 = vmax.f32 %v529, 0.0
        %v656 = vmax.f32 %v534, 0.0
        %v657 = vmax.f32 %v539, 0.0
        %v658 = vmax.f32 %v544, 0.0
        %v659 = vmax.f32 %v549, 0.0
        %v660 = vmax.f32 %v554, 0.0
        %v661 = vmax.f32 %v559, 0.0
        %v662 = vmax.f32 %v564, 0.0
        %v663 = vmax.f32 %v569, 0.0
        %v664 = vmax.f32 %v574, 0.0
        %v665 = vmax.f32 %v579, 0.0
        %v666 = vmax.f32 %v584, 0.0
        %v667 = vmax.f32 %v589, 0.0
        %v668 = vmax.f32 %v594, 0.0
        %v669 = vmax.f32 %v599, 0.0
        %v670 = vmax.f32 %v604, 0.0
        %v671 = vmax.f32 %v609, 0.0
        %v672 = vmax.f32 %v614, 0.0
        %v673 = vmax.f32 %v619, 0.0
        %v674 = vmax.f32 %v624, 0.0
        %v675 = vmax.f32 %v629, 0.0
        %v676 = vmax.f32 %v634, 0.0
        %v677 = vmax.f32 %v639, 0.0
        %v678 = vmax.f32 %v644, 0.0
        %vm679 = vcmask 523264
        %680 = vst.msk [vmem:[#allocation2] sm:$0xff] %vm679, 0.0
        %681 = vst.msk [vmem:[#allocation2 + $0x8] sm:$0xff] %vm679, 0.0
        %vm682 = vcmask 517120
        %683 = vst.msk [vmem:[#allocation2 + $0x10] sm:$0x3] %vm682, 0.0
        %s684 = scalar_lea.vmem [#allocation2], 408
        %685 = vst.msk [vmem:[%s684] sm:$0xff] %vm679, 0.0
        %686 = vst.msk [vmem:[%s684 + $0x8] sm:$0xff] %vm679, 0.0
        %687 = vst.msk [vmem:[%s684 + $0x10] sm:$0x3] %vm682, 0.0
        %vm688 = vcmask 516096
        %689 = vst.msk [vmem:[#allocation2] sm:$0x1] %vm688, 0.0
        %690 = vst.msk [vmem:[#allocation2 + $0x18] sm:$0x1] %vm688, 0.0
        %691 = vst.msk [vmem:[#allocation2 + $0x30] sm:$0x1] %vm688, 0.0
        %692 = vst.msk [vmem:[#allocation2 + $0x48] sm:$0x1] %vm688, 0.0
        %693 = vst.msk [vmem:[#allocation2 + $0x60] sm:$0x1] %vm688, 0.0
        %694 = vst.msk [vmem:[#allocation2 + $0x78] sm:$0x1] %vm688, 0.0
        %695 = vst.msk [vmem:[#allocation2 + $0x90] sm:$0x1] %vm688, 0.0
        %696 = vst.msk [vmem:[#allocation2 + $0xa8] sm:$0x1] %vm688, 0.0
        %697 = vst.msk [vmem:[#allocation2 + $0xc0] sm:$0x1] %vm688, 0.0
        %698 = vst.msk [vmem:[#allocation2 + $0xd8] sm:$0x1] %vm688, 0.0
        %699 = vst.msk [vmem:[#allocation2 + $0xf0] sm:$0x1] %vm688, 0.0
        %700 = vst.msk [vmem:[#allocation2 + $0x108] sm:$0x1] %vm688, 0.0
        %701 = vst.msk [vmem:[#allocation2 + $0x120] sm:$0x1] %vm688, 0.0
        %702 = vst.msk [vmem:[#allocation2 + $0x138] sm:$0x1] %vm688, 0.0
        %703 = vst.msk [vmem:[#allocation2 + $0x150] sm:$0x1] %vm688, 0.0
        %704 = vst.msk [vmem:[#allocation2 + $0x168] sm:$0x1] %vm688, 0.0
        %705 = vst.msk [vmem:[#allocation2 + $0x180] sm:$0x1] %vm688, 0.0
        %706 = vst.msk [vmem:[#allocation2 + $0x198] sm:$0x1] %vm688, 0.0
        %707 = vst.msk [vmem:[#allocation2 + $0x11] sm:$0x1] %vm688, 0.0
        %708 = vst.msk [vmem:[#allocation2 + $0x29] sm:$0x1] %vm688, 0.0
        %709 = vst.msk [vmem:[#allocation2 + $0x41] sm:$0x1] %vm688, 0.0
        %710 = vst.msk [vmem:[#allocation2 + $0x59] sm:$0x1] %vm688, 0.0
        %711 = vst.msk [vmem:[#allocation2 + $0x71] sm:$0x1] %vm688, 0.0
        %712 = vst.msk [vmem:[#allocation2 + $0x89] sm:$0x1] %vm688, 0.0
        %713 = vst.msk [vmem:[#allocation2 + $0xa1] sm:$0x1] %vm688, 0.0
        %714 = vst.msk [vmem:[#allocation2 + $0xb9] sm:$0x1] %vm688, 0.0
        %715 = vst.msk [vmem:[#allocation2 + $0xd1] sm:$0x1] %vm688, 0.0
        %716 = vst.msk [vmem:[#allocation2 + $0xe9] sm:$0x1] %vm688, 0.0
        %717 = vst.msk [vmem:[#allocation2 + $0x101] sm:$0x1] %vm688, 0.0
        %718 = vst.msk [vmem:[#allocation2 + $0x119] sm:$0x1] %vm688, 0.0
        %719 = vst.msk [vmem:[#allocation2 + $0x131] sm:$0x1] %vm688, 0.0
        %720 = vst.msk [vmem:[#allocation2 + $0x149] sm:$0x1] %vm688, 0.0
        %721 = vst.msk [vmem:[#allocation2 + $0x161] sm:$0x1] %vm688, 0.0
        %722 = vst.msk [vmem:[#allocation2 + $0x179] sm:$0x1] %vm688, 0.0
        %723 = vst.msk [vmem:[#allocation2 + $0x191] sm:$0x1] %vm688, 0.0
        %724 = vst.msk [vmem:[#allocation2 + $0x1a9] sm:$0x1] %vm688, 0.0
        %s725 = scalar_lea.vmem [#allocation2], 24
        %726 = vst.msk [vmem:[%s725 + $0x1] sm:$0xff] %vm679, %v647
        %727 = vst.msk [vmem:[%s725 + $0x9] sm:$0xff] %vm679, %v648
        %728 = vst.msk [vmem:[%s725 + $0x19] sm:$0xff] %vm679, %v649
        %729 = vst.msk [vmem:[%s725 + $0x21] sm:$0xff] %vm679, %v650
        %730 = vst.msk [vmem:[%s725 + $0x31] sm:$0xff] %vm679, %v651
        %731 = vst.msk [vmem:[%s725 + $0x39] sm:$0xff] %vm679, %v652
        %732 = vst.msk [vmem:[%s725 + $0x49] sm:$0xff] %vm679, %v653
        %733 = vst.msk [vmem:[%s725 + $0x51] sm:$0xff] %vm679, %v654
        %734 = vst.msk [vmem:[%s725 + $0x61] sm:$0xff] %vm679, %v655
        %735 = vst.msk [vmem:[%s725 + $0x69] sm:$0xff] %vm679, %v656
        %736 = vst.msk [vmem:[%s725 + $0x79] sm:$0xff] %vm679, %v657
        %737 = vst.msk [vmem:[%s725 + $0x81] sm:$0xff] %vm679, %v658
        %738 = vst.msk [vmem:[%s725 + $0x91] sm:$0xff] %vm679, %v659
        %739 = vst.msk [vmem:[%s725 + $0x99] sm:$0xff] %vm679, %v660
        %740 = vst.msk [vmem:[%s725 + $0xa9] sm:$0xff] %vm679, %v661
        %741 = vst.msk [vmem:[%s725 + $0xb1] sm:$0xff] %vm679, %v662
        %742 = vst.msk [vmem:[%s725 + $0xc1] sm:$0xff] %vm679, %v663
        %743 = vst.msk [vmem:[%s725 + $0xc9] sm:$0xff] %vm679, %v664
        %744 = vst.msk [vmem:[%s725 + $0xd9] sm:$0xff] %vm679, %v665
        %745 = vst.msk [vmem:[%s725 + $0xe1] sm:$0xff] %vm679, %v666
        %746 = vst.msk [vmem:[%s725 + $0xf1] sm:$0xff] %vm679, %v667
        %747 = vst.msk [vmem:[%s725 + $0xf9] sm:$0xff] %vm679, %v668
        %748 = vst.msk [vmem:[%s725 + $0x109] sm:$0xff] %vm679, %v669
        %749 = vst.msk [vmem:[%s725 + $0x111] sm:$0xff] %vm679, %v670
        %750 = vst.msk [vmem:[%s725 + $0x121] sm:$0xff] %vm679, %v671
        %751 = vst.msk [vmem:[%s725 + $0x129] sm:$0xff] %vm679, %v672
        %752 = vst.msk [vmem:[%s725 + $0x139] sm:$0xff] %vm679, %v673
        %753 = vst.msk [vmem:[%s725 + $0x141] sm:$0xff] %vm679, %v674
        %754 = vst.msk [vmem:[%s725 + $0x151] sm:$0xff] %vm679, %v675
        %755 = vst.msk [vmem:[%s725 + $0x159] sm:$0xff] %vm679, %v676
        %756 = vst.msk [vmem:[%s725 + $0x169] sm:$0xff] %vm679, %v677
        %757 = vst.msk [vmem:[%s725 + $0x171] sm:$0xff] %vm679, %v678
        %v758 = vld [vmem:[#allocation2] sm:$0xff]
        %v759 = vld [vmem:[#allocation2 + $0x8] sm:$0xff]
        %v760 = vld [vmem:[#allocation2 + $0x10] sm:$0x3]
        %v761 = vld [vmem:[#allocation2 + $0x18] sm:$0xff]
        %v762 = vld [vmem:[#allocation2 + $0x20] sm:$0xff]
        %v763 = vld [vmem:[#allocation2 + $0x28] sm:$0x3]
        %v764 = vld [vmem:[#allocation2 + $0x30] sm:$0xff]
        %v765 = vld [vmem:[#allocation2 + $0x38] sm:$0xff]
        %v766 = vld [vmem:[#allocation2 + $0x40] sm:$0x3]
        %v767 = vld [vmem:[#allocation2 + $0x48] sm:$0xff]
        %v768 = vld [vmem:[#allocation2 + $0x50] sm:$0xff]
        %v769 = vld [vmem:[#allocation2 + $0x58] sm:$0x3]
        %v770 = vld [vmem:[#allocation2 + $0x60] sm:$0xff]
        %v771 = vld [vmem:[#allocation2 + $0x68] sm:$0xff]
        %v772 = vld [vmem:[#allocation2 + $0x70] sm:$0x3]
        %v773 = vld [vmem:[#allocation2 + $0x78] sm:$0xff]
        %v774 = vld [vmem:[#allocation2 + $0x80] sm:$0xff]
        %v775 = vld [vmem:[#allocation2 + $0x88] sm:$0x3]
        %v776 = vld [vmem:[#allocation2 + $0x90] sm:$0xff]
        %v777 = vld [vmem:[#allocation2 + $0x98] sm:$0xff]
        %v778 = vld [vmem:[#allocation2 + $0xa0] sm:$0x3]
        %v779 = vld [vmem:[#allocation2 + $0xa8] sm:$0xff]
        %v780 = vld [vmem:[#allocation2 + $0xb0] sm:$0xff]
        %v781 = vld [vmem:[#allocation2 + $0xb8] sm:$0x3]
        %v782 = vld [vmem:[#allocation2 + $0xc0] sm:$0xff]
        %v783 = vld [vmem:[#allocation2 + $0xc8] sm:$0xff]
        %v784 = vld [vmem:[#allocation2 + $0xd0] sm:$0x3]
        %v785 = vld [vmem:[#allocation2 + $0xd8] sm:$0xff]
        %v786 = vld [vmem:[#allocation2 + $0xe0] sm:$0xff]
        %v787 = vld [vmem:[#allocation2 + $0xe8] sm:$0x3]
        %v788 = vld [vmem:[#allocation2 + $0xf0] sm:$0xff]
        %v789 = vld [vmem:[#allocation2 + $0xf8] sm:$0xff]
        %v790 = vld [vmem:[#allocation2 + $0x100] sm:$0x3]
        %v791 = vld [vmem:[#allocation2 + $0x108] sm:$0xff]
        %v792 = vld [vmem:[#allocation2 + $0x110] sm:$0xff]
        %v793 = vld [vmem:[#allocation2 + $0x118] sm:$0x3]
        %v794 = vld [vmem:[#allocation2 + $0x120] sm:$0xff]
        %v795 = vld [vmem:[#allocation2 + $0x128] sm:$0xff]
        %v796 = vld [vmem:[#allocation2 + $0x130] sm:$0x3]
        %v797 = vld [vmem:[#allocation2 + $0x138] sm:$0xff]
        %v798 = vld [vmem:[#allocation2 + $0x140] sm:$0xff]
        %v799 = vld [vmem:[#allocation2 + $0x148] sm:$0x3]
        %v800 = vld [vmem:[#allocation2 + $0x150] sm:$0xff]
        %v801 = vld [vmem:[#allocation2 + $0x158] sm:$0xff]
        %v802 = vld [vmem:[#allocation2 + $0x160] sm:$0x3]
        %v803 = vld [vmem:[#allocation2 + $0x168] sm:$0xff]
        %v804 = vld [vmem:[#allocation2 + $0x170] sm:$0xff]
        %v805 = vld [vmem:[#allocation2 + $0x178] sm:$0x3]
        %v806 = vld [vmem:[#allocation2 + $0x180] sm:$0xff]
        %v807 = vld [vmem:[#allocation2 + $0x188] sm:$0xff]
        %v808 = vld [vmem:[#allocation2 + $0x190] sm:$0x3]
        %v809 = vld [vmem:[#allocation2 + $0x198] sm:$0xff]
        %v810 = vld [vmem:[#allocation2 + $0x1a0] sm:$0xff]
        %v811 = vld [vmem:[#allocation2 + $0x1a8] sm:$0x3]
        %vm860 = vcmask 1046528
        %v861 = vrot.slane %v758, 1
        %v862 = vrot.slane %v759, 1
        %v863 = vsel %vm860, %v861, %v862
        %v864 = vrot.slane %v760, 1
        %v865 = vsel %vm860, %v862, %v864
        %v866 = vrot.slane %v761, 1
        %v867 = vrot.slane %v762, 1
        %v868 = vsel %vm860, %v866, %v867
        %v869 = vrot.slane %v763, 1
        %v870 = vsel %vm860, %v867, %v869
        %v871 = vrot.slane %v764, 1
        %v872 = vrot.slane %v765, 1
        %v873 = vsel %vm860, %v871, %v872
        %v874 = vrot.slane %v766, 1
        %v875 = vsel %vm860, %v872, %v874
        %v876 = vrot.slane %v767, 1
        %v877 = vrot.slane %v768, 1
        %v878 = vsel %vm860, %v876, %v877
        %v879 = vrot.slane %v769, 1
        %v880 = vsel %vm860, %v877, %v879
        %v881 = vrot.slane %v770, 1
        %v882 = vrot.slane %v771, 1
        %v883 = vsel %vm860, %v881, %v882
        %v884 = vrot.slane %v772, 1
        %v885 = vsel %vm860, %v882, %v884
        %v886 = vrot.slane %v773, 1
        %v887 = vrot.slane %v774, 1
        %v888 = vsel %vm860, %v886, %v887
        %v889 = vrot.slane %v775, 1
        %v890 = vsel %vm860, %v887, %v889
        %v891 = vrot.slane %v776, 1
        %v892 = vrot.slane %v777, 1
        %v893 = vsel %vm860, %v891, %v892
        %v894 = vrot.slane %v778, 1
        %v895 = vsel %vm860, %v892, %v894
        %v896 = vrot.slane %v779, 1
        %v897 = vrot.slane %v780, 1
        %v898 = vsel %vm860, %v896, %v897
        %v899 = vrot.slane %v781, 1
        %v900 = vsel %vm860, %v897, %v899
        %v901 = vrot.slane %v782, 1
        %v902 = vrot.slane %v783, 1
        %v903 = vsel %vm860, %v901, %v902
        %v904 = vrot.slane %v784, 1
        %v905 = vsel %vm860, %v902, %v904
        %v906 = vrot.slane %v785, 1
        %v907 = vrot.slane %v786, 1
        %v908 = vsel %vm860, %v906, %v907
        %v909 = vrot.slane %v787, 1
        %v910 = vsel %vm860, %v907, %v909
        %v911 = vrot.slane %v788, 1
        %v912 = vrot.slane %v789, 1
        %v913 = vsel %vm860, %v911, %v912
        %v914 = vrot.slane %v790, 1
        %v915 = vsel %vm860, %v912, %v914
        %v916 = vrot.slane %v791, 1
        %v917 = vrot.slane %v792, 1
        %v918 = vsel %vm860, %v916, %v917
        %v919 = vrot.slane %v793, 1
        %v920 = vsel %vm860, %v917, %v919
        %v921 = vrot.slane %v794, 1
        %v922 = vrot.slane %v795, 1
        %v923 = vsel %vm860, %v921, %v922
        %v924 = vrot.slane %v796, 1
        %v925 = vsel %vm860, %v922, %v924
        %v926 = vrot.slane %v797, 1
        %v927 = vrot.slane %v798, 1
        %v928 = vsel %vm860, %v926, %v927
        %v929 = vrot.slane %v799, 1
        %v930 = vsel %vm860, %v927, %v929
        %v931 = vrot.slane %v800, 1
        %v932 = vrot.slane %v801, 1
        %v933 = vsel %vm860, %v931, %v932
        %v934 = vrot.slane %v802, 1
        %v935 = vsel %vm860, %v932, %v934
        %v936 = vrot.slane %v803, 1
        %v937 = vrot.slane %v804, 1
        %v938 = vsel %vm860, %v936, %v937
        %v939 = vrot.slane %v805, 1
        %v940 = vsel %vm860, %v937, %v939
        %941 = vrot.lane.b32.xlu0 %v863, 64
        %v942 = vpop.permute.xlu0 %941
        %943 = vrot.lane.b32.xlu0 %v865, 64
        %v944 = vpop.permute.xlu0 %943
        %945 = vrot.lane.b32.xlu0 %v868, 64
        %v946 = vpop.permute.xlu0 %945
        %947 = vrot.lane.b32.xlu0 %v870, 64
        %v948 = vpop.permute.xlu0 %947
        %949 = vrot.lane.b32.xlu0 %v873, 64
        %v950 = vpop.permute.xlu0 %949
        %951 = vrot.lane.b32.xlu0 %v875, 64
        %v952 = vpop.permute.xlu0 %951
        %953 = vrot.lane.b32.xlu0 %v878, 64
        %v954 = vpop.permute.xlu0 %953
        %955 = vrot.lane.b32.xlu0 %v880, 64
        %v956 = vpop.permute.xlu0 %955
        %957 = vrot.lane.b32.xlu0 %v883, 64
        %v958 = vpop.permute.xlu0 %957
        %959 = vrot.lane.b32.xlu0 %v885, 64
        %v960 = vpop.permute.xlu0 %959
        %961 = vrot.lane.b32.xlu0 %v888, 64
        %v962 = vpop.permute.xlu0 %961
        %963 = vrot.lane.b32.xlu0 %v890, 64
        %v964 = vpop.permute.xlu0 %963
        %965 = vrot.lane.b32.xlu0 %v893, 64
        %v966 = vpop.permute.xlu0 %965
        %967 = vrot.lane.b32.xlu0 %v895, 64
        %v968 = vpop.permute.xlu0 %967
        %969 = vrot.lane.b32.xlu0 %v898, 64
        %v970 = vpop.permute.xlu0 %969
        %971 = vrot.lane.b32.xlu0 %v900, 64
        %v972 = vpop.permute.xlu0 %971
        %973 = vrot.lane.b32.xlu0 %v903, 64
        %v974 = vpop.permute.xlu0 %973
        %975 = vrot.lane.b32.xlu0 %v905, 64
        %v976 = vpop.permute.xlu0 %975
        %977 = vrot.lane.b32.xlu0 %v908, 64
        %v978 = vpop.permute.xlu0 %977
        %979 = vrot.lane.b32.xlu0 %v910, 64
        %v980 = vpop.permute.xlu0 %979
        %981 = vrot.lane.b32.xlu0 %v913, 64
        %v982 = vpop.permute.xlu0 %981
        %983 = vrot.lane.b32.xlu0 %v915, 64
        %v984 = vpop.permute.xlu0 %983
        %985 = vrot.lane.b32.xlu0 %v918, 64
        %v986 = vpop.permute.xlu0 %985
        %987 = vrot.lane.b32.xlu0 %v920, 64
        %v988 = vpop.permute.xlu0 %987
        %989 = vrot.lane.b32.xlu0 %v923, 64
        %v990 = vpop.permute.xlu0 %989
        %991 = vrot.lane.b32.xlu0 %v925, 64
        %v992 = vpop.permute.xlu0 %991
        %993 = vrot.lane.b32.xlu0 %v928, 64
        %v994 = vpop.permute.xlu0 %993
        %995 = vrot.lane.b32.xlu0 %v930, 64
        %v996 = vpop.permute.xlu0 %995
        %997 = vrot.lane.b32.xlu0 %v933, 64
        %v998 = vpop.permute.xlu0 %997
        %999 = vrot.lane.b32.xlu0 %v935, 64
        %v1000 = vpop.permute.xlu0 %999
        %1001 = vrot.lane.b32.xlu0 %v938, 64
        %v1002 = vpop.permute.xlu0 %1001
        %1003 = vrot.lane.b32.xlu0 %v940, 64
        %v1004 = vpop.permute.xlu0 %1003
        %v1037 = vsel %vm679, %v758, %v942
        %v1038 = vsel %vm679, %v759, %v944
        %v1039 = vsel %vm679, %v761, %v946
        %v1040 = vsel %vm679, %v762, %v948
        %v1041 = vsel %vm679, %v764, %v950
        %v1042 = vsel %vm679, %v765, %v952
        %v1043 = vsel %vm679, %v767, %v954
        %v1044 = vsel %vm679, %v768, %v956
        %v1045 = vsel %vm679, %v770, %v958
        %v1046 = vsel %vm679, %v771, %v960
        %v1047 = vsel %vm679, %v773, %v962
        %v1048 = vsel %vm679, %v774, %v964
        %v1049 = vsel %vm679, %v776, %v966
        %v1050 = vsel %vm679, %v777, %v968
        %v1051 = vsel %vm679, %v779, %v970
        %v1052 = vsel %vm679, %v780, %v972
        %v1053 = vsel %vm679, %v782, %v974
        %v1054 = vsel %vm679, %v783, %v976
        %v1055 = vsel %vm679, %v785, %v978
        %v1056 = vsel %vm679, %v786, %v980
        %v1057 = vsel %vm679, %v788, %v982
        %v1058 = vsel %vm679, %v789, %v984
        %v1059 = vsel %vm679, %v791, %v986
        %v1060 = vsel %vm679, %v792, %v988
        %v1061 = vsel %vm679, %v794, %v990
        %v1062 = vsel %vm679, %v795, %v992
        %v1063 = vsel %vm679, %v797, %v994
        %v1064 = vsel %vm679, %v798, %v996
        %v1065 = vsel %vm679, %v800, %v998
        %v1066 = vsel %vm679, %v801, %v1000
        %v1067 = vsel %vm679, %v803, %v1002
        %v1068 = vsel %vm679, %v804, %v1004
        %1069 = vst [vmem:[#allocation3] sm:$0xff] %v1037
        %1070 = vst [vmem:[#allocation3 + $0x28] sm:$0xff] %v1038
        %1071 = vst [vmem:[#allocation3 + $0x50] sm:$0xff] %v1039
        %1072 = vst [vmem:[#allocation3 + $0x78] sm:$0xff] %v1040
        %1073 = vst [vmem:[#allocation3 + $0xa0] sm:$0xff] %v1041
        %1074 = vst [vmem:[#allocation3 + $0xc8] sm:$0xff] %v1042
        %1075 = vst [vmem:[#allocation3 + $0xf0] sm:$0xff] %v1043
        %1076 = vst [vmem:[#allocation3 + $0x118] sm:$0xff] %v1044
        %1077 = vst [vmem:[#allocation3 + $0x140] sm:$0xff] %v1045
        %1078 = vst [vmem:[#allocation3 + $0x168] sm:$0xff] %v1046
        %1079 = vst [vmem:[#allocation3 + $0x190] sm:$0xff] %v1047
        %1080 = vst [vmem:[#allocation3 + $0x1b8] sm:$0xff] %v1048
        %1081 = vst [vmem:[#allocation3 + $0x1e0] sm:$0xff] %v1049
        %1082 = vst [vmem:[#allocation3 + $0x208] sm:$0xff] %v1050
        %1083 = vst [vmem:[#allocation3 + $0x230] sm:$0xff] %v1051
        %1084 = vst [vmem:[#allocation3 + $0x258] sm:$0xff] %v1052
        %1085 = vst [vmem:[#allocation3 + $0x280] sm:$0xff] %v1053
        %1086 = vst [vmem:[#allocation3 + $0x2a8] sm:$0xff] %v1054
        %1087 = vst [vmem:[#allocation3 + $0x2d0] sm:$0xff] %v1055
        %1088 = vst [vmem:[#allocation3 + $0x2f8] sm:$0xff] %v1056
        %1089 = vst [vmem:[#allocation3 + $0x320] sm:$0xff] %v1057
        %1090 = vst [vmem:[#allocation3 + $0x348] sm:$0xff] %v1058
        %1091 = vst [vmem:[#allocation3 + $0x370] sm:$0xff] %v1059
        %1092 = vst [vmem:[#allocation3 + $0x398] sm:$0xff] %v1060
        %1093 = vst [vmem:[#allocation3 + $0x3c0] sm:$0xff] %v1061
        %1094 = vst [vmem:[#allocation3 + $0x3e8] sm:$0xff] %v1062
        %1095 = vst [vmem:[#allocation3 + $0x410] sm:$0xff] %v1063
        %1096 = vst [vmem:[#allocation3 + $0x438] sm:$0xff] %v1064
        %1097 = vst [vmem:[#allocation3 + $0x460] sm:$0xff] %v1065
        %1098 = vst [vmem:[#allocation3 + $0x488] sm:$0xff] %v1066
        %1099 = vst [vmem:[#allocation3 + $0x4b0] sm:$0xff] %v1067
        %1100 = vst [vmem:[#allocation3 + $0x4d8] sm:$0xff] %v1068
        %vm1101 = vcmask 1045504
        %v1102 = vrot.slane %v758, 2
        %v1103 = vrot.slane %v759, 2
        %v1104 = vsel %vm1101, %v1102, %v1103
        %v1105 = vrot.slane %v760, 2
        %v1106 = vsel %vm1101, %v1103, %v1105
        %v1107 = vrot.slane %v761, 2
        %v1108 = vrot.slane %v762, 2
        %v1109 = vsel %vm1101, %v1107, %v1108
        %v1110 = vrot.slane %v763, 2
        %v1111 = vsel %vm1101, %v1108, %v1110
        %v1112 = vrot.slane %v764, 2
        %v1113 = vrot.slane %v765, 2
        %v1114 = vsel %vm1101, %v1112, %v1113
        %v1115 = vrot.slane %v766, 2
        %v1116 = vsel %vm1101, %v1113, %v1115
        %v1117 = vrot.slane %v767, 2
        %v1118 = vrot.slane %v768, 2
        %v1119 = vsel %vm1101, %v1117, %v1118
        %v1120 = vrot.slane %v769, 2
        %v1121 = vsel %vm1101, %v1118, %v1120
        %v1122 = vrot.slane %v770, 2
        %v1123 = vrot.slane %v771, 2
        %v1124 = vsel %vm1101, %v1122, %v1123
        %v1125 = vrot.slane %v772, 2
        %v1126 = vsel %vm1101, %v1123, %v1125
        %v1127 = vrot.slane %v773, 2
        %v1128 = vrot.slane %v774, 2
        %v1129 = vsel %vm1101, %v1127, %v1128
        %v1130 = vrot.slane %v775, 2
        %v1131 = vsel %vm1101, %v1128, %v1130
        %v1132 = vrot.slane %v776, 2
        %v1133 = vrot.slane %v777, 2
        %v1134 = vsel %vm1101, %v1132, %v1133
        %v1135 = vrot.slane %v778, 2
        %v1136 = vsel %vm1101, %v1133, %v1135
        %v1137 = vrot.slane %v779, 2
        %v1138 = vrot.slane %v780, 2
        %v1139 = vsel %vm1101, %v1137, %v1138
        %v1140 = vrot.slane %v781, 2
        %v1141 = vsel %vm1101, %v1138, %v1140
        %v1142 = vrot.slane %v782, 2
        %v1143 = vrot.slane %v783, 2
        %v1144 = vsel %vm1101, %v1142, %v1143
        %v1145 = vrot.slane %v784, 2
        %v1146 = vsel %vm1101, %v1143, %v1145
        %v1147 = vrot.slane %v785, 2
        %v1148 = vrot.slane %v786, 2
        %v1149 = vsel %vm1101, %v1147, %v1148
        %v1150 = vrot.slane %v787, 2
        %v1151 = vsel %vm1101, %v1148, %v1150
        %v1152 = vrot.slane %v788, 2
        %v1153 = vrot.slane %v789, 2
        %v1154 = vsel %vm1101, %v1152, %v1153
        %v1155 = vrot.slane %v790, 2
        %v1156 = vsel %vm1101, %v1153, %v1155
        %v1157 = vrot.slane %v791, 2
        %v1158 = vrot.slane %v792, 2
        %v1159 = vsel %vm1101, %v1157, %v1158
        %v1160 = vrot.slane %v793, 2
        %v1161 = vsel %vm1101, %v1158, %v1160
        %v1162 = vrot.slane %v794, 2
        %v1163 = vrot.slane %v795, 2
        %v1164 = vsel %vm1101, %v1162, %v1163
        %v1165 = vrot.slane %v796, 2
        %v1166 = vsel %vm1101, %v1163, %v1165
        %v1167 = vrot.slane %v797, 2
        %v1168 = vrot.slane %v798, 2
        %v1169 = vsel %vm1101, %v1167, %v1168
        %v1170 = vrot.slane %v799, 2
        %v1171 = vsel %vm1101, %v1168, %v1170
        %v1172 = vrot.slane %v800, 2
        %v1173 = vrot.slane %v801, 2
        %v1174 = vsel %vm1101, %v1172, %v1173
        %v1175 = vrot.slane %v802, 2
        %v1176 = vsel %vm1101, %v1173, %v1175
        %v1177 = vrot.slane %v803, 2
        %v1178 = vrot.slane %v804, 2
        %v1179 = vsel %vm1101, %v1177, %v1178
        %v1180 = vrot.slane %v805, 2
        %v1181 = vsel %vm1101, %v1178, %v1180
        %1216 = vrot.lane.b32.xlu0 %v761, 64
        %v1217 = vpop.permute.xlu0 %1216
        %1218 = vrot.lane.b32.xlu0 %v762, 64
        %v1219 = vpop.permute.xlu0 %1218
        %1220 = vrot.lane.b32.xlu0 %v764, 64
        %v1221 = vpop.permute.xlu0 %1220
        %1222 = vrot.lane.b32.xlu0 %v765, 64
        %v1223 = vpop.permute.xlu0 %1222
        %1224 = vrot.lane.b32.xlu0 %v767, 64
        %v1225 = vpop.permute.xlu0 %1224
        %1226 = vrot.lane.b32.xlu0 %v768, 64
        %v1227 = vpop.permute.xlu0 %1226
        %1228 = vrot.lane.b32.xlu0 %v770, 64
        %v1229 = vpop.permute.xlu0 %1228
        %1230 = vrot.lane.b32.xlu0 %v771, 64
        %v1231 = vpop.permute.xlu0 %1230
        %1232 = vrot.lane.b32.xlu0 %v773, 64
        %v1233 = vpop.permute.xlu0 %1232
        %1234 = vrot.lane.b32.xlu0 %v774, 64
        %v1235 = vpop.permute.xlu0 %1234
        %1236 = vrot.lane.b32.xlu0 %v776, 64
        %v1237 = vpop.permute.xlu0 %1236
        %1238 = vrot.lane.b32.xlu0 %v777, 64
        %v1239 = vpop.permute.xlu0 %1238
        %1240 = vrot.lane.b32.xlu0 %v779, 64
        %v1241 = vpop.permute.xlu0 %1240
        %1242 = vrot.lane.b32.xlu0 %v780, 64
        %v1243 = vpop.permute.xlu0 %1242
        %1244 = vrot.lane.b32.xlu0 %v782, 64
        %v1245 = vpop.permute.xlu0 %1244
        %1246 = vrot.lane.b32.xlu0 %v783, 64
        %v1247 = vpop.permute.xlu0 %1246
        %1248 = vrot.lane.b32.xlu0 %v785, 64
        %v1249 = vpop.permute.xlu0 %1248
        %1250 = vrot.lane.b32.xlu0 %v786, 64
        %v1251 = vpop.permute.xlu0 %1250
        %1252 = vrot.lane.b32.xlu0 %v788, 64
        %v1253 = vpop.permute.xlu0 %1252
        %1254 = vrot.lane.b32.xlu0 %v789, 64
        %v1255 = vpop.permute.xlu0 %1254
        %1256 = vrot.lane.b32.xlu0 %v791, 64
        %v1257 = vpop.permute.xlu0 %1256
        %1258 = vrot.lane.b32.xlu0 %v792, 64
        %v1259 = vpop.permute.xlu0 %1258
        %1260 = vrot.lane.b32.xlu0 %v794, 64
        %v1261 = vpop.permute.xlu0 %1260
        %1262 = vrot.lane.b32.xlu0 %v795, 64
        %v1263 = vpop.permute.xlu0 %1262
        %1264 = vrot.lane.b32.xlu0 %v797, 64
        %v1265 = vpop.permute.xlu0 %1264
        %1266 = vrot.lane.b32.xlu0 %v798, 64
        %v1267 = vpop.permute.xlu0 %1266
        %1268 = vrot.lane.b32.xlu0 %v800, 64
        %v1269 = vpop.permute.xlu0 %1268
        %1270 = vrot.lane.b32.xlu0 %v801, 64
        %v1271 = vpop.permute.xlu0 %1270
        %1272 = vrot.lane.b32.xlu0 %v803, 64
        %v1273 = vpop.permute.xlu0 %1272
        %1274 = vrot.lane.b32.xlu0 %v804, 64
        %v1275 = vpop.permute.xlu0 %1274
        %1276 = vrot.lane.b32.xlu0 %v806, 64
        %v1277 = vpop.permute.xlu0 %1276
        %1278 = vrot.lane.b32.xlu0 %v807, 64
        %v1279 = vpop.permute.xlu0 %1278
        %v1312 = vsel %vm679, %v1104, %v1217
        %v1313 = vsel %vm679, %v1106, %v1219
        %v1314 = vsel %vm679, %v1109, %v1221
        %v1315 = vsel %vm679, %v1111, %v1223
        %v1316 = vsel %vm679, %v1114, %v1225
        %v1317 = vsel %vm679, %v1116, %v1227
        %v1318 = vsel %vm679, %v1119, %v1229
        %v1319 = vsel %vm679, %v1121, %v1231
        %v1320 = vsel %vm679, %v1124, %v1233
        %v1321 = vsel %vm679, %v1126, %v1235
        %v1322 = vsel %vm679, %v1129, %v1237
        %v1323 = vsel %vm679, %v1131, %v1239
        %v1324 = vsel %vm679, %v1134, %v1241
        %v1325 = vsel %vm679, %v1136, %v1243
        %v1326 = vsel %vm679, %v1139, %v1245
        %v1327 = vsel %vm679, %v1141, %v1247
        %v1328 = vsel %vm679, %v1144, %v1249
        %v1329 = vsel %vm679, %v1146, %v1251
        %v1330 = vsel %vm679, %v1149, %v1253
        %v1331 = vsel %vm679, %v1151, %v1255
        %v1332 = vsel %vm679, %v1154, %v1257
        %v1333 = vsel %vm679, %v1156, %v1259
        %v1334 = vsel %vm679, %v1159, %v1261
        %v1335 = vsel %vm679, %v1161, %v1263
        %v1336 = vsel %vm679, %v1164, %v1265
        %v1337 = vsel %vm679, %v1166, %v1267
        %v1338 = vsel %vm679, %v1169, %v1269
        %v1339 = vsel %vm679, %v1171, %v1271
        %v1340 = vsel %vm679, %v1174, %v1273
        %v1341 = vsel %vm679, %v1176, %v1275
        %v1342 = vsel %vm679, %v1179, %v1277
        %v1343 = vsel %vm679, %v1181, %v1279
        %1344 = vst [vmem:[#allocation3 + $0x8] sm:$0xff] %v1312
        %1345 = vst [vmem:[#allocation3 + $0x30] sm:$0xff] %v1313
        %1346 = vst [vmem:[#allocation3 + $0x58] sm:$0xff] %v1314
        %1347 = vst [vmem:[#allocation3 + $0x80] sm:$0xff] %v1315
        %1348 = vst [vmem:[#allocation3 + $0xa8] sm:$0xff] %v1316
        %1349 = vst [vmem:[#allocation3 + $0xd0] sm:$0xff] %v1317
        %1350 = vst [vmem:[#allocation3 + $0xf8] sm:$0xff] %v1318
        %1351 = vst [vmem:[#allocation3 + $0x120] sm:$0xff] %v1319
        %1352 = vst [vmem:[#allocation3 + $0x148] sm:$0xff] %v1320
        %1353 = vst [vmem:[#allocation3 + $0x170] sm:$0xff] %v1321
        %1354 = vst [vmem:[#allocation3 + $0x198] sm:$0xff] %v1322
        %1355 = vst [vmem:[#allocation3 + $0x1c0] sm:$0xff] %v1323
        %1356 = vst [vmem:[#allocation3 + $0x1e8] sm:$0xff] %v1324
        %1357 = vst [vmem:[#allocation3 + $0x210] sm:$0xff] %v1325
        %1358 = vst [vmem:[#allocation3 + $0x238] sm:$0xff] %v1326
        %1359 = vst [vmem:[#allocation3 + $0x260] sm:$0xff] %v1327
        %1360 = vst [vmem:[#allocation3 + $0x288] sm:$0xff] %v1328
        %1361 = vst [vmem:[#allocation3 + $0x2b0] sm:$0xff] %v1329
        %1362 = vst [vmem:[#allocation3 + $0x2d8] sm:$0xff] %v1330
        %1363 = vst [vmem:[#allocation3 + $0x300] sm:$0xff] %v1331
        %1364 = vst [vmem:[#allocation3 + $0x328] sm:$0xff] %v1332
        %1365 = vst [vmem:[#allocation3 + $0x350] sm:$0xff] %v1333
        %1366 = vst [vmem:[#allocation3 + $0x378] sm:$0xff] %v1334
        %1367 = vst [vmem:[#allocation3 + $0x3a0] sm:$0xff] %v1335
        %1368 = vst [vmem:[#allocation3 + $0x3c8] sm:$0xff] %v1336
        %1369 = vst [vmem:[#allocation3 + $0x3f0] sm:$0xff] %v1337
        %1370 = vst [vmem:[#allocation3 + $0x418] sm:$0xff] %v1338
        %1371 = vst [vmem:[#allocation3 + $0x440] sm:$0xff] %v1339
        %1372 = vst [vmem:[#allocation3 + $0x468] sm:$0xff] %v1340
        %1373 = vst [vmem:[#allocation3 + $0x490] sm:$0xff] %v1341
        %1374 = vst [vmem:[#allocation3 + $0x4b8] sm:$0xff] %v1342
        %1375 = vst [vmem:[#allocation3 + $0x4e0] sm:$0xff] %v1343
        %v1377 = vrot.slane %v806, 1
        %v1378 = vrot.slane %v807, 1
        %v1379 = vsel %vm860, %v1377, %v1378
        %v1380 = vrot.slane %v808, 1
        %v1381 = vsel %vm860, %v1378, %v1380
        %v1414 = vrot.slane %v806, 2
        %v1415 = vrot.slane %v807, 2
        %v1416 = vsel %vm1101, %v1414, %v1415
        %v1417 = vrot.slane %v808, 2
        %v1418 = vsel %vm1101, %v1415, %v1417
        %1419 = vrot.lane.b32.xlu0 %v1109, 64
        %v1420 = vpop.permute.xlu0 %1419
        %1421 = vrot.lane.b32.xlu0 %v1111, 64
        %v1422 = vpop.permute.xlu0 %1421
        %1423 = vrot.lane.b32.xlu0 %v1114, 64
        %v1424 = vpop.permute.xlu0 %1423
        %1425 = vrot.lane.b32.xlu0 %v1116, 64
        %v1426 = vpop.permute.xlu0 %1425
        %1427 = vrot.lane.b32.xlu0 %v1119, 64
        %v1428 = vpop.permute.xlu0 %1427
        %1429 = vrot.lane.b32.xlu0 %v1121, 64
        %v1430 = vpop.permute.xlu0 %1429
        %1431 = vrot.lane.b32.xlu0 %v1124, 64
        %v1432 = vpop.permute.xlu0 %1431
        %1433 = vrot.lane.b32.xlu0 %v1126, 64
        %v1434 = vpop.permute.xlu0 %1433
        %1435 = vrot.lane.b32.xlu0 %v1129, 64
        %v1436 = vpop.permute.xlu0 %1435
        %1437 = vrot.lane.b32.xlu0 %v1131, 64
        %v1438 = vpop.permute.xlu0 %1437
        %1439 = vrot.lane.b32.xlu0 %v1134, 64
        %v1440 = vpop.permute.xlu0 %1439
        %1441 = vrot.lane.b32.xlu0 %v1136, 64
        %v1442 = vpop.permute.xlu0 %1441
        %1443 = vrot.lane.b32.xlu0 %v1139, 64
        %v1444 = vpop.permute.xlu0 %1443
        %1445 = vrot.lane.b32.xlu0 %v1141, 64
        %v1446 = vpop.permute.xlu0 %1445
        %1447 = vrot.lane.b32.xlu0 %v1144, 64
        %v1448 = vpop.permute.xlu0 %1447
        %1449 = vrot.lane.b32.xlu0 %v1146, 64
        %v1450 = vpop.permute.xlu0 %1449
        %1451 = vrot.lane.b32.xlu0 %v1149, 64
        %v1452 = vpop.permute.xlu0 %1451
        %1453 = vrot.lane.b32.xlu0 %v1151, 64
        %v1454 = vpop.permute.xlu0 %1453
        %1455 = vrot.lane.b32.xlu0 %v1154, 64
        %v1456 = vpop.permute.xlu0 %1455
        %1457 = vrot.lane.b32.xlu0 %v1156, 64
        %v1458 = vpop.permute.xlu0 %1457
        %1459 = vrot.lane.b32.xlu0 %v1159, 64
        %v1460 = vpop.permute.xlu0 %1459
        %1461 = vrot.lane.b32.xlu0 %v1161, 64
        %v1462 = vpop.permute.xlu0 %1461
        %1463 = vrot.lane.b32.xlu0 %v1164, 64
        %v1464 = vpop.permute.xlu0 %1463
        %1465 = vrot.lane.b32.xlu0 %v1166, 64
        %v1466 = vpop.permute.xlu0 %1465
        %1467 = vrot.lane.b32.xlu0 %v1169, 64
        %v1468 = vpop.permute.xlu0 %1467
        %1469 = vrot.lane.b32.xlu0 %v1171, 64
        %v1470 = vpop.permute.xlu0 %1469
        %1471 = vrot.lane.b32.xlu0 %v1174, 64
        %v1472 = vpop.permute.xlu0 %1471
        %1473 = vrot.lane.b32.xlu0 %v1176, 64
        %v1474 = vpop.permute.xlu0 %1473
        %1475 = vrot.lane.b32.xlu0 %v1179, 64
        %v1476 = vpop.permute.xlu0 %1475
        %1477 = vrot.lane.b32.xlu0 %v1181, 64
        %v1478 = vpop.permute.xlu0 %1477
        %1479 = vrot.lane.b32.xlu0 %v1416, 64
        %v1480 = vpop.permute.xlu0 %1479
        %1481 = vrot.lane.b32.xlu0 %v1418, 64
        %v1482 = vpop.permute.xlu0 %1481
        %v1515 = vsel %vm679, %v868, %v1420
        %v1516 = vsel %vm679, %v870, %v1422
        %v1517 = vsel %vm679, %v873, %v1424
        %v1518 = vsel %vm679, %v875, %v1426
        %v1519 = vsel %vm679, %v878, %v1428
        %v1520 = vsel %vm679, %v880, %v1430
        %v1521 = vsel %vm679, %v883, %v1432
        %v1522 = vsel %vm679, %v885, %v1434
        %v1523 = vsel %vm679, %v888, %v1436
        %v1524 = vsel %vm679, %v890, %v1438
        %v1525 = vsel %vm679, %v893, %v1440
        %v1526 = vsel %vm679, %v895, %v1442
        %v1527 = vsel %vm679, %v898, %v1444
        %v1528 = vsel %vm679, %v900, %v1446
        %v1529 = vsel %vm679, %v903, %v1448
        %v1530 = vsel %vm679, %v905, %v1450
        %v1531 = vsel %vm679, %v908, %v1452
        %v1532 = vsel %vm679, %v910, %v1454
        %v1533 = vsel %vm679, %v913, %v1456
        %v1534 = vsel %vm679, %v915, %v1458
        %v1535 = vsel %vm679, %v918, %v1460
        %v1536 = vsel %vm679, %v920, %v1462
        %v1537 = vsel %vm679, %v923, %v1464
        %v1538 = vsel %vm679, %v925, %v1466
        %v1539 = vsel %vm679, %v928, %v1468
        %v1540 = vsel %vm679, %v930, %v1470
        %v1541 = vsel %vm679, %v933, %v1472
        %v1542 = vsel %vm679, %v935, %v1474
        %v1543 = vsel %vm679, %v938, %v1476
        %v1544 = vsel %vm679, %v940, %v1478
        %v1545 = vsel %vm679, %v1379, %v1480
        %v1546 = vsel %vm679, %v1381, %v1482
        %1547 = vst [vmem:[#allocation3 + $0x10] sm:$0xff] %v1515
        %1548 = vst [vmem:[#allocation3 + $0x38] sm:$0xff] %v1516
        %1549 = vst [vmem:[#allocation3 + $0x60] sm:$0xff] %v1517
        %1550 = vst [vmem:[#allocation3 + $0x88] sm:$0xff] %v1518
        %1551 = vst [vmem:[#allocation3 + $0xb0] sm:$0xff] %v1519
        %1552 = vst [vmem:[#allocation3 + $0xd8] sm:$0xff] %v1520
        %1553 = vst [vmem:[#allocation3 + $0x100] sm:$0xff] %v1521
        %1554 = vst [vmem:[#allocation3 + $0x128] sm:$0xff] %v1522
        %1555 = vst [vmem:[#allocation3 + $0x150] sm:$0xff] %v1523
        %1556 = vst [vmem:[#allocation3 + $0x178] sm:$0xff] %v1524
        %1557 = vst [vmem:[#allocation3 + $0x1a0] sm:$0xff] %v1525
        %1558 = vst [vmem:[#allocation3 + $0x1c8] sm:$0xff] %v1526
        %1559 = vst [vmem:[#allocation3 + $0x1f0] sm:$0xff] %v1527
        %1560 = vst [vmem:[#allocation3 + $0x218] sm:$0xff] %v1528
        %1561 = vst [vmem:[#allocation3 + $0x240] sm:$0xff] %v1529
        %1562 = vst [vmem:[#allocation3 + $0x268] sm:$0xff] %v1530
        %1563 = vst [vmem:[#allocation3 + $0x290] sm:$0xff] %v1531
        %1564 = vst [vmem:[#allocation3 + $0x2b8] sm:$0xff] %v1532
        %1565 = vst [vmem:[#allocation3 + $0x2e0] sm:$0xff] %v1533
        %1566 = vst [vmem:[#allocation3 + $0x308] sm:$0xff] %v1534
        %1567 = vst [vmem:[#allocation3 + $0x330] sm:$0xff] %v1535
        %1568 = vst [vmem:[#allocation3 + $0x358] sm:$0xff] %v1536
        %1569 = vst [vmem:[#allocation3 + $0x380] sm:$0xff] %v1537
        %1570 = vst [vmem:[#allocation3 + $0x3a8] sm:$0xff] %v1538
        %1571 = vst [vmem:[#allocation3 + $0x3d0] sm:$0xff] %v1539
        %1572 = vst [vmem:[#allocation3 + $0x3f8] sm:$0xff] %v1540
        %1573 = vst [vmem:[#allocation3 + $0x420] sm:$0xff] %v1541
        %1574 = vst [vmem:[#allocation3 + $0x448] sm:$0xff] %v1542
        %1575 = vst [vmem:[#allocation3 + $0x470] sm:$0xff] %v1543
        %1576 = vst [vmem:[#allocation3 + $0x498] sm:$0xff] %v1544
        %1577 = vst [vmem:[#allocation3 + $0x4c0] sm:$0xff] %v1545
        %1578 = vst [vmem:[#allocation3 + $0x4e8] sm:$0xff] %v1546
        %v1582 = vrot.slane %v809, 1
        %v1583 = vrot.slane %v810, 1
        %v1584 = vsel %vm860, %v1582, %v1583
        %v1585 = vrot.slane %v811, 1
        %v1586 = vsel %vm860, %v1583, %v1585
        %1587 = vrot.lane.b32.xlu0 %v1379, 64
        %v1588 = vpop.permute.xlu0 %1587
        %1589 = vrot.lane.b32.xlu0 %v1381, 64
        %v1590 = vpop.permute.xlu0 %1589
        %1591 = vrot.lane.b32.xlu0 %v1584, 64
        %v1592 = vpop.permute.xlu0 %1591
        %1593 = vrot.lane.b32.xlu0 %v1586, 64
        %v1594 = vpop.permute.xlu0 %1593
        %v1599 = vsel %vm679, %v806, %v1588
        %v1600 = vsel %vm679, %v807, %v1590
        %v1601 = vsel %vm679, %v809, %v1592
        %v1602 = vsel %vm679, %v810, %v1594
        %1603 = vst [vmem:[#allocation3 + $0x18] sm:$0xff] %v1041
        %1604 = vst [vmem:[#allocation3 + $0x40] sm:$0xff] %v1042
        %1605 = vst [vmem:[#allocation3 + $0x68] sm:$0xff] %v1043
        %1606 = vst [vmem:[#allocation3 + $0x90] sm:$0xff] %v1044
        %1607 = vst [vmem:[#allocation3 + $0xb8] sm:$0xff] %v1045
        %1608 = vst [vmem:[#allocation3 + $0xe0] sm:$0xff] %v1046
        %1609 = vst [vmem:[#allocation3 + $0x108] sm:$0xff] %v1047
        %1610 = vst [vmem:[#allocation3 + $0x130] sm:$0xff] %v1048
        %1611 = vst [vmem:[#allocation3 + $0x158] sm:$0xff] %v1049
        %1612 = vst [vmem:[#allocation3 + $0x180] sm:$0xff] %v1050
        %1613 = vst [vmem:[#allocation3 + $0x1a8] sm:$0xff] %v1051
        %1614 = vst [vmem:[#allocation3 + $0x1d0] sm:$0xff] %v1052
        %1615 = vst [vmem:[#allocation3 + $0x1f8] sm:$0xff] %v1053
        %1616 = vst [vmem:[#allocation3 + $0x220] sm:$0xff] %v1054
        %1617 = vst [vmem:[#allocation3 + $0x248] sm:$0xff] %v1055
        %1618 = vst [vmem:[#allocation3 + $0x270] sm:$0xff] %v1056
        %1619 = vst [vmem:[#allocation3 + $0x298] sm:$0xff] %v1057
        %1620 = vst [vmem:[#allocation3 + $0x2c0] sm:$0xff] %v1058
        %1621 = vst [vmem:[#allocation3 + $0x2e8] sm:$0xff] %v1059
        %1622 = vst [vmem:[#allocation3 + $0x310] sm:$0xff] %v1060
        %1623 = vst [vmem:[#allocation3 + $0x338] sm:$0xff] %v1061
        %1624 = vst [vmem:[#allocation3 + $0x360] sm:$0xff] %v1062
        %1625 = vst [vmem:[#allocation3 + $0x388] sm:$0xff] %v1063
        %1626 = vst [vmem:[#allocation3 + $0x3b0] sm:$0xff] %v1064
        %1627 = vst [vmem:[#allocation3 + $0x3d8] sm:$0xff] %v1065
        %1628 = vst [vmem:[#allocation3 + $0x400] sm:$0xff] %v1066
        %1629 = vst [vmem:[#allocation3 + $0x428] sm:$0xff] %v1067
        %1630 = vst [vmem:[#allocation3 + $0x450] sm:$0xff] %v1068
        %1631 = vst [vmem:[#allocation3 + $0x478] sm:$0xff] %v1599
        %1632 = vst [vmem:[#allocation3 + $0x4a0] sm:$0xff] %v1600
        %1633 = vst [vmem:[#allocation3 + $0x4c8] sm:$0xff] %v1601
        %1634 = vst [vmem:[#allocation3 + $0x4f0] sm:$0xff] %v1602
        %v1635 = vrot.slane %v809, 2
        %v1636 = vrot.slane %v810, 2
        %v1637 = vsel %vm1101, %v1635, %v1636
        %v1638 = vrot.slane %v811, 2
        %v1639 = vsel %vm1101, %v1636, %v1638
        %1644 = vst.msk [vmem:[#allocation3 + $0x20] sm:$0xff] %vm679, %v1114
        %1645 = vst.msk [vmem:[#allocation3 + $0x48] sm:$0xff] %vm679, %v1116
        %1646 = vst.msk [vmem:[#allocation3 + $0x70] sm:$0xff] %vm679, %v1119
        %1647 = vst.msk [vmem:[#allocation3 + $0x98] sm:$0xff] %vm679, %v1121
        %1648 = vst.msk [vmem:[#allocation3 + $0xc0] sm:$0xff] %vm679, %v1124
        %1649 = vst.msk [vmem:[#allocation3 + $0xe8] sm:$0xff] %vm679, %v1126
        %1650 = vst.msk [vmem:[#allocation3 + $0x110] sm:$0xff] %vm679, %v1129
        %1651 = vst.msk [vmem:[#allocation3 + $0x138] sm:$0xff] %vm679, %v1131
        %1652 = vst.msk [vmem:[#allocation3 + $0x160] sm:$0xff] %vm679, %v1134
        %1653 = vst.msk [vmem:[#allocation3 + $0x188] sm:$0xff] %vm679, %v1136
        %1654 = vst.msk [vmem:[#allocation3 + $0x1b0] sm:$0xff] %vm679, %v1139
        %1655 = vst.msk [vmem:[#allocation3 + $0x1d8] sm:$0xff] %vm679, %v1141
        %1656 = vst.msk [vmem:[#allocation3 + $0x200] sm:$0xff] %vm679, %v1144
        %1657 = vst.msk [vmem:[#allocation3 + $0x228] sm:$0xff] %vm679, %v1146
        %1658 = vst.msk [vmem:[#allocation3 + $0x250] sm:$0xff] %vm679, %v1149
        %1659 = vst.msk [vmem:[#allocation3 + $0x278] sm:$0xff] %vm679, %v1151
        %1660 = vst.msk [vmem:[#allocation3 + $0x2a0] sm:$0xff] %vm679, %v1154
        %1661 = vst.msk [vmem:[#allocation3 + $0x2c8] sm:$0xff] %vm679, %v1156
        %1662 = vst.msk [vmem:[#allocation3 + $0x2f0] sm:$0xff] %vm679, %v1159
        %1663 = vst.msk [vmem:[#allocation3 + $0x318] sm:$0xff] %vm679, %v1161
        %1664 = vst.msk [vmem:[#allocation3 + $0x340] sm:$0xff] %vm679, %v1164
        %1665 = vst.msk [vmem:[#allocation3 + $0x368] sm:$0xff] %vm679, %v1166
        %1666 = vst.msk [vmem:[#allocation3 + $0x390] sm:$0xff] %vm679, %v1169
        %1667 = vst.msk [vmem:[#allocation3 + $0x3b8] sm:$0xff] %vm679, %v1171
        %1668 = vst.msk [vmem:[#allocation3 + $0x3e0] sm:$0xff] %vm679, %v1174
        %1669 = vst.msk [vmem:[#allocation3 + $0x408] sm:$0xff] %vm679, %v1176
        %1670 = vst.msk [vmem:[#allocation3 + $0x430] sm:$0xff] %vm679, %v1179
        %1671 = vst.msk [vmem:[#allocation3 + $0x458] sm:$0xff] %vm679, %v1181
        %1672 = vst.msk [vmem:[#allocation3 + $0x480] sm:$0xff] %vm679, %v1416
        %1673 = vst.msk [vmem:[#allocation3 + $0x4a8] sm:$0xff] %vm679, %v1418
        %1674 = vst.msk [vmem:[#allocation3 + $0x4d0] sm:$0xff] %vm679, %v1637
        %1675 = vst.msk [vmem:[#allocation3 + $0x4f8] sm:$0xff] %vm679, %v1639
        %v1676 = vld [vmem:[#allocation3] sm:$0xff]
        %v1677 = vld [vmem:[#allocation3 + $0x8] sm:$0xff]
        %v1678 = vld [vmem:[#allocation3 + $0x10] sm:$0xff]
        %v1679 = vld [vmem:[#allocation3 + $0x18] sm:$0xff]
        %v1680 = vld [vmem:[#allocation3 + $0x20] sm:$0xff]
        %v1681 = vld [vmem:[#allocation3 + $0x28] sm:$0xff]
        %v1682 = vld [vmem:[#allocation3 + $0x30] sm:$0xff]
        %v1683 = vld [vmem:[#allocation3 + $0x38] sm:$0xff]
        %v1684 = vld [vmem:[#allocation3 + $0x40] sm:$0xff]
        %v1685 = vld [vmem:[#allocation3 + $0x48] sm:$0xff]
        %v1686 = vld [vmem:[#allocation3 + $0x50] sm:$0xff]
        %v1687 = vld [vmem:[#allocation3 + $0x58] sm:$0xff]
        %v1688 = vld [vmem:[#allocation3 + $0x60] sm:$0xff]
        %v1689 = vld [vmem:[#allocation3 + $0x68] sm:$0xff]
        %v1690 = vld [vmem:[#allocation3 + $0x70] sm:$0xff]
        %v1691 = vld [vmem:[#allocation3 + $0x78] sm:$0xff]
        %v1692 = vld [vmem:[#allocation3 + $0x80] sm:$0xff]
        %v1693 = vld [vmem:[#allocation3 + $0x88] sm:$0xff]
        %v1694 = vld [vmem:[#allocation3 + $0x90] sm:$0xff]
        %v1695 = vld [vmem:[#allocation3 + $0x98] sm:$0xff]
        %v1696 = vld [vmem:[#allocation3 + $0xa0] sm:$0xff]
        %v1697 = vld [vmem:[#allocation3 + $0xa8] sm:$0xff]
        %v1698 = vld [vmem:[#allocation3 + $0xb0] sm:$0xff]
        %v1699 = vld [vmem:[#allocation3 + $0xb8] sm:$0xff]
        %v1700 = vld [vmem:[#allocation3 + $0xc0] sm:$0xff]
        %v1701 = vld [vmem:[#allocation3 + $0xc8] sm:$0xff]
        %v1702 = vld [vmem:[#allocation3 + $0xd0] sm:$0xff]
        %v1703 = vld [vmem:[#allocation3 + $0xd8] sm:$0xff]
        %v1704 = vld [vmem:[#allocation3 + $0xe0] sm:$0xff]
        %v1705 = vld [vmem:[#allocation3 + $0xe8] sm:$0xff]
        %v1706 = vld [vmem:[#allocation3 + $0xf0] sm:$0xff]
        %v1707 = vld [vmem:[#allocation3 + $0xf8] sm:$0xff]
        %v1708 = vld [vmem:[#allocation3 + $0x100] sm:$0xff]
        %v1709 = vld [vmem:[#allocation3 + $0x108] sm:$0xff]
        %v1710 = vld [vmem:[#allocation3 + $0x110] sm:$0xff]
        %v1711 = vld [vmem:[#allocation3 + $0x118] sm:$0xff]
        %v1712 = vld [vmem:[#allocation3 + $0x120] sm:$0xff]
        %v1713 = vld [vmem:[#allocation3 + $0x128] sm:$0xff]
        %v1714 = vld [vmem:[#allocation3 + $0x130] sm:$0xff]
        %v1715 = vld [vmem:[#allocation3 + $0x138] sm:$0xff]
        %v1716 = vld [vmem:[#allocation3 + $0x140] sm:$0xff]
        %v1717 = vld [vmem:[#allocation3 + $0x148] sm:$0xff]
        %v1718 = vld [vmem:[#allocation3 + $0x150] sm:$0xff]
        %v1719 = vld [vmem:[#allocation3 + $0x158] sm:$0xff]
        %v1720 = vld [vmem:[#allocation3 + $0x160] sm:$0xff]
        %v1721 = vld [vmem:[#allocation3 + $0x168] sm:$0xff]
        %v1722 = vld [vmem:[#allocation3 + $0x170] sm:$0xff]
        %v1723 = vld [vmem:[#allocation3 + $0x178] sm:$0xff]
        %v1724 = vld [vmem:[#allocation3 + $0x180] sm:$0xff]
        %v1725 = vld [vmem:[#allocation3 + $0x188] sm:$0xff]
        %v1726 = vld [vmem:[#allocation3 + $0x190] sm:$0xff]
        %v1727 = vld [vmem:[#allocation3 + $0x198] sm:$0xff]
        %v1728 = vld [vmem:[#allocation3 + $0x1a0] sm:$0xff]
        %v1729 = vld [vmem:[#allocation3 + $0x1a8] sm:$0xff]
        %v1730 = vld [vmem:[#allocation3 + $0x1b0] sm:$0xff]
        %v1731 = vld [vmem:[#allocation3 + $0x1b8] sm:$0xff]
        %v1732 = vld [vmem:[#allocation3 + $0x1c0] sm:$0xff]
        %v1733 = vld [vmem:[#allocation3 + $0x1c8] sm:$0xff]
        %v1734 = vld [vmem:[#allocation3 + $0x1d0] sm:$0xff]
        %v1735 = vld [vmem:[#allocation3 + $0x1d8] sm:$0xff]
        %v1736 = vld [vmem:[#allocation3 + $0x1e0] sm:$0xff]
        %v1737 = vld [vmem:[#allocation3 + $0x1e8] sm:$0xff]
        %v1738 = vld [vmem:[#allocation3 + $0x1f0] sm:$0xff]
        %v1739 = vld [vmem:[#allocation3 + $0x1f8] sm:$0xff]
        %v1740 = vld [vmem:[#allocation3 + $0x200] sm:$0xff]
        %v1741 = vld [vmem:[#allocation3 + $0x208] sm:$0xff]
        %v1742 = vld [vmem:[#allocation3 + $0x210] sm:$0xff]
        %v1743 = vld [vmem:[#allocation3 + $0x218] sm:$0xff]
        %v1744 = vld [vmem:[#allocation3 + $0x220] sm:$0xff]
        %v1745 = vld [vmem:[#allocation3 + $0x228] sm:$0xff]
        %v1746 = vld [vmem:[#allocation3 + $0x230] sm:$0xff]
        %v1747 = vld [vmem:[#allocation3 + $0x238] sm:$0xff]
        %v1748 = vld [vmem:[#allocation3 + $0x240] sm:$0xff]
        %v1749 = vld [vmem:[#allocation3 + $0x248] sm:$0xff]
        %v1750 = vld [vmem:[#allocation3 + $0x250] sm:$0xff]
        %v1751 = vld [vmem:[#allocation3 + $0x258] sm:$0xff]
        %v1752 = vld [vmem:[#allocation3 + $0x260] sm:$0xff]
        %v1753 = vld [vmem:[#allocation3 + $0x268] sm:$0xff]
        %v1754 = vld [vmem:[#allocation3 + $0x270] sm:$0xff]
        %v1755 = vld [vmem:[#allocation3 + $0x278] sm:$0xff]
        %v1756 = vld [vmem:[#allocation3 + $0x280] sm:$0xff]
        %v1757 = vld [vmem:[#allocation3 + $0x288] sm:$0xff]
        %v1758 = vld [vmem:[#allocation3 + $0x290] sm:$0xff]
        %v1759 = vld [vmem:[#allocation3 + $0x298] sm:$0xff]
        %v1760 = vld [vmem:[#allocation3 + $0x2a0] sm:$0xff]
        %v1761 = vld [vmem:[#allocation3 + $0x2a8] sm:$0xff]
        %v1762 = vld [vmem:[#allocation3 + $0x2b0] sm:$0xff]
        %v1763 = vld [vmem:[#allocation3 + $0x2b8] sm:$0xff]
        %v1764 = vld [vmem:[#allocation3 + $0x2c0] sm:$0xff]
        %v1765 = vld [vmem:[#allocation3 + $0x2c8] sm:$0xff]
        %v1766 = vld [vmem:[#allocation3 + $0x2d0] sm:$0xff]
        %v1767 = vld [vmem:[#allocation3 + $0x2d8] sm:$0xff]
        %v1768 = vld [vmem:[#allocation3 + $0x2e0] sm:$0xff]
        %v1769 = vld [vmem:[#allocation3 + $0x2e8] sm:$0xff]
        %v1770 = vld [vmem:[#allocation3 + $0x2f0] sm:$0xff]
        %v1771 = vld [vmem:[#allocation3 + $0x2f8] sm:$0xff]
        %v1772 = vld [vmem:[#allocation3 + $0x300] sm:$0xff]
        %v1773 = vld [vmem:[#allocation3 + $0x308] sm:$0xff]
        %v1774 = vld [vmem:[#allocation3 + $0x310] sm:$0xff]
        %v1775 = vld [vmem:[#allocation3 + $0x318] sm:$0xff]
        %v1776 = vld [vmem:[#allocation3 + $0x320] sm:$0xff]
        %v1777 = vld [vmem:[#allocation3 + $0x328] sm:$0xff]
        %v1778 = vld [vmem:[#allocation3 + $0x330] sm:$0xff]
        %v1779 = vld [vmem:[#allocation3 + $0x338] sm:$0xff]
        %v1780 = vld [vmem:[#allocation3 + $0x340] sm:$0xff]
        %v1781 = vld [vmem:[#allocation3 + $0x348] sm:$0xff]
        %v1782 = vld [vmem:[#allocation3 + $0x350] sm:$0xff]
        %v1783 = vld [vmem:[#allocation3 + $0x358] sm:$0xff]
        %v1784 = vld [vmem:[#allocation3 + $0x360] sm:$0xff]
        %v1785 = vld [vmem:[#allocation3 + $0x368] sm:$0xff]
        %v1786 = vld [vmem:[#allocation3 + $0x370] sm:$0xff]
        %v1787 = vld [vmem:[#allocation3 + $0x378] sm:$0xff]
        %v1788 = vld [vmem:[#allocation3 + $0x380] sm:$0xff]
        %v1789 = vld [vmem:[#allocation3 + $0x388] sm:$0xff]
        %v1790 = vld [vmem:[#allocation3 + $0x390] sm:$0xff]
        %v1791 = vld [vmem:[#allocation3 + $0x398] sm:$0xff]
        %v1792 = vld [vmem:[#allocation3 + $0x3a0] sm:$0xff]
        %v1793 = vld [vmem:[#allocation3 + $0x3a8] sm:$0xff]
        %v1794 = vld [vmem:[#allocation3 + $0x3b0] sm:$0xff]
        %v1795 = vld [vmem:[#allocation3 + $0x3b8] sm:$0xff]
        %v1796 = vld [vmem:[#allocation3 + $0x3c0] sm:$0xff]
        %v1797 = vld [vmem:[#allocation3 + $0x3c8] sm:$0xff]
        %v1798 = vld [vmem:[#allocation3 + $0x3d0] sm:$0xff]
        %v1799 = vld [vmem:[#allocation3 + $0x3d8] sm:$0xff]
        %v1800 = vld [vmem:[#allocation3 + $0x3e0] sm:$0xff]
        %v1801 = vld [vmem:[#allocation3 + $0x3e8] sm:$0xff]
        %v1802 = vld [vmem:[#allocation3 + $0x3f0] sm:$0xff]
        %v1803 = vld [vmem:[#allocation3 + $0x3f8] sm:$0xff]
        %v1804 = vld [vmem:[#allocation3 + $0x400] sm:$0xff]
        %v1805 = vld [vmem:[#allocation3 + $0x408] sm:$0xff]
        %v1806 = vld [vmem:[#allocation3 + $0x410] sm:$0xff]
        %v1807 = vld [vmem:[#allocation3 + $0x418] sm:$0xff]
        %v1808 = vld [vmem:[#allocation3 + $0x420] sm:$0xff]
        %v1809 = vld [vmem:[#allocation3 + $0x428] sm:$0xff]
        %v1810 = vld [vmem:[#allocation3 + $0x430] sm:$0xff]
        %v1811 = vld [vmem:[#allocation3 + $0x438] sm:$0xff]
        %v1812 = vld [vmem:[#allocation3 + $0x440] sm:$0xff]
        %v1813 = vld [vmem:[#allocation3 + $0x448] sm:$0xff]
        %v1814 = vld [vmem:[#allocation3 + $0x450] sm:$0xff]
        %v1815 = vld [vmem:[#allocation3 + $0x458] sm:$0xff]
        %v1816 = vld [vmem:[#allocation3 + $0x460] sm:$0xff]
        %v1817 = vld [vmem:[#allocation3 + $0x468] sm:$0xff]
        %v1818 = vld [vmem:[#allocation3 + $0x470] sm:$0xff]
        %v1819 = vld [vmem:[#allocation3 + $0x478] sm:$0xff]
        %v1820 = vld [vmem:[#allocation3 + $0x480] sm:$0xff]
        %v1821 = vld [vmem:[#allocation3 + $0x488] sm:$0xff]
        %v1822 = vld [vmem:[#allocation3 + $0x490] sm:$0xff]
        %v1823 = vld [vmem:[#allocation3 + $0x498] sm:$0xff]
        %v1824 = vld [vmem:[#allocation3 + $0x4a0] sm:$0xff]
        %v1825 = vld [vmem:[#allocation3 + $0x4a8] sm:$0xff]
        %v1826 = vld [vmem:[#allocation3 + $0x4b0] sm:$0xff]
        %v1827 = vld [vmem:[#allocation3 + $0x4b8] sm:$0xff]
        %v1828 = vld [vmem:[#allocation3 + $0x4c0] sm:$0xff]
        %v1829 = vld [vmem:[#allocation3 + $0x4c8] sm:$0xff]
        %v1830 = vld [vmem:[#allocation3 + $0x4d0] sm:$0xff]
        %v1831 = vld [vmem:[#allocation3 + $0x4d8] sm:$0xff]
        %v1832 = vld [vmem:[#allocation3 + $0x4e0] sm:$0xff]
        %v1833 = vld [vmem:[#allocation3 + $0x4e8] sm:$0xff]
        %v1834 = vld [vmem:[#allocation3 + $0x4f0] sm:$0xff]
        %v1835 = vld [vmem:[#allocation3 + $0x4f8] sm:$0xff]
        %v1836 = vld [vmem:[%s3] sm:$0xff]
        %v1837 = vld [vmem:[%s3 + $0x8] sm:$0xff]
        %v1838 = vld [vmem:[%s3 + $0x10] sm:$0xff]
        %v1839 = vld [vmem:[%s3 + $0x18] sm:$0xff]
        %v1840 = vld [vmem:[%s3 + $0x20] sm:$0xff]
        %v1841 = vld [vmem:[%s3 + $0x28] sm:$0xff]
        %v1842 = vld [vmem:[%s3 + $0x30] sm:$0xff]
        %v1843 = vld [vmem:[%s3 + $0x38] sm:$0xff]
        %v1844 = vld [vmem:[%s3 + $0x40] sm:$0xff]
        %v1845 = vld [vmem:[%s3 + $0x48] sm:$0xff]
        %v1846 = vld [vmem:[%s3 + $0x50] sm:$0xff]
        %v1847 = vld [vmem:[%s3 + $0x58] sm:$0xff]
        %v1848 = vld [vmem:[%s3 + $0x60] sm:$0xff]
        %v1849 = vld [vmem:[%s3 + $0x68] sm:$0xff]
        %v1850 = vld [vmem:[%s3 + $0x70] sm:$0xff]
        %v1851 = vld [vmem:[%s3 + $0x78] sm:$0xff]
        %v1852 = vld [vmem:[%s3 + $0x80] sm:$0xff]
        %v1853 = vld [vmem:[%s3 + $0x88] sm:$0xff]
        %v1854 = vld [vmem:[%s3 + $0x90] sm:$0xff]
        %v1855 = vld [vmem:[%s3 + $0x98] sm:$0xff]
        %v1856 = vld [vmem:[%s3 + $0xa0] sm:$0xff]
        %v1857 = vld [vmem:[%s3 + $0xa8] sm:$0xff]
        %v1858 = vld [vmem:[%s3 + $0xb0] sm:$0xff]
        %v1859 = vld [vmem:[%s3 + $0xb8] sm:$0xff]
        %v1860 = vld [vmem:[%s3 + $0xc0] sm:$0xff]
        %v1861 = vld [vmem:[%s3 + $0xc8] sm:$0xff]
        %v1862 = vld [vmem:[%s3 + $0xd0] sm:$0xff]
        %v1863 = vld [vmem:[%s3 + $0xd8] sm:$0xff]
        %v1864 = vld [vmem:[%s3 + $0xe0] sm:$0xff]
        %v1865 = vld [vmem:[%s3 + $0xe8] sm:$0xff]
        %v1866 = vld [vmem:[%s3 + $0xf0] sm:$0xff]
        %v1867 = vld [vmem:[%s3 + $0xf8] sm:$0xff]
        %v1868 = vld [vmem:[%s3 + $0x100] sm:$0xff]
        %v1869 = vld [vmem:[%s3 + $0x108] sm:$0xff]
        %v1870 = vld [vmem:[%s3 + $0x110] sm:$0xff]
        %v1871 = vld [vmem:[%s3 + $0x118] sm:$0xff]
        %v1872 = vld [vmem:[%s3 + $0x120] sm:$0xff]
        %v1873 = vld [vmem:[%s3 + $0x128] sm:$0xff]
        %v1874 = vld [vmem:[%s3 + $0x130] sm:$0xff]
        %v1875 = vld [vmem:[%s3 + $0x138] sm:$0xff]
        %v1876 = vld [vmem:[%s3 + $0x140] sm:$0xff]
        %v1877 = vld [vmem:[%s3 + $0x148] sm:$0xff]
        %v1878 = vld [vmem:[%s3 + $0x150] sm:$0xff]
        %v1879 = vld [vmem:[%s3 + $0x158] sm:$0xff]
        %v1880 = vld [vmem:[%s3 + $0x160] sm:$0xff]
        %v1881 = vld [vmem:[%s3 + $0x168] sm:$0xff]
        %v1882 = vld [vmem:[%s3 + $0x170] sm:$0xff]
        %v1883 = vld [vmem:[%s3 + $0x178] sm:$0xff]
        %v1884 = vld [vmem:[%s3 + $0x180] sm:$0xff]
        %v1885 = vld [vmem:[%s3 + $0x188] sm:$0xff]
        %v1886 = vld [vmem:[%s3 + $0x190] sm:$0xff]
        %v1887 = vld [vmem:[%s3 + $0x198] sm:$0xff]
        %v1888 = vld [vmem:[%s3 + $0x1a0] sm:$0xff]
        %v1889 = vld [vmem:[%s3 + $0x1a8] sm:$0xff]
        %v1890 = vld [vmem:[%s3 + $0x1b0] sm:$0xff]
        %v1891 = vld [vmem:[%s3 + $0x1b8] sm:$0xff]
        %v1892 = vld [vmem:[%s3 + $0x1c0] sm:$0xff]
        %v1893 = vld [vmem:[%s3 + $0x1c8] sm:$0xff]
        %v1894 = vld [vmem:[%s3 + $0x1d0] sm:$0xff]
        %v1895 = vld [vmem:[%s3 + $0x1d8] sm:$0xff]
        %v1896 = vld [vmem:[%s3 + $0x1e0] sm:$0xff]
        %v1897 = vld [vmem:[%s3 + $0x1e8] sm:$0xff]
        %v1898 = vld [vmem:[%s3 + $0x1f0] sm:$0xff]
        %v1899 = vld [vmem:[%s3 + $0x1f8] sm:$0xff]
        %v1900 = vld [vmem:[%s3 + $0x200] sm:$0xff]
        %v1901 = vld [vmem:[%s3 + $0x208] sm:$0xff]
        %v1902 = vld [vmem:[%s3 + $0x210] sm:$0xff]
        %v1903 = vld [vmem:[%s3 + $0x218] sm:$0xff]
        %v1904 = vld [vmem:[%s3 + $0x220] sm:$0xff]
        %v1905 = vld [vmem:[%s3 + $0x228] sm:$0xff]
        %v1906 = vld [vmem:[%s3 + $0x230] sm:$0xff]
        %v1907 = vld [vmem:[%s3 + $0x238] sm:$0xff]
        %v1908 = vld [vmem:[%s4] sm:$0x1]
        %v1910 = vlaneseq
        %v1911 = vshrl.u32 %v1910, 7
        %v1912 = vsub.s32 0, %v1911
        %v1913 = vrot.slane %v1908, %v1912
        %v1916 = vsel %vm679, %v1680, 0
        %v1919 = vsel %vm679, %v1685, 0
        %v1922 = vsel %vm679, %v1690, 0
        %v1925 = vsel %vm679, %v1695, 0
        %v1928 = vsel %vm679, %v1700, 0
        %v1931 = vsel %vm679, %v1705, 0
        %v1934 = vsel %vm679, %v1710, 0
        %v1937 = vsel %vm679, %v1715, 0
        %v1940 = vsel %vm679, %v1720, 0
        %v1943 = vsel %vm679, %v1725, 0
        %v1946 = vsel %vm679, %v1730, 0
        %v1949 = vsel %vm679, %v1735, 0
        %v1952 = vsel %vm679, %v1740, 0
        %v1955 = vsel %vm679, %v1745, 0
        %v1958 = vsel %vm679, %v1750, 0
        %v1961 = vsel %vm679, %v1755, 0
        %v1964 = vsel %vm679, %v1760, 0
        %v1967 = vsel %vm679, %v1765, 0
        %v1970 = vsel %vm679, %v1770, 0
        %v1973 = vsel %vm679, %v1775, 0
        %v1976 = vsel %vm679, %v1780, 0
        %v1979 = vsel %vm679, %v1785, 0
        %v1982 = vsel %vm679, %v1790, 0
        %v1985 = vsel %vm679, %v1795, 0
        %v1988 = vsel %vm679, %v1800, 0
        %v1991 = vsel %vm679, %v1805, 0
        %v1994 = vsel %vm679, %v1810, 0
        %v1997 = vsel %vm679, %v1815, 0
        %v2000 = vsel %vm679, %v1820, 0
        %v2003 = vsel %vm679, %v1825, 0
        %v2006 = vsel %vm679, %v1830, 0
        %v2009 = vsel %vm679, %v1835, 0
        %2011 = vmatprep.subr.mxu0 0.0
        %2012 = vmatpush1.msra.mxu0 %v1851
        %2013 = vmatprep.subr.mxu0 0.0
        %2014 = vmatpush1.msra.mxu0 %v1850
        %2015 = vmatprep.subr.mxu0 0.0
        %2016 = vmatpush1.msra.mxu0 %v1849
        %2017 = vmatprep.subr.mxu0 0.0
        %2018 = vmatpush1.msra.mxu0 %v1848
        %2019 = vmatprep.subr.mxu0 0.0
        %2020 = vmatpush1.msra.mxu0 %v1847
        %2021 = vmatprep.subr.mxu0 0.0
        %2022 = vmatpush1.msra.mxu0 %v1846
        %2023 = vmatprep.subr.mxu0 0.0
        %2024 = vmatpush1.msra.mxu0 %v1845
        %2025 = vmatprep.subr.mxu0 0.0
        %2026 = vmatpush1.msra.mxu0 %v1844
        %2027 = vmatprep.subr.mxu0 0.0
        %2028 = vmatpush1.msra.mxu0 %v1843
        %2029 = vmatprep.subr.mxu0 0.0
        %2030 = vmatpush1.msra.mxu0 %v1842
        %2031 = vmatprep.subr.mxu0 0.0
        %2032 = vmatpush1.msra.mxu0 %v1841
        %2033 = vmatprep.subr.mxu0 0.0
        %2034 = vmatpush1.msra.mxu0 %v1840
        %2035 = vmatprep.subr.mxu0 0.0
        %2036 = vmatpush1.msra.mxu0 %v1839
        %2037 = vmatprep.subr.mxu0 0.0
        %2038 = vmatpush1.msra.mxu0 %v1838
        %2039 = vmatprep.subr.mxu0 0.0
        %2040 = vmatpush1.msra.mxu0 %v1837
        %2041 = vmatprep.subr.mxu0 0.0
        %2042 = vmatpush1.msra.mxu0 %v1836
        %2043 = vmatprep.subr.mxu0 0.0
        %2044 = vmatpush2.msra.mxu0 %v1867
        %2045 = vmatprep.subr.mxu0 0.0
        %2046 = vmatpush2.msra.mxu0 %v1866
        %2047 = vmatprep.subr.mxu0 0.0
        %2048 = vmatpush2.msra.mxu0 %v1865
        %2049 = vmatprep.subr.mxu0 0.0
        %2050 = vmatpush2.msra.mxu0 %v1864
        %2051 = vmatprep.subr.mxu0 0.0
        %2052 = vmatpush2.msra.mxu0 %v1863
        %2053 = vmatprep.subr.mxu0 0.0
        %2054 = vmatpush2.msra.mxu0 %v1862
        %2055 = vmatprep.subr.mxu0 0.0
        %2056 = vmatpush2.msra.mxu0 %v1861
        %2057 = vmatprep.subr.mxu0 0.0
        %2058 = vmatpush2.msra.mxu0 %v1860
        %2059 = vmatprep.subr.mxu0 0.0
        %2060 = vmatpush2.msra.mxu0 %v1859
        %2061 = vmatprep.subr.mxu0 0.0
        %2062 = vmatpush2.msra.mxu0 %v1858
        %2063 = vmatprep.subr.mxu0 0.0
        %2064 = vmatpush2.msra.mxu0 %v1857
        %2065 = vmatprep.subr.mxu0 0.0
        %2066 = vmatpush2.msra.mxu0 %v1856
        %2067 = vmatprep.subr.mxu0 0.0
        %2068 = vmatpush2.msra.mxu0 %v1855
        %2069 = vmatprep.subr.mxu0 0.0
        %2070 = vmatpush2.msra.mxu0 %v1854
        %2071 = vmatprep.subr.mxu0 0.0
        %2072 = vmatpush2.msra.mxu0 %v1853
        %2073 = vmatprep.subr.mxu0 0.0
        %2074 = vmatpush2.msra.mxu0 %v1852
        %2075 = vmatprep.mubr.f32.mxu0 %v1677
        %2076 = vmatmul.mubr.f32.gmra.mxu0 %v1676
        %v2077 = vpop.f32.mrf.mxu0
        %v2078 = vadd.f32 %v1913, %v2077
        %v2079 = vpop.f32.mrf.mxu0
        %2080 = vmatprep.mubr.f32.mxu0 %v1682
        %2081 = vmatmul.mubr.f32.gmra.mxu0 %v1681
        %v2082 = vpop.f32.mrf.mxu0
        %v2083 = vadd.f32 %v1913, %v2082
        %v2084 = vpop.f32.mrf.mxu0
        %2085 = vmatprep.mubr.f32.mxu0 %v1687
        %2086 = vmatmul.mubr.f32.gmra.mxu0 %v1686
        %v2087 = vpop.f32.mrf.mxu0
        %v2088 = vadd.f32 %v1913, %v2087
        %v2089 = vpop.f32.mrf.mxu0
        %2090 = vmatprep.mubr.f32.mxu0 %v1692
        %2091 = vmatmul.mubr.f32.gmra.mxu0 %v1691
        %v2092 = vpop.f32.mrf.mxu0
        %v2093 = vadd.f32 %v1913, %v2092
        %v2094 = vpop.f32.mrf.mxu0
        %2095 = vmatprep.mubr.f32.mxu0 %v1697
        %2096 = vmatmul.mubr.f32.gmra.mxu0 %v1696
        %v2097 = vpop.f32.mrf.mxu0
        %v2098 = vadd.f32 %v1913, %v2097
        %v2099 = vpop.f32.mrf.mxu0
        %2100 = vmatprep.mubr.f32.mxu0 %v1702
        %2101 = vmatmul.mubr.f32.gmra.mxu0 %v1701
        %v2102 = vpop.f32.mrf.mxu0
        %v2103 = vadd.f32 %v1913, %v2102
        %v2104 = vpop.f32.mrf.mxu0
        %2105 = vmatprep.mubr.f32.mxu0 %v1707
        %2106 = vmatmul.mubr.f32.gmra.mxu0 %v1706
        %v2107 = vpop.f32.mrf.mxu0
        %v2108 = vadd.f32 %v1913, %v2107
        %v2109 = vpop.f32.mrf.mxu0
        %2110 = vmatprep.mubr.f32.mxu0 %v1712
        %2111 = vmatmul.mubr.f32.gmra.mxu0 %v1711
        %v2112 = vpop.f32.mrf.mxu0
        %v2113 = vadd.f32 %v1913, %v2112
        %v2114 = vpop.f32.mrf.mxu0
        %2115 = vmatprep.mubr.f32.mxu0 %v1717
        %2116 = vmatmul.mubr.f32.gmra.mxu0 %v1716
        %v2117 = vpop.f32.mrf.mxu0
        %v2118 = vadd.f32 %v1913, %v2117
        %v2119 = vpop.f32.mrf.mxu0
        %2120 = vmatprep.mubr.f32.mxu0 %v1722
        %2121 = vmatmul.mubr.f32.gmra.mxu0 %v1721
        %v2122 = vpop.f32.mrf.mxu0
        %v2123 = vadd.f32 %v1913, %v2122
        %v2124 = vpop.f32.mrf.mxu0
        %2125 = vmatprep.mubr.f32.mxu0 %v1727
        %2126 = vmatmul.mubr.f32.gmra.mxu0 %v1726
        %v2127 = vpop.f32.mrf.mxu0
        %v2128 = vadd.f32 %v1913, %v2127
        %v2129 = vpop.f32.mrf.mxu0
        %2130 = vmatprep.mubr.f32.mxu0 %v1732
        %2131 = vmatmul.mubr.f32.gmra.mxu0 %v1731
        %v2132 = vpop.f32.mrf.mxu0
        %v2133 = vadd.f32 %v1913, %v2132
        %v2134 = vpop.f32.mrf.mxu0
        %2135 = vmatprep.mubr.f32.mxu0 %v1737
        %2136 = vmatmul.mubr.f32.gmra.mxu0 %v1736
        %v2137 = vpop.f32.mrf.mxu0
        %v2138 = vadd.f32 %v1913, %v2137
        %v2139 = vpop.f32.mrf.mxu0
        %2140 = vmatprep.mubr.f32.mxu0 %v1742
        %2141 = vmatmul.mubr.f32.gmra.mxu0 %v1741
        %v2142 = vpop.f32.mrf.mxu0
        %v2143 = vadd.f32 %v1913, %v2142
        %v2144 = vpop.f32.mrf.mxu0
        %2145 = vmatprep.mubr.f32.mxu0 %v1747
        %2146 = vmatmul.mubr.f32.gmra.mxu0 %v1746
        %v2147 = vpop.f32.mrf.mxu0
        %v2148 = vadd.f32 %v1913, %v2147
        %v2149 = vpop.f32.mrf.mxu0
        %2150 = vmatprep.mubr.f32.mxu0 %v1752
        %2151 = vmatmul.mubr.f32.gmra.mxu0 %v1751
        %v2152 = vpop.f32.mrf.mxu0
        %v2153 = vadd.f32 %v1913, %v2152
        %v2154 = vpop.f32.mrf.mxu0
        %2155 = vmatprep.mubr.f32.mxu0 %v1757
        %2156 = vmatmul.mubr.f32.gmra.mxu0 %v1756
        %v2157 = vpop.f32.mrf.mxu0
        %v2158 = vadd.f32 %v1913, %v2157
        %v2159 = vpop.f32.mrf.mxu0
        %2160 = vmatprep.mubr.f32.mxu0 %v1762
        %2161 = vmatmul.mubr.f32.gmra.mxu0 %v1761
        %v2162 = vpop.f32.mrf.mxu0
        %v2163 = vadd.f32 %v1913, %v2162
        %v2164 = vpop.f32.mrf.mxu0
        %2165 = vmatprep.mubr.f32.mxu0 %v1767
        %2166 = vmatmul.mubr.f32.gmra.mxu0 %v1766
        %v2167 = vpop.f32.mrf.mxu0
        %v2168 = vadd.f32 %v1913, %v2167
        %v2169 = vpop.f32.mrf.mxu0
        %2170 = vmatprep.mubr.f32.mxu0 %v1772
        %2171 = vmatmul.mubr.f32.gmra.mxu0 %v1771
        %v2172 = vpop.f32.mrf.mxu0
        %v2173 = vadd.f32 %v1913, %v2172
        %v2174 = vpop.f32.mrf.mxu0
        %2175 = vmatprep.mubr.f32.mxu0 %v1777
        %2176 = vmatmul.mubr.f32.gmra.mxu0 %v1776
        %v2177 = vpop.f32.mrf.mxu0
        %v2178 = vadd.f32 %v1913, %v2177
        %v2179 = vpop.f32.mrf.mxu0
        %2180 = vmatprep.mubr.f32.mxu0 %v1782
        %2181 = vmatmul.mubr.f32.gmra.mxu0 %v1781
        %v2182 = vpop.f32.mrf.mxu0
        %v2183 = vadd.f32 %v1913, %v2182
        %v2184 = vpop.f32.mrf.mxu0
        %2185 = vmatprep.mubr.f32.mxu0 %v1787
        %2186 = vmatmul.mubr.f32.gmra.mxu0 %v1786
        %v2187 = vpop.f32.mrf.mxu0
        %v2188 = vadd.f32 %v1913, %v2187
        %v2189 = vpop.f32.mrf.mxu0
        %2190 = vmatprep.mubr.f32.mxu0 %v1792
        %2191 = vmatmul.mubr.f32.gmra.mxu0 %v1791
        %v2192 = vpop.f32.mrf.mxu0
        %v2193 = vadd.f32 %v1913, %v2192
        %v2194 = vpop.f32.mrf.mxu0
        %2195 = vmatprep.mubr.f32.mxu0 %v1797
        %2196 = vmatmul.mubr.f32.gmra.mxu0 %v1796
        %v2197 = vpop.f32.mrf.mxu0
        %v2198 = vadd.f32 %v1913, %v2197
        %v2199 = vpop.f32.mrf.mxu0
        %2200 = vmatprep.mubr.f32.mxu0 %v1802
        %2201 = vmatmul.mubr.f32.gmra.mxu0 %v1801
        %v2202 = vpop.f32.mrf.mxu0
        %v2203 = vadd.f32 %v1913, %v2202
        %v2204 = vpop.f32.mrf.mxu0
        %2205 = vmatprep.mubr.f32.mxu0 %v1807
        %2206 = vmatmul.mubr.f32.gmra.mxu0 %v1806
        %v2207 = vpop.f32.mrf.mxu0
        %v2208 = vadd.f32 %v1913, %v2207
        %v2209 = vpop.f32.mrf.mxu0
        %2210 = vmatprep.mubr.f32.mxu0 %v1812
        %2211 = vmatmul.mubr.f32.gmra.mxu0 %v1811
        %v2212 = vpop.f32.mrf.mxu0
        %v2213 = vadd.f32 %v1913, %v2212
        %v2214 = vpop.f32.mrf.mxu0
        %2215 = vmatprep.mubr.f32.mxu0 %v1817
        %2216 = vmatmul.mubr.f32.gmra.mxu0 %v1816
        %v2217 = vpop.f32.mrf.mxu0
        %v2218 = vadd.f32 %v1913, %v2217
        %v2219 = vpop.f32.mrf.mxu0
        %2220 = vmatprep.mubr.f32.mxu0 %v1822
        %2221 = vmatmul.mubr.f32.gmra.mxu0 %v1821
        %v2222 = vpop.f32.mrf.mxu0
        %v2223 = vadd.f32 %v1913, %v2222
        %v2224 = vpop.f32.mrf.mxu0
        %2225 = vmatprep.mubr.f32.mxu0 %v1827
        %2226 = vmatmul.mubr.f32.gmra.mxu0 %v1826
        %v2227 = vpop.f32.mrf.mxu0
        %v2228 = vadd.f32 %v1913, %v2227
        %v2229 = vpop.f32.mrf.mxu0
        %2230 = vmatprep.mubr.f32.mxu0 %v1832
        %2231 = vmatmul.mubr.f32.gmra.mxu0 %v1831
        %v2232 = vpop.f32.mrf.mxu0
        %v2233 = vadd.f32 %v1913, %v2232
        %v2234 = vpop.f32.mrf.mxu0
        %2235 = vdwg.mxu0
        %2236 = vmatprep.subr.mxu0 0.0
        %2237 = vmatpush1.msra.mxu0 %v1883
        %2238 = vmatprep.subr.mxu0 0.0
        %2239 = vmatpush1.msra.mxu0 %v1882
        %2240 = vmatprep.subr.mxu0 0.0
        %2241 = vmatpush1.msra.mxu0 %v1881
        %2242 = vmatprep.subr.mxu0 0.0
        %2243 = vmatpush1.msra.mxu0 %v1880
        %2244 = vmatprep.subr.mxu0 0.0
        %2245 = vmatpush1.msra.mxu0 %v1879
        %2246 = vmatprep.subr.mxu0 0.0
        %2247 = vmatpush1.msra.mxu0 %v1878
        %2248 = vmatprep.subr.mxu0 0.0
        %2249 = vmatpush1.msra.mxu0 %v1877
        %2250 = vmatprep.subr.mxu0 0.0
        %2251 = vmatpush1.msra.mxu0 %v1876
        %2252 = vmatprep.subr.mxu0 0.0
        %2253 = vmatpush1.msra.mxu0 %v1875
        %2254 = vmatprep.subr.mxu0 0.0
        %2255 = vmatpush1.msra.mxu0 %v1874
        %2256 = vmatprep.subr.mxu0 0.0
        %2257 = vmatpush1.msra.mxu0 %v1873
        %2258 = vmatprep.subr.mxu0 0.0
        %2259 = vmatpush1.msra.mxu0 %v1872
        %2260 = vmatprep.subr.mxu0 0.0
        %2261 = vmatpush1.msra.mxu0 %v1871
        %2262 = vmatprep.subr.mxu0 0.0
        %2263 = vmatpush1.msra.mxu0 %v1870
        %2264 = vmatprep.subr.mxu0 0.0
        %2265 = vmatpush1.msra.mxu0 %v1869
        %2266 = vmatprep.subr.mxu0 0.0
        %2267 = vmatpush1.msra.mxu0 %v1868
        %2268 = vmatprep.subr.mxu0 0.0
        %2269 = vmatpush2.msra.mxu0 %v1899
        %2270 = vmatprep.subr.mxu0 0.0
        %2271 = vmatpush2.msra.mxu0 %v1898
        %2272 = vmatprep.subr.mxu0 0.0
        %2273 = vmatpush2.msra.mxu0 %v1897
        %2274 = vmatprep.subr.mxu0 0.0
        %2275 = vmatpush2.msra.mxu0 %v1896
        %2276 = vmatprep.subr.mxu0 0.0
        %2277 = vmatpush2.msra.mxu0 %v1895
        %2278 = vmatprep.subr.mxu0 0.0
        %2279 = vmatpush2.msra.mxu0 %v1894
        %2280 = vmatprep.subr.mxu0 0.0
        %2281 = vmatpush2.msra.mxu0 %v1893
        %2282 = vmatprep.subr.mxu0 0.0
        %2283 = vmatpush2.msra.mxu0 %v1892
        %2284 = vmatprep.subr.mxu0 0.0
        %2285 = vmatpush2.msra.mxu0 %v1891
        %2286 = vmatprep.subr.mxu0 0.0
        %2287 = vmatpush2.msra.mxu0 %v1890
        %2288 = vmatprep.subr.mxu0 0.0
        %2289 = vmatpush2.msra.mxu0 %v1889
        %2290 = vmatprep.subr.mxu0 0.0
        %2291 = vmatpush2.msra.mxu0 %v1888
        %2292 = vmatprep.subr.mxu0 0.0
        %2293 = vmatpush2.msra.mxu0 %v1887
        %2294 = vmatprep.subr.mxu0 0.0
        %2295 = vmatpush2.msra.mxu0 %v1886
        %2296 = vmatprep.subr.mxu0 0.0
        %2297 = vmatpush2.msra.mxu0 %v1885
        %2298 = vmatprep.subr.mxu0 0.0
        %2299 = vmatpush2.msra.mxu0 %v1884
        %2300 = vmatprep.mubr.f32.mxu0 %v1679
        %2301 = vmatmul.mubr.f32.gmra.mxu0 %v1678
        %v2302 = vpop.f32.mrf.mxu0
        %v2303 = vadd.f32 %v2078, %v2302
        %v2304 = vpop.f32.mrf.mxu0
        %2305 = vmatprep.mubr.f32.mxu0 %v1684
        %2306 = vmatmul.mubr.f32.gmra.mxu0 %v1683
        %v2307 = vpop.f32.mrf.mxu0
        %v2308 = vadd.f32 %v2083, %v2307
        %v2309 = vpop.f32.mrf.mxu0
        %2310 = vmatprep.mubr.f32.mxu0 %v1689
        %2311 = vmatmul.mubr.f32.gmra.mxu0 %v1688
        %v2312 = vpop.f32.mrf.mxu0
        %v2313 = vadd.f32 %v2088, %v2312
        %v2314 = vpop.f32.mrf.mxu0
        %2315 = vmatprep.mubr.f32.mxu0 %v1694
        %2316 = vmatmul.mubr.f32.gmra.mxu0 %v1693
        %v2317 = vpop.f32.mrf.mxu0
        %v2318 = vadd.f32 %v2093, %v2317
        %v2319 = vpop.f32.mrf.mxu0
        %2320 = vmatprep.mubr.f32.mxu0 %v1699
        %2321 = vmatmul.mubr.f32.gmra.mxu0 %v1698
        %v2322 = vpop.f32.mrf.mxu0
        %v2323 = vadd.f32 %v2098, %v2322
        %v2324 = vpop.f32.mrf.mxu0
        %2325 = vmatprep.mubr.f32.mxu0 %v1704
        %2326 = vmatmul.mubr.f32.gmra.mxu0 %v1703
        %v2327 = vpop.f32.mrf.mxu0
        %v2328 = vadd.f32 %v2103, %v2327
        %v2329 = vpop.f32.mrf.mxu0
        %2330 = vmatprep.mubr.f32.mxu0 %v1709
        %2331 = vmatmul.mubr.f32.gmra.mxu0 %v1708
        %v2332 = vpop.f32.mrf.mxu0
        %v2333 = vadd.f32 %v2108, %v2332
        %v2334 = vpop.f32.mrf.mxu0
        %2335 = vmatprep.mubr.f32.mxu0 %v1714
        %2336 = vmatmul.mubr.f32.gmra.mxu0 %v1713
        %v2337 = vpop.f32.mrf.mxu0
        %v2338 = vadd.f32 %v2113, %v2337
        %v2339 = vpop.f32.mrf.mxu0
        %2340 = vmatprep.mubr.f32.mxu0 %v1719
        %2341 = vmatmul.mubr.f32.gmra.mxu0 %v1718
        %v2342 = vpop.f32.mrf.mxu0
        %v2343 = vadd.f32 %v2118, %v2342
        %v2344 = vpop.f32.mrf.mxu0
        %2345 = vmatprep.mubr.f32.mxu0 %v1724
        %2346 = vmatmul.mubr.f32.gmra.mxu0 %v1723
        %v2347 = vpop.f32.mrf.mxu0
        %v2348 = vadd.f32 %v2123, %v2347
        %v2349 = vpop.f32.mrf.mxu0
        %2350 = vmatprep.mubr.f32.mxu0 %v1729
        %2351 = vmatmul.mubr.f32.gmra.mxu0 %v1728
        %v2352 = vpop.f32.mrf.mxu0
        %v2353 = vadd.f32 %v2128, %v2352
        %v2354 = vpop.f32.mrf.mxu0
        %2355 = vmatprep.mubr.f32.mxu0 %v1734
        %2356 = vmatmul.mubr.f32.gmra.mxu0 %v1733
        %v2357 = vpop.f32.mrf.mxu0
        %v2358 = vadd.f32 %v2133, %v2357
        %v2359 = vpop.f32.mrf.mxu0
        %2360 = vmatprep.mubr.f32.mxu0 %v1739
        %2361 = vmatmul.mubr.f32.gmra.mxu0 %v1738
        %v2362 = vpop.f32.mrf.mxu0
        %v2363 = vadd.f32 %v2138, %v2362
        %v2364 = vpop.f32.mrf.mxu0
        %2365 = vmatprep.mubr.f32.mxu0 %v1744
        %2366 = vmatmul.mubr.f32.gmra.mxu0 %v1743
        %v2367 = vpop.f32.mrf.mxu0
        %v2368 = vadd.f32 %v2143, %v2367
        %v2369 = vpop.f32.mrf.mxu0
        %2370 = vmatprep.mubr.f32.mxu0 %v1749
        %2371 = vmatmul.mubr.f32.gmra.mxu0 %v1748
        %v2372 = vpop.f32.mrf.mxu0
        %v2373 = vadd.f32 %v2148, %v2372
        %v2374 = vpop.f32.mrf.mxu0
        %2375 = vmatprep.mubr.f32.mxu0 %v1754
        %2376 = vmatmul.mubr.f32.gmra.mxu0 %v1753
        %v2377 = vpop.f32.mrf.mxu0
        %v2378 = vadd.f32 %v2153, %v2377
        %v2379 = vpop.f32.mrf.mxu0
        %2380 = vmatprep.mubr.f32.mxu0 %v1759
        %2381 = vmatmul.mubr.f32.gmra.mxu0 %v1758
        %v2382 = vpop.f32.mrf.mxu0
        %v2383 = vadd.f32 %v2158, %v2382
        %v2384 = vpop.f32.mrf.mxu0
        %2385 = vmatprep.mubr.f32.mxu0 %v1764
        %2386 = vmatmul.mubr.f32.gmra.mxu0 %v1763
        %v2387 = vpop.f32.mrf.mxu0
        %v2388 = vadd.f32 %v2163, %v2387
        %v2389 = vpop.f32.mrf.mxu0
        %2390 = vmatprep.mubr.f32.mxu0 %v1769
        %2391 = vmatmul.mubr.f32.gmra.mxu0 %v1768
        %v2392 = vpop.f32.mrf.mxu0
        %v2393 = vadd.f32 %v2168, %v2392
        %v2394 = vpop.f32.mrf.mxu0
        %2395 = vmatprep.mubr.f32.mxu0 %v1774
        %2396 = vmatmul.mubr.f32.gmra.mxu0 %v1773
        %v2397 = vpop.f32.mrf.mxu0
        %v2398 = vadd.f32 %v2173, %v2397
        %v2399 = vpop.f32.mrf.mxu0
        %2400 = vmatprep.mubr.f32.mxu0 %v1779
        %2401 = vmatmul.mubr.f32.gmra.mxu0 %v1778
        %v2402 = vpop.f32.mrf.mxu0
        %v2403 = vadd.f32 %v2178, %v2402
        %v2404 = vpop.f32.mrf.mxu0
        %2405 = vmatprep.mubr.f32.mxu0 %v1784
        %2406 = vmatmul.mubr.f32.gmra.mxu0 %v1783
        %v2407 = vpop.f32.mrf.mxu0
        %v2408 = vadd.f32 %v2183, %v2407
        %v2409 = vpop.f32.mrf.mxu0
        %2410 = vmatprep.mubr.f32.mxu0 %v1789
        %2411 = vmatmul.mubr.f32.gmra.mxu0 %v1788
        %v2412 = vpop.f32.mrf.mxu0
        %v2413 = vadd.f32 %v2188, %v2412
        %v2414 = vpop.f32.mrf.mxu0
        %2415 = vmatprep.mubr.f32.mxu0 %v1794
        %2416 = vmatmul.mubr.f32.gmra.mxu0 %v1793
        %v2417 = vpop.f32.mrf.mxu0
        %v2418 = vadd.f32 %v2193, %v2417
        %v2419 = vpop.f32.mrf.mxu0
        %2420 = vmatprep.mubr.f32.mxu0 %v1799
        %2421 = vmatmul.mubr.f32.gmra.mxu0 %v1798
        %v2422 = vpop.f32.mrf.mxu0
        %v2423 = vadd.f32 %v2198, %v2422
        %v2424 = vpop.f32.mrf.mxu0
        %2425 = vmatprep.mubr.f32.mxu0 %v1804
        %2426 = vmatmul.mubr.f32.gmra.mxu0 %v1803
        %v2427 = vpop.f32.mrf.mxu0
        %v2428 = vadd.f32 %v2203, %v2427
        %v2429 = vpop.f32.mrf.mxu0
        %2430 = vmatprep.mubr.f32.mxu0 %v1809
        %2431 = vmatmul.mubr.f32.gmra.mxu0 %v1808
        %v2432 = vpop.f32.mrf.mxu0
        %v2433 = vadd.f32 %v2208, %v2432
        %v2434 = vpop.f32.mrf.mxu0
        %2435 = vmatprep.mubr.f32.mxu0 %v1814
        %2436 = vmatmul.mubr.f32.gmra.mxu0 %v1813
        %v2437 = vpop.f32.mrf.mxu0
        %v2438 = vadd.f32 %v2213, %v2437
        %v2439 = vpop.f32.mrf.mxu0
        %2440 = vmatprep.mubr.f32.mxu0 %v1819
        %2441 = vmatmul.mubr.f32.gmra.mxu0 %v1818
        %v2442 = vpop.f32.mrf.mxu0
        %v2443 = vadd.f32 %v2218, %v2442
        %v2444 = vpop.f32.mrf.mxu0
        %2445 = vmatprep.mubr.f32.mxu0 %v1824
        %2446 = vmatmul.mubr.f32.gmra.mxu0 %v1823
        %v2447 = vpop.f32.mrf.mxu0
        %v2448 = vadd.f32 %v2223, %v2447
        %v2449 = vpop.f32.mrf.mxu0
        %2450 = vmatprep.mubr.f32.mxu0 %v1829
        %2451 = vmatmul.mubr.f32.gmra.mxu0 %v1828
        %v2452 = vpop.f32.mrf.mxu0
        %v2453 = vadd.f32 %v2228, %v2452
        %v2454 = vpop.f32.mrf.mxu0
        %2455 = vmatprep.mubr.f32.mxu0 %v1834
        %2456 = vmatmul.mubr.f32.gmra.mxu0 %v1833
        %v2457 = vpop.f32.mrf.mxu0
        %v2458 = vadd.f32 %v2233, %v2457
        %v2459 = vpop.f32.mrf.mxu0
        %2460 = vdwg.mxu0
        %2461 = vmatprep.subr.mxu0 0.0
        %2462 = vmatpush1.msra.mxu0 0.0
        %2463 = vmatprep.subr.mxu0 0.0
        %2464 = vmatpush1.msra.mxu0 0.0
        %2465 = vmatprep.subr.mxu0 0.0
        %2466 = vmatpush1.msra.mxu0 0.0
        %2467 = vmatprep.subr.mxu0 0.0
        %2468 = vmatpush1.msra.mxu0 0.0
        %2469 = vmatprep.subr.mxu0 0.0
        %2470 = vmatpush1.msra.mxu0 0.0
        %2471 = vmatprep.subr.mxu0 0.0
        %2472 = vmatpush1.msra.mxu0 0.0
        %2473 = vmatprep.subr.mxu0 0.0
        %2474 = vmatpush1.msra.mxu0 0.0
        %2475 = vmatprep.subr.mxu0 0.0
        %2476 = vmatpush1.msra.mxu0 0.0
        %2477 = vmatprep.subr.mxu0 0.0
        %2478 = vmatpush1.msra.mxu0 %v1907
        %2479 = vmatprep.subr.mxu0 0.0
        %2480 = vmatpush1.msra.mxu0 %v1906
        %2481 = vmatprep.subr.mxu0 0.0
        %2482 = vmatpush1.msra.mxu0 %v1905
        %2483 = vmatprep.subr.mxu0 0.0
        %2484 = vmatpush1.msra.mxu0 %v1904
        %2485 = vmatprep.subr.mxu0 0.0
        %2486 = vmatpush1.msra.mxu0 %v1903
        %2487 = vmatprep.subr.mxu0 0.0
        %2488 = vmatpush1.msra.mxu0 %v1902
        %2489 = vmatprep.subr.mxu0 0.0
        %2490 = vmatpush1.msra.mxu0 %v1901
        %2491 = vmatprep.subr.mxu0 0.0
        %2492 = vmatpush1.msra.mxu0 %v1900
        %2493 = vmatprep.subr.mxu0 0.0
        %2494 = vmatpush2.msra.mxu0 0.0
        %2495 = vmatprep.subr.mxu0 0.0
        %2496 = vmatpush2.msra.mxu0 0.0
        %2497 = vmatprep.subr.mxu0 0.0
        %2498 = vmatpush2.msra.mxu0 0.0
        %2499 = vmatprep.subr.mxu0 0.0
        %2500 = vmatpush2.msra.mxu0 0.0
        %2501 = vmatprep.subr.mxu0 0.0
        %2502 = vmatpush2.msra.mxu0 0.0
        %2503 = vmatprep.subr.mxu0 0.0
        %2504 = vmatpush2.msra.mxu0 0.0
        %2505 = vmatprep.subr.mxu0 0.0
        %2506 = vmatpush2.msra.mxu0 0.0
        %2507 = vmatprep.subr.mxu0 0.0
        %2508 = vmatpush2.msra.mxu0 0.0
        %2509 = vmatprep.subr.mxu0 0.0
        %2510 = vmatpush2.msra.mxu0 0.0
        %2511 = vmatprep.subr.mxu0 0.0
        %2512 = vmatpush2.msra.mxu0 0.0
        %2513 = vmatprep.subr.mxu0 0.0
        %2514 = vmatpush2.msra.mxu0 0.0
        %2515 = vmatprep.subr.mxu0 0.0
        %2516 = vmatpush2.msra.mxu0 0.0
        %2517 = vmatprep.subr.mxu0 0.0
        %2518 = vmatpush2.msra.mxu0 0.0
        %2519 = vmatprep.subr.mxu0 0.0
        %2520 = vmatpush2.msra.mxu0 0.0
        %2521 = vmatprep.subr.mxu0 0.0
        %2522 = vmatpush2.msra.mxu0 0.0
        %2523 = vmatprep.subr.mxu0 0.0
        %2524 = vmatpush2.msra.mxu0 0.0
        %2525 = vmatprep.mubr.f32.mxu0 0.0
        %2526 = vmatmul.mubr.f32.gmra.mxu0 %v1916
        %v2527 = vpop.f32.mrf.mxu0
        %v2528 = vadd.f32 %v2303, %v2527
        %v2529 = vpop.f32.mrf.mxu0
        %2530 = vmatprep.mubr.f32.mxu0 0.0
        %2531 = vmatmul.mubr.f32.gmra.mxu0 %v1919
        %v2532 = vpop.f32.mrf.mxu0
        %v2533 = vadd.f32 %v2308, %v2532
        %v2534 = vpop.f32.mrf.mxu0
        %2535 = vmatprep.mubr.f32.mxu0 0.0
        %2536 = vmatmul.mubr.f32.gmra.mxu0 %v1922
        %v2537 = vpop.f32.mrf.mxu0
        %v2538 = vadd.f32 %v2313, %v2537
        %v2539 = vpop.f32.mrf.mxu0
        %2540 = vmatprep.mubr.f32.mxu0 0.0
        %2541 = vmatmul.mubr.f32.gmra.mxu0 %v1925
        %v2542 = vpop.f32.mrf.mxu0
        %v2543 = vadd.f32 %v2318, %v2542
        %v2544 = vpop.f32.mrf.mxu0
        %2545 = vmatprep.mubr.f32.mxu0 0.0
        %2546 = vmatmul.mubr.f32.gmra.mxu0 %v1928
        %v2547 = vpop.f32.mrf.mxu0
        %v2548 = vadd.f32 %v2323, %v2547
        %v2549 = vpop.f32.mrf.mxu0
        %2550 = vmatprep.mubr.f32.mxu0 0.0
        %2551 = vmatmul.mubr.f32.gmra.mxu0 %v1931
        %v2552 = vpop.f32.mrf.mxu0
        %v2553 = vadd.f32 %v2328, %v2552
        %v2554 = vpop.f32.mrf.mxu0
        %2555 = vmatprep.mubr.f32.mxu0 0.0
        %2556 = vmatmul.mubr.f32.gmra.mxu0 %v1934
        %v2557 = vpop.f32.mrf.mxu0
        %v2558 = vadd.f32 %v2333, %v2557
        %v2559 = vpop.f32.mrf.mxu0
        %2560 = vmatprep.mubr.f32.mxu0 0.0
        %2561 = vmatmul.mubr.f32.gmra.mxu0 %v1937
        %v2562 = vpop.f32.mrf.mxu0
        %v2563 = vadd.f32 %v2338, %v2562
        %v2564 = vpop.f32.mrf.mxu0
        %2565 = vmatprep.mubr.f32.mxu0 0.0
        %2566 = vmatmul.mubr.f32.gmra.mxu0 %v1940
        %v2567 = vpop.f32.mrf.mxu0
        %v2568 = vadd.f32 %v2343, %v2567
        %v2569 = vpop.f32.mrf.mxu0
        %2570 = vmatprep.mubr.f32.mxu0 0.0
        %2571 = vmatmul.mubr.f32.gmra.mxu0 %v1943
        %v2572 = vpop.f32.mrf.mxu0
        %v2573 = vadd.f32 %v2348, %v2572
        %v2574 = vpop.f32.mrf.mxu0
        %2575 = vmatprep.mubr.f32.mxu0 0.0
        %2576 = vmatmul.mubr.f32.gmra.mxu0 %v1946
        %v2577 = vpop.f32.mrf.mxu0
        %v2578 = vadd.f32 %v2353, %v2577
        %v2579 = vpop.f32.mrf.mxu0
        %2580 = vmatprep.mubr.f32.mxu0 0.0
        %2581 = vmatmul.mubr.f32.gmra.mxu0 %v1949
        %v2582 = vpop.f32.mrf.mxu0
        %v2583 = vadd.f32 %v2358, %v2582
        %v2584 = vpop.f32.mrf.mxu0
        %2585 = vmatprep.mubr.f32.mxu0 0.0
        %2586 = vmatmul.mubr.f32.gmra.mxu0 %v1952
        %v2587 = vpop.f32.mrf.mxu0
        %v2588 = vadd.f32 %v2363, %v2587
        %v2589 = vpop.f32.mrf.mxu0
        %2590 = vmatprep.mubr.f32.mxu0 0.0
        %2591 = vmatmul.mubr.f32.gmra.mxu0 %v1955
        %v2592 = vpop.f32.mrf.mxu0
        %v2593 = vadd.f32 %v2368, %v2592
        %v2594 = vpop.f32.mrf.mxu0
        %2595 = vmatprep.mubr.f32.mxu0 0.0
        %2596 = vmatmul.mubr.f32.gmra.mxu0 %v1958
        %v2597 = vpop.f32.mrf.mxu0
        %v2598 = vadd.f32 %v2373, %v2597
        %v2599 = vpop.f32.mrf.mxu0
        %2600 = vmatprep.mubr.f32.mxu0 0.0
        %2601 = vmatmul.mubr.f32.gmra.mxu0 %v1961
        %v2602 = vpop.f32.mrf.mxu0
        %v2603 = vadd.f32 %v2378, %v2602
        %v2604 = vpop.f32.mrf.mxu0
        %2605 = vmatprep.mubr.f32.mxu0 0.0
        %2606 = vmatmul.mubr.f32.gmra.mxu0 %v1964
        %v2607 = vpop.f32.mrf.mxu0
        %v2608 = vadd.f32 %v2383, %v2607
        %v2609 = vpop.f32.mrf.mxu0
        %2610 = vmatprep.mubr.f32.mxu0 0.0
        %2611 = vmatmul.mubr.f32.gmra.mxu0 %v1967
        %v2612 = vpop.f32.mrf.mxu0
        %v2613 = vadd.f32 %v2388, %v2612
        %v2614 = vpop.f32.mrf.mxu0
        %2615 = vmatprep.mubr.f32.mxu0 0.0
        %2616 = vmatmul.mubr.f32.gmra.mxu0 %v1970
        %v2617 = vpop.f32.mrf.mxu0
        %v2618 = vadd.f32 %v2393, %v2617
        %v2619 = vpop.f32.mrf.mxu0
        %2620 = vmatprep.mubr.f32.mxu0 0.0
        %2621 = vmatmul.mubr.f32.gmra.mxu0 %v1973
        %v2622 = vpop.f32.mrf.mxu0
        %v2623 = vadd.f32 %v2398, %v2622
        %v2624 = vpop.f32.mrf.mxu0
        %2625 = vmatprep.mubr.f32.mxu0 0.0
        %2626 = vmatmul.mubr.f32.gmra.mxu0 %v1976
        %v2627 = vpop.f32.mrf.mxu0
        %v2628 = vadd.f32 %v2403, %v2627
        %v2629 = vpop.f32.mrf.mxu0
        %2630 = vmatprep.mubr.f32.mxu0 0.0
        %2631 = vmatmul.mubr.f32.gmra.mxu0 %v1979
        %v2632 = vpop.f32.mrf.mxu0
        %v2633 = vadd.f32 %v2408, %v2632
        %v2634 = vpop.f32.mrf.mxu0
        %2635 = vmatprep.mubr.f32.mxu0 0.0
        %2636 = vmatmul.mubr.f32.gmra.mxu0 %v1982
        %v2637 = vpop.f32.mrf.mxu0
        %v2638 = vadd.f32 %v2413, %v2637
        %v2639 = vpop.f32.mrf.mxu0
        %2640 = vmatprep.mubr.f32.mxu0 0.0
        %2641 = vmatmul.mubr.f32.gmra.mxu0 %v1985
        %v2642 = vpop.f32.mrf.mxu0
        %v2643 = vadd.f32 %v2418, %v2642
        %v2644 = vpop.f32.mrf.mxu0
        %2645 = vmatprep.mubr.f32.mxu0 0.0
        %2646 = vmatmul.mubr.f32.gmra.mxu0 %v1988
        %v2647 = vpop.f32.mrf.mxu0
        %v2648 = vadd.f32 %v2423, %v2647
        %v2649 = vpop.f32.mrf.mxu0
        %2650 = vmatprep.mubr.f32.mxu0 0.0
        %2651 = vmatmul.mubr.f32.gmra.mxu0 %v1991
        %v2652 = vpop.f32.mrf.mxu0
        %v2653 = vadd.f32 %v2428, %v2652
        %v2654 = vpop.f32.mrf.mxu0
        %2655 = vmatprep.mubr.f32.mxu0 0.0
        %2656 = vmatmul.mubr.f32.gmra.mxu0 %v1994
        %v2657 = vpop.f32.mrf.mxu0
        %v2658 = vadd.f32 %v2433, %v2657
        %v2659 = vpop.f32.mrf.mxu0
        %2660 = vmatprep.mubr.f32.mxu0 0.0
        %2661 = vmatmul.mubr.f32.gmra.mxu0 %v1997
        %v2662 = vpop.f32.mrf.mxu0
        %v2663 = vadd.f32 %v2438, %v2662
        %v2664 = vpop.f32.mrf.mxu0
        %2665 = vmatprep.mubr.f32.mxu0 0.0
        %2666 = vmatmul.mubr.f32.gmra.mxu0 %v2000
        %v2667 = vpop.f32.mrf.mxu0
        %v2668 = vadd.f32 %v2443, %v2667
        %v2669 = vpop.f32.mrf.mxu0
        %2670 = vmatprep.mubr.f32.mxu0 0.0
        %2671 = vmatmul.mubr.f32.gmra.mxu0 %v2003
        %v2672 = vpop.f32.mrf.mxu0
        %v2673 = vadd.f32 %v2448, %v2672
        %v2674 = vpop.f32.mrf.mxu0
        %2675 = vmatprep.mubr.f32.mxu0 0.0
        %2676 = vmatmul.mubr.f32.gmra.mxu0 %v2006
        %v2677 = vpop.f32.mrf.mxu0
        %v2678 = vadd.f32 %v2453, %v2677
        %v2679 = vpop.f32.mrf.mxu0
        %2680 = vmatprep.mubr.f32.mxu0 0.0
        %2681 = vmatmul.mubr.f32.gmra.mxu0 %v2009
        %v2682 = vpop.f32.mrf.mxu0
        %v2683 = vadd.f32 %v2458, %v2682
        %v2684 = vpop.f32.mrf.mxu0
        %2685 = vdwg.mxu0
        %v2686 = vmax.f32 %v2528, 0.0
        %v2687 = vmax.f32 %v2533, 0.0
        %v2688 = vmax.f32 %v2538, 0.0
        %v2689 = vmax.f32 %v2543, 0.0
        %v2690 = vmax.f32 %v2548, 0.0
        %v2691 = vmax.f32 %v2553, 0.0
        %v2692 = vmax.f32 %v2558, 0.0
        %v2693 = vmax.f32 %v2563, 0.0
        %v2694 = vmax.f32 %v2568, 0.0
        %v2695 = vmax.f32 %v2573, 0.0
        %v2696 = vmax.f32 %v2578, 0.0
        %v2697 = vmax.f32 %v2583, 0.0
        %v2698 = vmax.f32 %v2588, 0.0
        %v2699 = vmax.f32 %v2593, 0.0
        %v2700 = vmax.f32 %v2598, 0.0
        %v2701 = vmax.f32 %v2603, 0.0
        %v2702 = vmax.f32 %v2608, 0.0
        %v2703 = vmax.f32 %v2613, 0.0
        %v2704 = vmax.f32 %v2618, 0.0
        %v2705 = vmax.f32 %v2623, 0.0
        %v2706 = vmax.f32 %v2628, 0.0
        %v2707 = vmax.f32 %v2633, 0.0
        %v2708 = vmax.f32 %v2638, 0.0
        %v2709 = vmax.f32 %v2643, 0.0
        %v2710 = vmax.f32 %v2648, 0.0
        %v2711 = vmax.f32 %v2653, 0.0
        %v2712 = vmax.f32 %v2658, 0.0
        %v2713 = vmax.f32 %v2663, 0.0
        %v2714 = vmax.f32 %v2668, 0.0
        %v2715 = vmax.f32 %v2673, 0.0
        %v2716 = vmax.f32 %v2678, 0.0
        %v2717 = vmax.f32 %v2683, 0.0
        %v2718 = vld [vmem:[%s5] sm:$0xff]
        %v2719 = vld [vmem:[%s5 + $0x8] sm:$0xff]
        %v2720 = vld [vmem:[%s5 + $0x10] sm:$0xff]
        %v2721 = vld [vmem:[%s5 + $0x18] sm:$0xff]
        %v2722 = vld [vmem:[%s5 + $0x20] sm:$0xff]
        %v2723 = vld [vmem:[%s5 + $0x28] sm:$0xff]
        %v2724 = vld [vmem:[%s5 + $0x30] sm:$0xff]
        %v2725 = vld [vmem:[%s5 + $0x38] sm:$0xff]
        %v2726 = vld [vmem:[%s6] sm:$0x1]
        %v2728 = vlaneseq
        %v2729 = vshrl.u32 %v2728, 7
        %v2730 = vsub.s32 0, %v2729
        %v2731 = vrot.slane %v2726, %v2730
        %v2734 = vsel %vm679, %v2686, 0
        %v2737 = vsel %vm679, %v2687, 0
        %v2740 = vsel %vm679, %v2688, 0
        %v2743 = vsel %vm679, %v2689, 0
        %v2746 = vsel %vm679, %v2690, 0
        %v2749 = vsel %vm679, %v2691, 0
        %v2752 = vsel %vm679, %v2692, 0
        %v2755 = vsel %vm679, %v2693, 0
        %v2758 = vsel %vm679, %v2694, 0
        %v2761 = vsel %vm679, %v2695, 0
        %v2764 = vsel %vm679, %v2696, 0
        %v2767 = vsel %vm679, %v2697, 0
        %v2770 = vsel %vm679, %v2698, 0
        %v2773 = vsel %vm679, %v2699, 0
        %v2776 = vsel %vm679, %v2700, 0
        %v2779 = vsel %vm679, %v2701, 0
        %v2782 = vsel %vm679, %v2702, 0
        %v2785 = vsel %vm679, %v2703, 0
        %v2788 = vsel %vm679, %v2704, 0
        %v2791 = vsel %vm679, %v2705, 0
        %v2794 = vsel %vm679, %v2706, 0
        %v2797 = vsel %vm679, %v2707, 0
        %v2800 = vsel %vm679, %v2708, 0
        %v2803 = vsel %vm679, %v2709, 0
        %v2806 = vsel %vm679, %v2710, 0
        %v2809 = vsel %vm679, %v2711, 0
        %v2812 = vsel %vm679, %v2712, 0
        %v2815 = vsel %vm679, %v2713, 0
        %v2818 = vsel %vm679, %v2714, 0
        %v2821 = vsel %vm679, %v2715, 0
        %v2824 = vsel %vm679, %v2716, 0
        %v2827 = vsel %vm679, %v2717, 0
        %2829 = vmatprep.subr.mxu0 0.0
        %2830 = vmatpush1.msra.mxu0 0.0
        %2831 = vmatprep.subr.mxu0 0.0
        %2832 = vmatpush1.msra.mxu0 0.0
        %2833 = vmatprep.subr.mxu0 0.0
        %2834 = vmatpush1.msra.mxu0 0.0
        %2835 = vmatprep.subr.mxu0 0.0
        %2836 = vmatpush1.msra.mxu0 0.0
        %2837 = vmatprep.subr.mxu0 0.0
        %2838 = vmatpush1.msra.mxu0 0.0
        %2839 = vmatprep.subr.mxu0 0.0
        %2840 = vmatpush1.msra.mxu0 0.0
        %2841 = vmatprep.subr.mxu0 0.0
        %2842 = vmatpush1.msra.mxu0 0.0
        %2843 = vmatprep.subr.mxu0 0.0
        %2844 = vmatpush1.msra.mxu0 0.0
        %2845 = vmatprep.subr.mxu0 0.0
        %2846 = vmatpush1.msra.mxu0 %v2725
        %2847 = vmatprep.subr.mxu0 0.0
        %2848 = vmatpush1.msra.mxu0 %v2724
        %2849 = vmatprep.subr.mxu0 0.0
        %2850 = vmatpush1.msra.mxu0 %v2723
        %2851 = vmatprep.subr.mxu0 0.0
        %2852 = vmatpush1.msra.mxu0 %v2722
        %2853 = vmatprep.subr.mxu0 0.0
        %2854 = vmatpush1.msra.mxu0 %v2721
        %2855 = vmatprep.subr.mxu0 0.0
        %2856 = vmatpush1.msra.mxu0 %v2720
        %2857 = vmatprep.subr.mxu0 0.0
        %2858 = vmatpush1.msra.mxu0 %v2719
        %2859 = vmatprep.subr.mxu0 0.0
        %2860 = vmatpush1.msra.mxu0 %v2718
        %2861 = vmatprep.subr.mxu0 0.0
        %2862 = vmatpush2.msra.mxu0 0.0
        %2863 = vmatprep.subr.mxu0 0.0
        %2864 = vmatpush2.msra.mxu0 0.0
        %2865 = vmatprep.subr.mxu0 0.0
        %2866 = vmatpush2.msra.mxu0 0.0
        %2867 = vmatprep.subr.mxu0 0.0
        %2868 = vmatpush2.msra.mxu0 0.0
        %2869 = vmatprep.subr.mxu0 0.0
        %2870 = vmatpush2.msra.mxu0 0.0
        %2871 = vmatprep.subr.mxu0 0.0
        %2872 = vmatpush2.msra.mxu0 0.0
        %2873 = vmatprep.subr.mxu0 0.0
        %2874 = vmatpush2.msra.mxu0 0.0
        %2875 = vmatprep.subr.mxu0 0.0
        %2876 = vmatpush2.msra.mxu0 0.0
        %2877 = vmatprep.subr.mxu0 0.0
        %2878 = vmatpush2.msra.mxu0 0.0
        %2879 = vmatprep.subr.mxu0 0.0
        %2880 = vmatpush2.msra.mxu0 0.0
        %2881 = vmatprep.subr.mxu0 0.0
        %2882 = vmatpush2.msra.mxu0 0.0
        %2883 = vmatprep.subr.mxu0 0.0
        %2884 = vmatpush2.msra.mxu0 0.0
        %2885 = vmatprep.subr.mxu0 0.0
        %2886 = vmatpush2.msra.mxu0 0.0
        %2887 = vmatprep.subr.mxu0 0.0
        %2888 = vmatpush2.msra.mxu0 0.0
        %2889 = vmatprep.subr.mxu0 0.0
        %2890 = vmatpush2.msra.mxu0 0.0
        %2891 = vmatprep.subr.mxu0 0.0
        %2892 = vmatpush2.msra.mxu0 0.0
        %2893 = vmatprep.mubr.f32.mxu0 0.0
        %2894 = vmatmul.mubr.f32.gmra.mxu0 %v2734
        %v2895 = vpop.f32.mrf.mxu0
        %v2896 = vadd.f32 %v2731, %v2895
        %v2897 = vpop.f32.mrf.mxu0
        %2898 = vmatprep.mubr.f32.mxu0 0.0
        %2899 = vmatmul.mubr.f32.gmra.mxu0 %v2737
        %v2900 = vpop.f32.mrf.mxu0
        %v2901 = vadd.f32 %v2731, %v2900
        %v2902 = vpop.f32.mrf.mxu0
        %2903 = vmatprep.mubr.f32.mxu0 0.0
        %2904 = vmatmul.mubr.f32.gmra.mxu0 %v2740
        %v2905 = vpop.f32.mrf.mxu0
        %v2906 = vadd.f32 %v2731, %v2905
        %v2907 = vpop.f32.mrf.mxu0
        %2908 = vmatprep.mubr.f32.mxu0 0.0
        %2909 = vmatmul.mubr.f32.gmra.mxu0 %v2743
        %v2910 = vpop.f32.mrf.mxu0
        %v2911 = vadd.f32 %v2731, %v2910
        %v2912 = vpop.f32.mrf.mxu0
        %2913 = vmatprep.mubr.f32.mxu0 0.0
        %2914 = vmatmul.mubr.f32.gmra.mxu0 %v2746
        %v2915 = vpop.f32.mrf.mxu0
        %v2916 = vadd.f32 %v2731, %v2915
        %v2917 = vpop.f32.mrf.mxu0
        %2918 = vmatprep.mubr.f32.mxu0 0.0
        %2919 = vmatmul.mubr.f32.gmra.mxu0 %v2749
        %v2920 = vpop.f32.mrf.mxu0
        %v2921 = vadd.f32 %v2731, %v2920
        %v2922 = vpop.f32.mrf.mxu0
        %2923 = vmatprep.mubr.f32.mxu0 0.0
        %2924 = vmatmul.mubr.f32.gmra.mxu0 %v2752
        %v2925 = vpop.f32.mrf.mxu0
        %v2926 = vadd.f32 %v2731, %v2925
        %v2927 = vpop.f32.mrf.mxu0
        %2928 = vmatprep.mubr.f32.mxu0 0.0
        %2929 = vmatmul.mubr.f32.gmra.mxu0 %v2755
        %v2930 = vpop.f32.mrf.mxu0
        %v2931 = vadd.f32 %v2731, %v2930
        %v2932 = vpop.f32.mrf.mxu0
        %2933 = vmatprep.mubr.f32.mxu0 0.0
        %2934 = vmatmul.mubr.f32.gmra.mxu0 %v2758
        %v2935 = vpop.f32.mrf.mxu0
        %v2936 = vadd.f32 %v2731, %v2935
        %v2937 = vpop.f32.mrf.mxu0
        %2938 = vmatprep.mubr.f32.mxu0 0.0
        %2939 = vmatmul.mubr.f32.gmra.mxu0 %v2761
        %v2940 = vpop.f32.mrf.mxu0
        %v2941 = vadd.f32 %v2731, %v2940
        %v2942 = vpop.f32.mrf.mxu0
        %2943 = vmatprep.mubr.f32.mxu0 0.0
        %2944 = vmatmul.mubr.f32.gmra.mxu0 %v2764
        %v2945 = vpop.f32.mrf.mxu0
        %v2946 = vadd.f32 %v2731, %v2945
        %v2947 = vpop.f32.mrf.mxu0
        %2948 = vmatprep.mubr.f32.mxu0 0.0
        %2949 = vmatmul.mubr.f32.gmra.mxu0 %v2767
        %v2950 = vpop.f32.mrf.mxu0
        %v2951 = vadd.f32 %v2731, %v2950
        %v2952 = vpop.f32.mrf.mxu0
        %2953 = vmatprep.mubr.f32.mxu0 0.0
        %2954 = vmatmul.mubr.f32.gmra.mxu0 %v2770
        %v2955 = vpop.f32.mrf.mxu0
        %v2956 = vadd.f32 %v2731, %v2955
        %v2957 = vpop.f32.mrf.mxu0
        %2958 = vmatprep.mubr.f32.mxu0 0.0
        %2959 = vmatmul.mubr.f32.gmra.mxu0 %v2773
        %v2960 = vpop.f32.mrf.mxu0
        %v2961 = vadd.f32 %v2731, %v2960
        %v2962 = vpop.f32.mrf.mxu0
        %2963 = vmatprep.mubr.f32.mxu0 0.0
        %2964 = vmatmul.mubr.f32.gmra.mxu0 %v2776
        %v2965 = vpop.f32.mrf.mxu0
        %v2966 = vadd.f32 %v2731, %v2965
        %v2967 = vpop.f32.mrf.mxu0
        %2968 = vmatprep.mubr.f32.mxu0 0.0
        %2969 = vmatmul.mubr.f32.gmra.mxu0 %v2779
        %v2970 = vpop.f32.mrf.mxu0
        %v2971 = vadd.f32 %v2731, %v2970
        %v2972 = vpop.f32.mrf.mxu0
        %2973 = vmatprep.mubr.f32.mxu0 0.0
        %2974 = vmatmul.mubr.f32.gmra.mxu0 %v2782
        %v2975 = vpop.f32.mrf.mxu0
        %v2976 = vadd.f32 %v2731, %v2975
        %v2977 = vpop.f32.mrf.mxu0
        %2978 = vmatprep.mubr.f32.mxu0 0.0
        %2979 = vmatmul.mubr.f32.gmra.mxu0 %v2785
        %v2980 = vpop.f32.mrf.mxu0
        %v2981 = vadd.f32 %v2731, %v2980
        %v2982 = vpop.f32.mrf.mxu0
        %2983 = vmatprep.mubr.f32.mxu0 0.0
        %2984 = vmatmul.mubr.f32.gmra.mxu0 %v2788
        %v2985 = vpop.f32.mrf.mxu0
        %v2986 = vadd.f32 %v2731, %v2985
        %v2987 = vpop.f32.mrf.mxu0
        %2988 = vmatprep.mubr.f32.mxu0 0.0
        %2989 = vmatmul.mubr.f32.gmra.mxu0 %v2791
        %v2990 = vpop.f32.mrf.mxu0
        %v2991 = vadd.f32 %v2731, %v2990
        %v2992 = vpop.f32.mrf.mxu0
        %2993 = vmatprep.mubr.f32.mxu0 0.0
        %2994 = vmatmul.mubr.f32.gmra.mxu0 %v2794
        %v2995 = vpop.f32.mrf.mxu0
        %v2996 = vadd.f32 %v2731, %v2995
        %v2997 = vpop.f32.mrf.mxu0
        %2998 = vmatprep.mubr.f32.mxu0 0.0
        %2999 = vmatmul.mubr.f32.gmra.mxu0 %v2797
        %v3000 = vpop.f32.mrf.mxu0
        %v3001 = vadd.f32 %v2731, %v3000
        %v3002 = vpop.f32.mrf.mxu0
        %3003 = vmatprep.mubr.f32.mxu0 0.0
        %3004 = vmatmul.mubr.f32.gmra.mxu0 %v2800
        %v3005 = vpop.f32.mrf.mxu0
        %v3006 = vadd.f32 %v2731, %v3005
        %v3007 = vpop.f32.mrf.mxu0
        %3008 = vmatprep.mubr.f32.mxu0 0.0
        %3009 = vmatmul.mubr.f32.gmra.mxu0 %v2803
        %v3010 = vpop.f32.mrf.mxu0
        %v3011 = vadd.f32 %v2731, %v3010
        %v3012 = vpop.f32.mrf.mxu0
        %3013 = vmatprep.mubr.f32.mxu0 0.0
        %3014 = vmatmul.mubr.f32.gmra.mxu0 %v2806
        %v3015 = vpop.f32.mrf.mxu0
        %v3016 = vadd.f32 %v2731, %v3015
        %v3017 = vpop.f32.mrf.mxu0
        %3018 = vmatprep.mubr.f32.mxu0 0.0
        %3019 = vmatmul.mubr.f32.gmra.mxu0 %v2809
        %v3020 = vpop.f32.mrf.mxu0
        %v3021 = vadd.f32 %v2731, %v3020
        %v3022 = vpop.f32.mrf.mxu0
        %3023 = vmatprep.mubr.f32.mxu0 0.0
        %3024 = vmatmul.mubr.f32.gmra.mxu0 %v2812
        %v3025 = vpop.f32.mrf.mxu0
        %v3026 = vadd.f32 %v2731, %v3025
        %v3027 = vpop.f32.mrf.mxu0
        %3028 = vmatprep.mubr.f32.mxu0 0.0
        %3029 = vmatmul.mubr.f32.gmra.mxu0 %v2815
        %v3030 = vpop.f32.mrf.mxu0
        %v3031 = vadd.f32 %v2731, %v3030
        %v3032 = vpop.f32.mrf.mxu0
        %3033 = vmatprep.mubr.f32.mxu0 0.0
        %3034 = vmatmul.mubr.f32.gmra.mxu0 %v2818
        %v3035 = vpop.f32.mrf.mxu0
        %v3036 = vadd.f32 %v2731, %v3035
        %v3037 = vpop.f32.mrf.mxu0
        %3038 = vmatprep.mubr.f32.mxu0 0.0
        %3039 = vmatmul.mubr.f32.gmra.mxu0 %v2821
        %v3040 = vpop.f32.mrf.mxu0
        %v3041 = vadd.f32 %v2731, %v3040
        %v3042 = vpop.f32.mrf.mxu0
        %3043 = vmatprep.mubr.f32.mxu0 0.0
        %3044 = vmatmul.mubr.f32.gmra.mxu0 %v2824
        %v3045 = vpop.f32.mrf.mxu0
        %v3046 = vadd.f32 %v2731, %v3045
        %v3047 = vpop.f32.mrf.mxu0
        %3048 = vmatprep.mubr.f32.mxu0 0.0
        %3049 = vmatmul.mubr.f32.gmra.mxu0 %v2827
        %v3050 = vpop.f32.mrf.mxu0
        %v3051 = vadd.f32 %v2731, %v3050
        %v3052 = vpop.f32.mrf.mxu0
        %3053 = vdwg.mxu0
        %3054 = vst [vmem:[%s271] sm:$0xff] %v2896
        %3055 = vst [vmem:[%s271 + $0x8] sm:$0xff] %v2901
        %3056 = vst [vmem:[%s271 + $0x10] sm:$0xff] %v2906
        %3057 = vst [vmem:[%s271 + $0x18] sm:$0xff] %v2911
        %3058 = vst [vmem:[%s271 + $0x20] sm:$0xff] %v2916
        %3059 = vst [vmem:[%s271 + $0x28] sm:$0xff] %v2921
        %3060 = vst [vmem:[%s271 + $0x30] sm:$0xff] %v2926
        %3061 = vst [vmem:[%s271 + $0x38] sm:$0xff] %v2931
        %3062 = vst [vmem:[%s271 + $0x40] sm:$0xff] %v2936
        %3063 = vst [vmem:[%s271 + $0x48] sm:$0xff] %v2941
        %3064 = vst [vmem:[%s271 + $0x50] sm:$0xff] %v2946
        %3065 = vst [vmem:[%s271 + $0x58] sm:$0xff] %v2951
        %3066 = vst [vmem:[%s271 + $0x60] sm:$0xff] %v2956
        %3067 = vst [vmem:[%s271 + $0x68] sm:$0xff] %v2961
        %3068 = vst [vmem:[%s271 + $0x70] sm:$0xff] %v2966
        %3069 = vst [vmem:[%s271 + $0x78] sm:$0xff] %v2971
        %3070 = vst [vmem:[%s271 + $0x80] sm:$0xff] %v2976
        %3071 = vst [vmem:[%s271 + $0x88] sm:$0xff] %v2981
        %3072 = vst [vmem:[%s271 + $0x90] sm:$0xff] %v2986
        %3073 = vst [vmem:[%s271 + $0x98] sm:$0xff] %v2991
        %3074 = vst [vmem:[%s271 + $0xa0] sm:$0xff] %v2996
        %3075 = vst [vmem:[%s271 + $0xa8] sm:$0xff] %v3001
        %3076 = vst [vmem:[%s271 + $0xb0] sm:$0xff] %v3006
        %3077 = vst [vmem:[%s271 + $0xb8] sm:$0xff] %v3011
        %3078 = vst [vmem:[%s271 + $0xc0] sm:$0xff] %v3016
        %3079 = vst [vmem:[%s271 + $0xc8] sm:$0xff] %v3021
        %3080 = vst [vmem:[%s271 + $0xd0] sm:$0xff] %v3026
        %3081 = vst [vmem:[%s271 + $0xd8] sm:$0xff] %v3031
        %3082 = vst [vmem:[%s271 + $0xe0] sm:$0xff] %v3036
        %3083 = vst [vmem:[%s271 + $0xe8] sm:$0xff] %v3041
        %3084 = vst [vmem:[%s271 + $0xf0] sm:$0xff] %v3046
        %3085 = vst [vmem:[%s271 + $0xf8] sm:$0xff] %v3051
        %s3086 = sand.u32 %s181, 1
        %s3087 = scalar_lea.sflag [#allocation5], %s3086
        %s3088 = sand.u32 %s181, 1
        %s3089 = smul.addr %s3088, 256
        %s3090 = scalar_lea.vmem [#allocation4], %s3089
        // Predicated region
        $region49: #{tpu_custom_call.1} parent=47 // pred_check
          %p3091 = pneg %p191
        $region50: #{tpu_custom_call.1} parent=47 // pred_check_branch
          %3093 = sbr.rel (%p3091) target = $region52
        $region51: #{tpu_custom_call.1} parent=47 // pred_region
          %s3095 = ssub.s32 4096, 4096
          %3096 = vsyncadd %s3087, %s3095
          %s3097 = smul.addr %s21, 32
          %s3098 = smul.addr %s3097, 128
          %s3099 = scalar_lea.hbm %s7, %s3098
          %s3100 = sshll.u32 %s3090, 4
          %s3101 = int_to_ptr.vmem [resolvable:$true] %s3100
          %3106 = dma.vmem_to_hbm [thread:$0]  %s3101, 4096, %s3099, %s3087, 128, 128, 8
        $region52: #{tpu_custom_call.1} parent=47 // pred_fallthru
          _
      $region48: #{tpu_custom_call.1} parent=5 // pred_fallthru
        _
      %p3107 = scmp.le.s32.totalorder 2, %s16
      // Predicated region
      $region53: #{tpu_custom_call.1} parent=5 // pred_check
        %p3108 = pneg %p3107
      $region54: #{tpu_custom_call.1} parent=5 // pred_check_branch
        %3110 = sbr.rel (%p3108) target = $region56
      $region55: #{tpu_custom_call.1} parent=5 // pred_region
        %s3111 = ssub.s32 %s16, 2
        // Predicated region
        $region57: #{tpu_custom_call.1} parent=55 // pred_check
          %p3112 = pneg %p197
        $region58: #{tpu_custom_call.1} parent=55 // pred_check_branch
          %3114 = sbr.rel (%p3112) target = $region60
        $region59: #{tpu_custom_call.1} parent=55 // pred_region
          %s3115 = sand.u32 %s182, 1
          %s3116 = scalar_lea.sflag [#allocation5], %s3115
          %s3117 = sand.u32 %s182, 1
          %s3118 = smul.addr %s3117, 256
          %s3119 = scalar_lea.vmem [#allocation4], %s3118
          %3120 = dma.done %s3116, 4096
        $region60: #{tpu_custom_call.1} parent=55 // pred_fallthru
          _
      $region56: #{tpu_custom_call.1} parent=5 // pred_fallthru
        _
    $region6: #{tpu_custom_call.1} parent=1 // loop_footer
      %s20 = sadd.s32 1, %s16
    $region7: #{tpu_custom_call.1} parent=1 // loop_footer_branch
      %15 = sbr.rel target = $region3
    $region8: #{tpu_custom_call.1} parent=1 // loop_exit
      _
    %3121 = vsyncpa [#allocation5], 1
    %s3122 = scalar_lea.sflag [#allocation5], 1
    %3123 = vsyncpa %s3122, 1

</llo_original>
